<compile_context>
chip_gen: v7x
topology: tpu7x:2x2x1
jax: 0.10.0
libtpu: 0.0.40
codegen_flags: <defaults>
</compile_context>

<pallas_src>
import jax
import jax.numpy as jnp
from jax import lax
from jax.experimental import pallas as pl
from jax.experimental.pallas import tpu as pltpu

_LN_EPS = 1e-6
_W_OFF = 8  # sublane-aligned column offset of the real data inside the halo scratch


def _detect_vmem_limit():
    """Scoped-VMEM budget: ~75% of physical VMEM, capped at 100 MiB.
    v5e/v6e (128 MiB) -> 96 MiB, v7x (64 MiB) -> 48 MiB; conservative fallback
    (v7x figure) if the query is unavailable."""
    try:
        cap = int(pltpu.get_tpu_info().vmem_capacity_bytes)
    except Exception:
        cap = 64 * 1024 * 1024
    return max(32 * 1024 * 1024, min(100 * 1024 * 1024, (cap * 3) // 4))


_VMEM_LIMIT_BYTES = _detect_vmem_limit()


def _gelu(x):
    # TODO(synk): PyTorch F.gelu defaults to the exact erf form; the tanh
    # approximation is used because erf lowering is not guaranteed in Mosaic.
    c = 0.7978845608028654  # sqrt(2/pi)
    return 0.5 * x * (1.0 + jnp.tanh(c * (x + 0.044715 * x * x * x)))


def _compiler_params(*semantics):
    return pltpu.CompilerParams(dimension_semantics=tuple(semantics),
                                vmem_limit_bytes=_VMEM_LIMIT_BYTES)


def _pick_row_tile(m, row_bytes):
    """Tile of the flattened-pixel (N*H*W) axis: multiple of 8, divides m,
    bounded by a VMEM-derived per-block budget.  Prefers an even number (>=2)
    of grid steps so v7x's two TensorCores get balanced shards, but falls back
    to the largest fitting tile (including a single full block)."""
    budget = max(1 << 20, int(_VMEM_LIMIT_BYTES * 0.4))
    cap = max(8, budget // max(1, row_bytes))
    cands = [t for t in (2048, 1024, 512, 256, 128, 64, 32, 16, 8)
             if t <= cap and m % t == 0]
    for t in cands:
        if (m // t) >= 2 and (m // t) % 2 == 0:
            return t
    if cands:
        return cands[0]
    return m


def _pick_chan_tile(f, h, w, c, itemsize):
    """Channel tile for the fused dwconv+W2 kernel, sized against the scoped
    VMEM limit (critical on v7x's 64 MiB)."""
    budget = max(1 << 20, int(_VMEM_LIMIT_BYTES * 0.5))

    def vmem_bytes(tc):
        io = 2 * h * w * tc * itemsize                  # t1 block (double-buffered)
        io += 2 * 2 * h * w * c * itemsize              # x1 in + out blocks
        io += 2 * (10 * tc + tc * c) * itemsize         # w_dw, b_dw, W2 blocks
        scr = (h + 2) * (w + 2 * _W_OFF) * tc * 4 + h * w * c * 4
        return io + scr

    if f <= 256 and vmem_bytes(f) <= budget:
        return f
    for tc in (512, 256, 128):
        if f % tc == 0 and vmem_bytes(tc) <= budget:
            return tc
    # TODO(synk): for very large H*W slabs even tc=128 may miss the budget
    # (notably v7x's 64 MiB VMEM); that case needs H-tiling with a 1-row halo.
    if f % 128 == 0:
        return 128
    return f


# ---------------------------------------------------------------------------
# Kernels
# ---------------------------------------------------------------------------

def _ln_kernel(x_ref, g_ref, b_ref, o_ref):
    x = x_ref[...].astype(jnp.float32)                    # (Tm, C)
    mu = jnp.mean(x, axis=-1, keepdims=True)
    xc = x - mu
    var = jnp.mean(xc * xc, axis=-1, keepdims=True)
    y = xc * lax.rsqrt(var + _LN_EPS) * g_ref[...].astype(jnp.float32) \
        + b_ref[...].astype(jnp.float32)
    o_ref[...] = y.astype(o_ref.dtype)


def _add_ln_w1_gelu_kernel(x_ref, d_ref, g_ref, b_ref, w1_ref, x1_ref, t1_ref):
    # Fused: x1 = x + d (first residual), h = LayerNorm(x1) (norm2),
    #        t1 = gelu(h @ W1) (first 1x1 conv of FeedForward).
    # h never touches HBM; W1 stays resident in VMEM.
    s = x_ref[...].astype(jnp.float32) + d_ref[...].astype(jnp.float32)
    x1_ref[...] = s.astype(x1_ref.dtype)
    mu = jnp.mean(s, axis=-1, keepdims=True)
    sc = s - mu
    var = jnp.mean(sc * sc, axis=-1, keepdims=True)
    h = sc * lax.rsqrt(var + _LN_EPS) * g_ref[...].astype(jnp.float32) \
        + b_ref[...].astype(jnp.float32)
    # Feed the MXU native-dtype operands (f32 accumulate via preferred_element_type).
    y = jnp.dot(h.astype(x_ref.dtype), w1_ref[...],
                preferred_element_type=jnp.float32)
    t1_ref[...] = _gelu(y).astype(t1_ref.dtype)


def _dwconv_w2_res_kernel(t1_ref, wdw_ref, bdw_ref, w2_ref, x1_ref, o_ref,
                          xpad_ref, acc_ref):
    # Fused: t2 = gelu(dwconv3x3(t1) + b_dw); out = x1 + t2 @ W2.
    # Grid = (batch, channel-tile); the channel-tile axis is a reduction into
    # the (H*W, C) f32 accumulator, so the M x 4C intermediate never hits HBM.
    j = pl.program_id(1)
    nj = pl.num_programs(1)
    _, hh, ww, tc = t1_ref.shape
    cc = o_ref.shape[-1]
    base = _W_OFF - 1  # leftmost halo column of the logical padded row

    @pl.when(j == 0)
    def _():
        acc_ref[...] = jnp.zeros_like(acc_ref)
        xpad_ref[...] = jnp.zeros_like(xpad_ref)  # zero halo; interior rewritten below

    # Build the zero-padded tile in VMEM (no HBM pad copy). The data column
    # offset is sublane-aligned (8) so this store is an aligned full store.
    xpad_ref[1:hh + 1, _W_OFF:_W_OFF + ww, :] = \
        t1_ref[0].astype(xpad_ref.dtype)
    xp = xpad_ref[...]                                     # (H+2, W+2*_W_OFF, Tc) f32
    wk = wdw_ref[...].astype(jnp.float32)                  # (9, Tc)

    # TODO(synk): the dw column shifts below are sublane-unaligned value slices;
    # expressing them with pltpu.roll (XLU) would free vector-load slots.
    conv = xp[0:hh, base:base + ww, :] * wk[0:1, :]
    for k in range(1, 9):                                  # unrolled 3x3 taps
        dh, dw = k // 3, k % 3
        conv = conv + xp[dh:dh + hh, base + dw:base + dw + ww, :] * wk[k:k + 1, :]
    t2 = _gelu(conv + bdw_ref[...].astype(jnp.float32))    # (H, W, Tc) f32

    # Second 1x1 conv (W2) as an MXU matmul in the input's native dtype.
    t2 = t2.astype(t1_ref.dtype)
    acc_ref[...] += jnp.dot(t2.reshape(hh * ww, tc), w2_ref[...],
                            preferred_element_type=jnp.float32)

    @pl.when(j == nj - 1)
    def _():
        y = x1_ref[...].astype(jnp.float32) + acc_ref[...].reshape(1, hh, ww, cc)
        o_ref[...] = y.astype(o_ref.dtype)


# ---------------------------------------------------------------------------
# Wrappers (pallas_call setup)
# ---------------------------------------------------------------------------

def layer_norm(x2d, gamma, beta):
    m, c = x2d.shape
    itemsize = x2d.dtype.itemsize
    tm = _pick_row_tile(m, 2 * c * itemsize)
    cost = pl.CostEstimate(flops=int(10 * m * c), transcendentals=int(m),
                           bytes_accessed=int((2 * m * c + 2 * c) * itemsize))
    return pl.pallas_call(
        _ln_kernel,
        out_shape=jax.ShapeDtypeStruct((m, c), x2d.dtype),
        grid=(m // tm,),
        in_specs=[
            pl.BlockSpec((tm, c), lambda i: (i, 0)),
            pl.BlockSpec((1, c), lambda i: (0, 0)),
            pl.BlockSpec((1, c), lambda i: (0, 0)),
        ],
        out_specs=pl.BlockSpec((tm, c), lambda i: (i, 0)),
        compiler_params=_compiler_params("parallel"),
        cost_estimate=cost,
    )(x2d, gamma.reshape(1, c), beta.reshape(1, c))


def add_ln_w1_gelu(x2d, d2d, gamma, beta, w1):
    m, c = x2d.shape
    f = w1.shape[1]
    itemsize = x2d.dtype.itemsize
    tm = _pick_row_tile(m, (3 * c + f) * itemsize)
    cost = pl.CostEstimate(
        flops=int(m * (12 * c + 2 * c * f + 10 * f)),
        transcendentals=int(m * (1 + f)),
        bytes_accessed=int((m * (3 * c + f) + c * f + 2 * c) * itemsize))
    return pl.pallas_call(
        _add_ln_w1_gelu_kernel,
        out_shape=(jax.ShapeDtypeStruct((m, c), x2d.dtype),
                   jax.ShapeDtypeStruct((m, f), x2d.dtype)),
        grid=(m // tm,),
        in_specs=[
            pl.BlockSpec((tm, c), lambda i: (i, 0)),
            pl.BlockSpec((tm, c), lambda i: (i, 0)),
            pl.BlockSpec((1, c), lambda i: (0, 0)),
            pl.BlockSpec((1, c), lambda i: (0, 0)),
            pl.BlockSpec((c, f), lambda i: (0, 0)),
        ],
        out_specs=(pl.BlockSpec((tm, c), lambda i: (i, 0)),
                   pl.BlockSpec((tm, f), lambda i: (i, 0))),
        compiler_params=_compiler_params("parallel"),
        cost_estimate=cost,
    )(x2d, d2d, gamma.reshape(1, c), beta.reshape(1, c), w1)


def dwconv_w2_residual(t1_nhwf, w_dw, b_dw, w2, x1_nhwc):
    n, h, w, f = t1_nhwf.shape
    c = x1_nhwc.shape[-1]
    itemsize = t1_nhwf.dtype.itemsize
    tc = _pick_chan_tile(f, h, w, c, itemsize)
    cost = pl.CostEstimate(
        flops=int(n * h * w * (28 * f + 2 * f * c + c)),
        transcendentals=int(n * h * w * f),
        bytes_accessed=int((n * h * w * (f + 2 * c) + 10 * f + f * c) * itemsize))
    return pl.pallas_call(
        _dwconv_w2_res_kernel,
        out_shape=jax.ShapeDtypeStruct((n, h, w, c), x1_nhwc.dtype),
        grid=(n, f // tc),
        in_specs=[
            pl.BlockSpec((1, h, w, tc), lambda i, j: (i, 0, 0, j)),
            pl.BlockSpec((9, tc), lambda i, j: (0, j)),
            pl.BlockSpec((1, tc), lambda i, j: (0, j)),
            pl.BlockSpec((tc, c), lambda i, j: (j, 0)),
            pl.BlockSpec((1, h, w, c), lambda i, j: (i, 0, 0, 0)),
        ],
        out_specs=pl.BlockSpec((1, h, w, c), lambda i, j: (i, 0, 0, 0)),
        scratch_shapes=[
            pltpu.VMEM((h + 2, w + 2 * _W_OFF, tc), jnp.float32),   # halo scratch
            pltpu.VMEM((h * w, c), jnp.float32),                    # W2 accumulator
        ],
        compiler_params=_compiler_params("parallel", "arbitrary"),
        cost_estimate=cost,
    )(t1_nhwf, w_dw, b_dw.reshape(1, f), w2, x1_nhwc)


# ---------------------------------------------------------------------------
# DCNLayer forward
# ---------------------------------------------------------------------------

def dcn_layer_forward(x, params):
    """DCNLayer.forward, channels_last: x (N, H, W, C) -> (N, H, W, C)."""
    n, h, w, c = x.shape
    m = n * h * w
    f = params["w1"].shape[1]                 # FeedForward hidden dim = 4 * C
    xf = x.reshape(m, c)                      # free reshape, no data movement

    # x = x + drop_path(dcn(norm1(x)))   (drop_path == Identity for drop_path=0.0)
    h1 = layer_norm(xf, params["ln1_g"], params["ln1_b"])
    # TODO(synk): `core_op` (the DCNv3 deformable-conv core) is dependency-injected
    # and not defined in this module's source; identity is used as a stand-in and
    # the LN1 round trip is kept so the injection point stays intact.
    d = h1

    # Fused: x1 = x + d ; t1 = gelu(W1 @ LN2(x1))   (h2 never touches HBM)
    x1f, t1 = add_ln_w1_gelu(xf, d, params["ln2_g"], params["ln2_b"], params["w1"])

    # Fused: out = x1 + W2 @ gelu(dwconv3x3(t1) + b_dw)
    # (t2 never touches HBM; halo built in VMEM — no XLA-side pad copy)
    out = dwconv_w2_residual(t1.reshape(n, h, w, f), params["w_dw"],
                             params["b_dw"], params["w2"],
                             x1f.reshape(n, h, w, c))
    return out


# ---------------------------------------------------------------------------
# Pure-JAX reference (same math: identity dcn placeholder, tanh GELU)
# ---------------------------------------------------------------------------

def _reference(x, params):
    _, h, w, _ = x.shape

    def ln(v, g, b):
        mu = jnp.mean(v, axis=-1, keepdims=True)
        var = jnp.mean((v - mu) ** 2, axis=-1, keepdims=True)
        return (v - mu) / jnp.sqrt(var + _LN_EPS) * g + b

    h1 = ln(x, params["ln1_g"], params["ln1_b"])
    x1 = x + h1                                           # dcn placeholder
    h2 = ln(x1, params["ln2_g"], params["ln2_b"])
    t1 = _gelu(jnp.einsum("nhwc,cf->nhwf", h2, params["w1"]))
    t1p = jnp.pad(t1, ((0, 0), (1, 1), (1, 1), (0, 0)))
    acc = jnp.zeros_like(t1)
    for k in range(9):
        dh, dw = k // 3, k % 3
        acc = acc + t1p[:, dh:dh + h, dw:dw + w, :] * params["w_dw"][k]
    t2 = _gelu(acc + params["b_dw"])
    return x1 + jnp.einsum("nhwf,fc->nhwc", t2, params["w2"])


if __name__ == "__main__":
    key = jax.random.PRNGKey(0)
    N, H, W, C = 2, 16, 16, 4           # channels_last input [b, h, w, c]
    F = 4 * C                           # FeedForward hidden dim (mult=4)
    ks = jax.random.split(key, 9)
    x = jax.random.normal(ks[0], (N, H, W, C), dtype=jnp.float32)
    params = {
        # LayerNorm (norm1 / norm2) affine params
        "ln1_g": 1.0 + 0.1 * jax.random.normal(ks[1], (C,), jnp.float32),
        "ln1_b": 0.1 * jax.random.normal(ks[2], (C,), jnp.float32),
        "ln2_g": 1.0 + 0.1 * jax.random.normal(ks[3], (C,), jnp.float32),
        "ln2_b": 0.1 * jax.random.normal(ks[4], (C,), jnp.float32),
        # FeedForward weights (correspondence to torch Conv2d layouts):
        #   w1[c, f]          == conv1.weight[f, c, 0, 0]    (1x1, bias=False)
        #   w_dw[kh*3+kw, f]  == dwconv.weight[f, 0, kh, kw] (3x3 depthwise, bias)
        #   b_dw[f]           == dwconv.bias[f]
        #   w2[f, c]          == conv3.weight[c, f, 0, 0]    (1x1, bias=False)
        "w1": 0.2 * jax.random.normal(ks[5], (C, F), jnp.float32),
        "w_dw": 0.2 * jax.random.normal(ks[6], (9, F), jnp.float32),
        "b_dw": 0.1 * jax.random.normal(ks[7], (F,), jnp.float32),
        "w2": 0.2 * jax.random.normal(ks[8], (F, C), jnp.float32),
    }

    y = jax.block_until_ready(jax.jit(dcn_layer_forward)(x, params))
    y_ref = _reference(x, params)

    assert y.shape == x.shape and y.dtype == x.dtype
    err = float(jnp.max(jnp.abs(y - y_ref)))
    assert jnp.allclose(y, y_ref, atol=1e-2, rtol=1e-2), f"max abs err {err}"
    print("KERNEL_OK")
</pallas_src>

<mosaic_0001>
module attributes {stable_mosaic.version = 11 : i64} {
  func.func @_add_ln_w1_gelu_kernel(%arg0: i32, %arg1: memref<256x4xf32, #tpu.memory_space<vmem>>, %arg2: memref<256x4xf32, #tpu.memory_space<vmem>>, %arg3: memref<1x4xf32, #tpu.memory_space<vmem>>, %arg4: memref<1x4xf32, #tpu.memory_space<vmem>>, %arg5: memref<4x16xf32, #tpu.memory_space<vmem>>, %arg6: memref<256x4xf32, #tpu.memory_space<vmem>>, %arg7: memref<256x16xf32, #tpu.memory_space<vmem>>) attributes {dimension_semantics = [#tpu.dimension_semantics<parallel>], iteration_bounds = array<i64: 2>, scalar_prefetch = 0 : i64, scratch_operands = 0 : i64, tpu.core_type = #tpu.core_type<tc>, window_params = [{transform_indices = @transform_0, window_bounds = array<i64: 256, 4>}, {transform_indices = @transform_1, window_bounds = array<i64: 256, 4>}, {pipeline_mode = #tpu.pipeline_mode<synchronous>, transform_indices = @transform_2, window_bounds = array<i64: 1, 4>}, {pipeline_mode = #tpu.pipeline_mode<synchronous>, transform_indices = @transform_3, window_bounds = array<i64: 1, 4>}, {pipeline_mode = #tpu.pipeline_mode<synchronous>, transform_indices = @transform_4, window_bounds = array<i64: 4, 16>}, {transform_indices = @transform_5, window_bounds = array<i64: 256, 4>}, {transform_indices = @transform_6, window_bounds = array<i64: 256, 16>}]} {
    %c0 = arith.constant 0 : index
    %c0_0 = arith.constant 0 : index
    %0 = vector.load %arg1[%c0, %c0_0] : memref<256x4xf32, #tpu.memory_space<vmem>>, vector<256x4xf32>
    %c0_1 = arith.constant 0 : index
    %c0_2 = arith.constant 0 : index
    %1 = vector.load %arg2[%c0_1, %c0_2] : memref<256x4xf32, #tpu.memory_space<vmem>>, vector<256x4xf32>
    %2 = arith.addf %0, %1 : vector<256x4xf32>
    %c0_3 = arith.constant 0 : index
    %c0_4 = arith.constant 0 : index
    %3 = vector.load %arg6[%c0_3, %c0_4] : memref<256x4xf32, #tpu.memory_space<vmem>>, vector<256x4xf32>
    tpu.vector_store %arg6[%c0_3, %c0_4], %2 {strides = array<i32>} : memref<256x4xf32, #tpu.memory_space<vmem>>, vector<256x4xf32>,
    %cst = arith.constant dense<0.000000e+00> : vector<256xf32>
    %4 = vector.multi_reduction <add>, %2, %cst [1] : vector<256x4xf32> to vector<256xf32>
    %5 = vector.shape_cast %4 : vector<256xf32> to vector<256x1xf32>
    %cst_5 = arith.constant 4.000000e+00 : f32
    %6 = vector.broadcast %cst_5 : f32 to vector<256x1xf32>
    %7 = arith.divf %5, %6 : vector<256x1xf32>
    %8 = vector.broadcast %7 : vector<256x1xf32> to vector<256x4xf32>
    %9 = arith.subf %2, %8 : vector<256x4xf32>
    %10 = arith.mulf %9, %9 : vector<256x4xf32>
    %cst_6 = arith.constant dense<0.000000e+00> : vector<256xf32>
    %11 = vector.multi_reduction <add>, %10, %cst_6 [1] : vector<256x4xf32> to vector<256xf32>
    %12 = vector.shape_cast %11 : vector<256xf32> to vector<256x1xf32>
    %cst_7 = arith.constant 4.000000e+00 : f32
    %13 = vector.broadcast %cst_7 : f32 to vector<256x1xf32>
    %14 = arith.divf %12, %13 : vector<256x1xf32>
    %cst_8 = arith.constant 9.99999997E-7 : f32
    %15 = vector.broadcast %cst_8 : f32 to vector<256x1xf32>
    %16 = arith.addf %14, %15 : vector<256x1xf32>
    %17 = math.rsqrt %16 : vector<256x1xf32>
    %18 = vector.broadcast %17 : vector<256x1xf32> to vector<256x4xf32>
    %19 = arith.mulf %9, %18 : vector<256x4xf32>
    %c0_9 = arith.constant 0 : index
    %c0_10 = arith.constant 0 : index
    %20 = vector.load %arg3[%c0_9, %c0_10] : memref<1x4xf32, #tpu.memory_space<vmem>>, vector<1x4xf32>
    %21 = vector.broadcast %20 : vector<1x4xf32> to vector<256x4xf32>
    %22 = arith.mulf %19, %21 : vector<256x4xf32>
    %c0_11 = arith.constant 0 : index
    %c0_12 = arith.constant 0 : index
    %23 = vector.load %arg4[%c0_11, %c0_12] : memref<1x4xf32, #tpu.memory_space<vmem>>, vector<1x4xf32>
    %24 = vector.broadcast %23 : vector<1x4xf32> to vector<256x4xf32>
    %25 = arith.addf %22, %24 : vector<256x4xf32>
    %c0_13 = arith.constant 0 : index
    %c0_14 = arith.constant 0 : index
    %26 = vector.load %arg5[%c0_13, %c0_14] : memref<4x16xf32, #tpu.memory_space<vmem>>, vector<4x16xf32>
    %cst_15 = arith.constant dense<0.000000e+00> : vector<256x16xf32>
    %27 = tpu.matmul %25, %26, %cst_15 {dimension_numbers = #tpu.dot_dimension_numbers<[1], [0], [0], [1], [0, 0, 1, 1], [], []>} : vector<256x4xf32>, vector<4x16xf32>, vector<256x16xf32> -> vector<256x16xf32>
    %cst_16 = arith.constant 5.000000e-01 : f32
    %28 = vector.broadcast %cst_16 : f32 to vector<256x16xf32>
    %29 = arith.mulf %28, %27 : vector<256x16xf32>
    %cst_17 = arith.constant 4.471500e-02 : f32
    %30 = vector.broadcast %cst_17 : f32 to vector<256x16xf32>
    %31 = arith.mulf %30, %27 : vector<256x16xf32>
    %32 = arith.mulf %31, %27 : vector<256x16xf32>
    %33 = arith.mulf %32, %27 : vector<256x16xf32>
    %34 = arith.addf %27, %33 : vector<256x16xf32>
    %cst_18 = arith.constant 0.797884583 : f32
    %35 = vector.broadcast %cst_18 : f32 to vector<256x16xf32>
    %36 = arith.mulf %35, %34 : vector<256x16xf32>
    %37 = math.tanh %36 : vector<256x16xf32>
    %cst_19 = arith.constant 1.000000e+00 : f32
    %38 = vector.broadcast %cst_19 : f32 to vector<256x16xf32>
    %39 = arith.addf %38, %37 : vector<256x16xf32>
    %40 = arith.mulf %29, %39 : vector<256x16xf32>
    %c0_20 = arith.constant 0 : index
    %c0_21 = arith.constant 0 : index
    %41 = vector.load %arg7[%c0_20, %c0_21] : memref<256x16xf32, #tpu.memory_space<vmem>>, vector<256x16xf32>
    tpu.vector_store %arg7[%c0_20, %c0_21], %40 {strides = array<i32>} : memref<256x16xf32, #tpu.memory_space<vmem>>, vector<256x16xf32>,
    return
  }
  func.func @transform_0(%arg0: i32) -> (i32, i32) {
    %c0_i32 = arith.constant 0 : i32
    %c0_i32_0 = arith.constant 0 : i32
    return %arg0, %c0_i32 : i32, i32
  }
  func.func @transform_1(%arg0: i32) -> (i32, i32) {
    %c0_i32 = arith.constant 0 : i32
    %c0_i32_0 = arith.constant 0 : i32
    return %arg0, %c0_i32 : i32, i32
  }
  func.func @transform_2(%arg0: i32) -> (i32, i32) {
    %c0_i32 = arith.constant 0 : i32
    %c0_i32_0 = arith.constant 0 : i32
    %c0_i32_1 = arith.constant 0 : i32
    return %c0_i32, %c0_i32_0 : i32, i32
  }
  func.func @transform_3(%arg0: i32) -> (i32, i32) {
    %c0_i32 = arith.constant 0 : i32
    %c0_i32_0 = arith.constant 0 : i32
    %c0_i32_1 = arith.constant 0 : i32
    return %c0_i32, %c0_i32_0 : i32, i32
  }
  func.func @transform_4(%arg0: i32) -> (i32, i32) {
    %c0_i32 = arith.constant 0 : i32
    %c0_i32_0 = arith.constant 0 : i32
    %c0_i32_1 = arith.constant 0 : i32
    return %c0_i32, %c0_i32_0 : i32, i32
  }
  func.func @transform_5(%arg0: i32) -> (i32, i32) {
    %c0_i32 = arith.constant 0 : i32
    %c0_i32_0 = arith.constant 0 : i32
    return %arg0, %c0_i32 : i32, i32
  }
  func.func @transform_6(%arg0: i32) -> (i32, i32) {
    %c0_i32 = arith.constant 0 : i32
    %c0_i32_0 = arith.constant 0 : i32
    return %arg0, %c0_i32 : i32, i32
  }
}

module attributes {stable_mosaic.version = 11 : i64} {
  func.func @_ln_kernel(%arg0: i32, %arg1: memref<256x4xf32, #tpu.memory_space<vmem>>, %arg2: memref<1x4xf32, #tpu.memory_space<vmem>>, %arg3: memref<1x4xf32, #tpu.memory_space<vmem>>, %arg4: memref<256x4xf32, #tpu.memory_space<vmem>>) attributes {dimension_semantics = [#tpu.dimension_semantics<parallel>], iteration_bounds = array<i64: 2>, scalar_prefetch = 0 : i64, scratch_operands = 0 : i64, tpu.core_type = #tpu.core_type<tc>, window_params = [{transform_indices = @transform_0, window_bounds = array<i64: 256, 4>}, {pipeline_mode = #tpu.pipeline_mode<synchronous>, transform_indices = @transform_1, window_bounds = array<i64: 1, 4>}, {pipeline_mode = #tpu.pipeline_mode<synchronous>, transform_indices = @transform_2, window_bounds = array<i64: 1, 4>}, {transform_indices = @transform_3, window_bounds = array<i64: 256, 4>}]} {
    %c0 = arith.constant 0 : index
    %c0_0 = arith.constant 0 : index
    %0 = vector.load %arg1[%c0, %c0_0] : memref<256x4xf32, #tpu.memory_space<vmem>>, vector<256x4xf32>
    %cst = arith.constant dense<0.000000e+00> : vector<256xf32>
    %1 = vector.multi_reduction <add>, %0, %cst [1] : vector<256x4xf32> to vector<256xf32>
    %2 = vector.shape_cast %1 : vector<256xf32> to vector<256x1xf32>
    %cst_1 = arith.constant 4.000000e+00 : f32
    %3 = vector.broadcast %cst_1 : f32 to vector<256x1xf32>
    %4 = arith.divf %2, %3 : vector<256x1xf32>
    %5 = vector.broadcast %4 : vector<256x1xf32> to vector<256x4xf32>
    %6 = arith.subf %0, %5 : vector<256x4xf32>
    %7 = arith.mulf %6, %6 : vector<256x4xf32>
    %cst_2 = arith.constant dense<0.000000e+00> : vector<256xf32>
    %8 = vector.multi_reduction <add>, %7, %cst_2 [1] : vector<256x4xf32> to vector<256xf32>
    %9 = vector.shape_cast %8 : vector<256xf32> to vector<256x1xf32>
    %cst_3 = arith.constant 4.000000e+00 : f32
    %10 = vector.broadcast %cst_3 : f32 to vector<256x1xf32>
    %11 = arith.divf %9, %10 : vector<256x1xf32>
    %cst_4 = arith.constant 9.99999997E-7 : f32
    %12 = vector.broadcast %cst_4 : f32 to vector<256x1xf32>
    %13 = arith.addf %11, %12 : vector<256x1xf32>
    %14 = math.rsqrt %13 : vector<256x1xf32>
    %15 = vector.broadcast %14 : vector<256x1xf32> to vector<256x4xf32>
    %16 = arith.mulf %6, %15 : vector<256x4xf32>
    %c0_5 = arith.constant 0 : index
    %c0_6 = arith.constant 0 : index
    %17 = vector.load %arg2[%c0_5, %c0_6] : memref<1x4xf32, #tpu.memory_space<vmem>>, vector<1x4xf32>
    %18 = vector.broadcast %17 : vector<1x4xf32> to vector<256x4xf32>
    %19 = arith.mulf %16, %18 : vector<256x4xf32>
    %c0_7 = arith.constant 0 : index
    %c0_8 = arith.constant 0 : index
    %20 = vector.load %arg3[%c0_7, %c0_8] : memref<1x4xf32, #tpu.memory_space<vmem>>, vector<1x4xf32>
    %21 = vector.broadcast %20 : vector<1x4xf32> to vector<256x4xf32>
    %22 = arith.addf %19, %21 : vector<256x4xf32>
    %c0_9 = arith.constant 0 : index
    %c0_10 = arith.constant 0 : index
    %23 = vector.load %arg4[%c0_9, %c0_10] : memref<256x4xf32, #tpu.memory_space<vmem>>, vector<256x4xf32>
    tpu.vector_store %arg4[%c0_9, %c0_10], %22 {strides = array<i32>} : memref<256x4xf32, #tpu.memory_space<vmem>>, vector<256x4xf32>,
    return
  }
  func.func @transform_0(%arg0: i32) -> (i32, i32) {
    %c0_i32 = arith.constant 0 : i32
    %c0_i32_0 = arith.constant 0 : i32
    return %arg0, %c0_i32 : i32, i32
  }
  func.func @transform_1(%arg0: i32) -> (i32, i32) {
    %c0_i32 = arith.constant 0 : i32
    %c0_i32_0 = arith.constant 0 : i32
    %c0_i32_1 = arith.constant 0 : i32
    return %c0_i32, %c0_i32_0 : i32, i32
  }
  func.func @transform_2(%arg0: i32) -> (i32, i32) {
    %c0_i32 = arith.constant 0 : i32
    %c0_i32_0 = arith.constant 0 : i32
    %c0_i32_1 = arith.constant 0 : i32
    return %c0_i32, %c0_i32_0 : i32, i32
  }
  func.func @transform_3(%arg0: i32) -> (i32, i32) {
    %c0_i32 = arith.constant 0 : i32
    %c0_i32_0 = arith.constant 0 : i32
    return %arg0, %c0_i32 : i32, i32
  }
}

module attributes {stable_mosaic.version = 11 : i64} {
  func.func @_dwconv_w2_res_kernel(%arg0: i32, %arg1: i32, %arg2: memref<1x16x16x16xf32, #tpu.memory_space<vmem>>, %arg3: memref<9x16xf32, #tpu.memory_space<vmem>>, %arg4: memref<1x16xf32, #tpu.memory_space<vmem>>, %arg5: memref<16x4xf32, #tpu.memory_space<vmem>>, %arg6: memref<1x16x16x4xf32, #tpu.memory_space<vmem>>, %arg7: memref<1x16x16x4xf32, #tpu.memory_space<vmem>>, %arg8: memref<18x32x16xf32, #tpu.memory_space<vmem>>, %arg9: memref<256x4xf32, #tpu.memory_space<vmem>>) attributes {dimension_semantics = [#tpu.dimension_semantics<parallel>, #tpu.dimension_semantics<arbitrary>], iteration_bounds = array<i64: 2, 1>, scalar_prefetch = 0 : i64, scratch_operands = 2 : i64, tpu.core_type = #tpu.core_type<tc>, window_params = [{transform_indices = @transform_0, window_bounds = array<i64: 1, 16, 16, 16>}, {transform_indices = @transform_1, window_bounds = array<i64: 9, 16>}, {transform_indices = @transform_2, window_bounds = array<i64: 1, 16>}, {transform_indices = @transform_3, window_bounds = array<i64: 16, 4>}, {transform_indices = @transform_4, window_bounds = array<i64: 1, 16, 16, 4>}, {transform_indices = @transform_5, window_bounds = array<i64: 1, 16, 16, 4>}]} {
    %c0_i32 = arith.constant 0 : i32
    %0 = arith.cmpi eq, %arg1, %c0_i32 : i32
    %1 = arith.extui %0 : i1 to i32
    %c0_i32_0 = arith.constant 0 : i32
    %2 = arith.cmpi ne, %1, %c0_i32_0 : i32
    scf.if %2 {
      %cst_24 = arith.constant 0.000000e+00 : f32
      %87 = vector.broadcast %cst_24 : f32 to vector<256x4xf32>
      %c0_25 = arith.constant 0 : index
      %c0_26 = arith.constant 0 : index
      %88 = vector.load %arg9[%c0_25, %c0_26] : memref<256x4xf32, #tpu.memory_space<vmem>>, vector<256x4xf32>
      tpu.vector_store %arg9[%c0_25, %c0_26], %87 {strides = array<i32>} : memref<256x4xf32, #tpu.memory_space<vmem>>, vector<256x4xf32>,
      %cst_27 = arith.constant 0.000000e+00 : f32
      %89 = vector.broadcast %cst_27 : f32 to vector<18x32x16xf32>
      %c0_28 = arith.constant 0 : index
      %c0_29 = arith.constant 0 : index
      %c0_30 = arith.constant 0 : index
      %90 = vector.load %arg8[%c0_28, %c0_29, %c0_30] : memref<18x32x16xf32, #tpu.memory_space<vmem>>, vector<18x32x16xf32>
      tpu.vector_store %arg8[%c0_28, %c0_29, %c0_30], %89 {strides = array<i32>} : memref<18x32x16xf32, #tpu.memory_space<vmem>>, vector<18x32x16xf32>,
    } else {
    }
    %c0 = arith.constant 0 : index
    %c0_1 = arith.constant 0 : index
    %c0_2 = arith.constant 0 : index
    %c0_3 = arith.constant 0 : index
    %3 = vector.load %arg2[%c0, %c0_1, %c0_2, %c0_3] : memref<1x16x16x16xf32, #tpu.memory_space<vmem>>, vector<1x16x16x16xf32>
    %4 = vector.shape_cast %3 : vector<1x16x16x16xf32> to vector<16x16x16xf32>
    %c1 = arith.constant 1 : index
    %c8 = arith.constant 8 : index
    %c0_4 = arith.constant 0 : index
    %5 = vector.load %arg8[%c1, %c8, %c0_4] : memref<18x32x16xf32, #tpu.memory_space<vmem>>, vector<16x16x16xf32>
    tpu.vector_store %arg8[%c1, %c8, %c0_4], %4 {strides = array<i32>} : memref<18x32x16xf32, #tpu.memory_space<vmem>>, vector<16x16x16xf32>,
    %c0_5 = arith.constant 0 : index
    %c0_6 = arith.constant 0 : index
    %c0_7 = arith.constant 0 : index
    %6 = vector.load %arg8[%c0_5, %c0_6, %c0_7] : memref<18x32x16xf32, #tpu.memory_space<vmem>>, vector<18x32x16xf32>
    %c0_8 = arith.constant 0 : index
    %c0_9 = arith.constant 0 : index
    %7 = vector.load %arg3[%c0_8, %c0_9] : memref<9x16xf32, #tpu.memory_space<vmem>>, vector<9x16xf32>
    %8 = vector.extract_strided_slice %6 {offsets = [0, 7, 0], sizes = [16, 16, 16], strides = [1, 1, 1]} : vector<18x32x16xf32> to vector<16x16x16xf32>
    %9 = vector.extract_strided_slice %7 {offsets = [0, 0], sizes = [1, 16], strides = [1, 1]} : vector<9x16xf32> to vector<1x16xf32>
    %10 = vector.shape_cast %9 : vector<1x16xf32> to vector<1x1x16xf32>
    %11 = vector.broadcast %10 : vector<1x1x16xf32> to vector<16x16x16xf32>
    %12 = arith.mulf %8, %11 : vector<16x16x16xf32>
    %13 = vector.extract_strided_slice %6 {offsets = [0, 8, 0], sizes = [16, 16, 16], strides = [1, 1, 1]} : vector<18x32x16xf32> to vector<16x16x16xf32>
    %14 = vector.extract_strided_slice %7 {offsets = [1, 0], sizes = [1, 16], strides = [1, 1]} : vector<9x16xf32> to vector<1x16xf32>
    %15 = vector.shape_cast %14 : vector<1x16xf32> to vector<1x1x16xf32>
    %16 = vector.broadcast %15 : vector<1x1x16xf32> to vector<16x16x16xf32>
    %17 = arith.mulf %13, %16 : vector<16x16x16xf32>
    %18 = arith.addf %12, %17 : vector<16x16x16xf32>
    %19 = vector.extract_strided_slice %6 {offsets = [0, 9, 0], sizes = [16, 16, 16], strides = [1, 1, 1]} : vector<18x32x16xf32> to vector<16x16x16xf32>
    %20 = vector.extract_strided_slice %7 {offsets = [2, 0], sizes = [1, 16], strides = [1, 1]} : vector<9x16xf32> to vector<1x16xf32>
    %21 = vector.shape_cast %20 : vector<1x16xf32> to vector<1x1x16xf32>
    %22 = vector.broadcast %21 : vector<1x1x16xf32> to vector<16x16x16xf32>
    %23 = arith.mulf %19, %22 : vector<16x16x16xf32>
    %24 = arith.addf %18, %23 : vector<16x16x16xf32>
    %25 = vector.extract_strided_slice %6 {offsets = [1, 7, 0], sizes = [16, 16, 16], strides = [1, 1, 1]} : vector<18x32x16xf32> to vector<16x16x16xf32>
    %26 = vector.extract_strided_slice %7 {offsets = [3, 0], sizes = [1, 16], strides = [1, 1]} : vector<9x16xf32> to vector<1x16xf32>
    %27 = vector.shape_cast %26 : vector<1x16xf32> to vector<1x1x16xf32>
    %28 = vector.broadcast %27 : vector<1x1x16xf32> to vector<16x16x16xf32>
    %29 = arith.mulf %25, %28 : vector<16x16x16xf32>
    %30 = arith.addf %24, %29 : vector<16x16x16xf32>
    %31 = vector.extract_strided_slice %6 {offsets = [1, 8, 0], sizes = [16, 16, 16], strides = [1, 1, 1]} : vector<18x32x16xf32> to vector<16x16x16xf32>
    %32 = vector.extract_strided_slice %7 {offsets = [4, 0], sizes = [1, 16], strides = [1, 1]} : vector<9x16xf32> to vector<1x16xf32>
    %33 = vector.shape_cast %32 : vector<1x16xf32> to vector<1x1x16xf32>
    %34 = vector.broadcast %33 : vector<1x1x16xf32> to vector<16x16x16xf32>
    %35 = arith.mulf %31, %34 : vector<16x16x16xf32>
    %36 = arith.addf %30, %35 : vector<16x16x16xf32>
    %37 = vector.extract_strided_slice %6 {offsets = [1, 9, 0], sizes = [16, 16, 16], strides = [1, 1, 1]} : vector<18x32x16xf32> to vector<16x16x16xf32>
    %38 = vector.extract_strided_slice %7 {offsets = [5, 0], sizes = [1, 16], strides = [1, 1]} : vector<9x16xf32> to vector<1x16xf32>
    %39 = vector.shape_cast %38 : vector<1x16xf32> to vector<1x1x16xf32>
    %40 = vector.broadcast %39 : vector<1x1x16xf32> to vector<16x16x16xf32>
    %41 = arith.mulf %37, %40 : vector<16x16x16xf32>
    %42 = arith.addf %36, %41 : vector<16x16x16xf32>
    %43 = vector.extract_strided_slice %6 {offsets = [2, 7, 0], sizes = [16, 16, 16], strides = [1, 1, 1]} : vector<18x32x16xf32> to vector<16x16x16xf32>
    %44 = vector.extract_strided_slice %7 {offsets = [6, 0], sizes = [1, 16], strides = [1, 1]} : vector<9x16xf32> to vector<1x16xf32>
    %45 = vector.shape_cast %44 : vector<1x16xf32> to vector<1x1x16xf32>
    %46 = vector.broadcast %45 : vector<1x1x16xf32> to vector<16x16x16xf32>
    %47 = arith.mulf %43, %46 : vector<16x16x16xf32>
    %48 = arith.addf %42, %47 : vector<16x16x16xf32>
    %49 = vector.extract_strided_slice %6 {offsets = [2, 8, 0], sizes = [16, 16, 16], strides = [1, 1, 1]} : vector<18x32x16xf32> to vector<16x16x16xf32>
    %50 = vector.extract_strided_slice %7 {offsets = [7, 0], sizes = [1, 16], strides = [1, 1]} : vector<9x16xf32> to vector<1x16xf32>
    %51 = vector.shape_cast %50 : vector<1x16xf32> to vector<1x1x16xf32>
    %52 = vector.broadcast %51 : vector<1x1x16xf32> to vector<16x16x16xf32>
    %53 = arith.mulf %49, %52 : vector<16x16x16xf32>
    %54 = arith.addf %48, %53 : vector<16x16x16xf32>
    %55 = vector.extract_strided_slice %6 {offsets = [2, 9, 0], sizes = [16, 16, 16], strides = [1, 1, 1]} : vector<18x32x16xf32> to vector<16x16x16xf32>
    %56 = vector.extract_strided_slice %7 {offsets = [8, 0], sizes = [1, 16], strides = [1, 1]} : vector<9x16xf32> to vector<1x16xf32>
    %57 = vector.shape_cast %56 : vector<1x16xf32> to vector<1x1x16xf32>
    %58 = vector.broadcast %57 : vector<1x1x16xf32> to vector<16x16x16xf32>
    %59 = arith.mulf %55, %58 : vector<16x16x16xf32>
    %60 = arith.addf %54, %59 : vector<16x16x16xf32>
    %c0_10 = arith.constant 0 : index
    %c0_11 = arith.constant 0 : index
    %61 = vector.load %arg4[%c0_10, %c0_11] : memref<1x16xf32, #tpu.memory_space<vmem>>, vector<1x16xf32>
    %62 = vector.shape_cast %61 : vector<1x16xf32> to vector<1x1x16xf32>
    %63 = vector.broadcast %62 : vector<1x1x16xf32> to vector<16x16x16xf32>
    %64 = arith.addf %60, %63 : vector<16x16x16xf32>
    %cst = arith.constant 5.000000e-01 : f32
    %65 = vector.broadcast %cst : f32 to vector<16x16x16xf32>
    %66 = arith.mulf %65, %64 : vector<16x16x16xf32>
    %cst_12 = arith.constant 4.471500e-02 : f32
    %67 = vector.broadcast %cst_12 : f32 to vector<16x16x16xf32>
    %68 = arith.mulf %67, %64 : vector<16x16x16xf32>
    %69 = arith.mulf %68, %64 : vector<16x16x16xf32>
    %70 = arith.mulf %69, %64 : vector<16x16x16xf32>
    %71 = arith.addf %64, %70 : vector<16x16x16xf32>
    %cst_13 = arith.constant 0.797884583 : f32
    %72 = vector.broadcast %cst_13 : f32 to vector<16x16x16xf32>
    %73 = arith.mulf %72, %71 : vector<16x16x16xf32>
    %74 = math.tanh %73 : vector<16x16x16xf32>
    %cst_14 = arith.constant 1.000000e+00 : f32
    %75 = vector.broadcast %cst_14 : f32 to vector<16x16x16xf32>
    %76 = arith.addf %75, %74 : vector<16x16x16xf32>
    %77 = arith.mulf %66, %76 : vector<16x16x16xf32>
    %c0_15 = arith.constant 0 : index
    %c0_16 = arith.constant 0 : index
    %78 = vector.load %arg9[%c0_15, %c0_16] : memref<256x4xf32, #tpu.memory_space<vmem>>, vector<256x4xf32>
    %79 = vector.shape_cast %77 : vector<16x16x16xf32> to vector<256x16xf32>
    %c0_17 = arith.constant 0 : index
    %c0_18 = arith.constant 0 : index
    %80 = vector.load %arg5[%c0_17, %c0_18] : memref<16x4xf32, #tpu.memory_space<vmem>>, vector<16x4xf32>
    %cst_19 = arith.constant dense<0.000000e+00> : vector<256x4xf32>
    %81 = tpu.matmul %79, %80, %cst_19 {dimension_numbers = #tpu.dot_dimension_numbers<[1], [0], [0], [1], [0, 0, 1, 1], [], []>} : vector<256x16xf32>, vector<16x4xf32>, vector<256x4xf32> -> vector<256x4xf32>
    %82 = arith.addf %78, %81 : vector<256x4xf32>
    %c0_20 = arith.constant 0 : index
    %c0_21 = arith.constant 0 : index
    %83 = vector.load %arg9[%c0_20, %c0_21] : memref<256x4xf32, #tpu.memory_space<vmem>>, vector<256x4xf32>
    tpu.vector_store %arg9[%c0_20, %c0_21], %82 {strides = array<i32>} : memref<256x4xf32, #tpu.memory_space<vmem>>, vector<256x4xf32>,
    %c0_i32_22 = arith.constant 0 : i32
    %84 = arith.cmpi eq, %arg1, %c0_i32_22 : i32
    %85 = arith.extui %84 : i1 to i32
    %c0_i32_23 = arith.constant 0 : i32
    %86 = arith.cmpi ne, %85, %c0_i32_23 : i32
    scf.if %86 {
      %c0_24 = arith.constant 0 : index
      %c0_25 = arith.constant 0 : index
      %c0_26 = arith.constant 0 : index
      %c0_27 = arith.constant 0 : index
      %87 = vector.load %arg6[%c0_24, %c0_25, %c0_26, %c0_27] : memref<1x16x16x4xf32, #tpu.memory_space<vmem>>, vector<1x16x16x4xf32>
      %c0_28 = arith.constant 0 : index
      %c0_29 = arith.constant 0 : index
      %88 = vector.load %arg9[%c0_28, %c0_29] : memref<256x4xf32, #tpu.memory_space<vmem>>, vector<256x4xf32>
      %89 = vector.shape_cast %88 : vector<256x4xf32> to vector<1x16x16x4xf32>
      %90 = arith.addf %87, %89 : vector<1x16x16x4xf32>
      %c0_30 = arith.constant 0 : index
      %c0_31 = arith.constant 0 : index
      %c0_32 = arith.constant 0 : index
      %c0_33 = arith.constant 0 : index
      %91 = vector.load %arg7[%c0_30, %c0_31, %c0_32, %c0_33] : memref<1x16x16x4xf32, #tpu.memory_space<vmem>>, vector<1x16x16x4xf32>
      tpu.vector_store %arg7[%c0_30, %c0_31, %c0_32, %c0_33], %90 {strides = array<i32>} : memref<1x16x16x4xf32, #tpu.memory_space<vmem>>, vector<1x16x16x4xf32>,
    } else {
    }
    return
  }
  func.func @transform_0(%arg0: i32, %arg1: i32) -> (i32, i32, i32, i32) {
    %c0_i32 = arith.constant 0 : i32
    %c0_i32_0 = arith.constant 0 : i32
    %c0_i32_1 = arith.constant 0 : i32
    return %arg0, %c0_i32, %c0_i32_0, %arg1 : i32, i32, i32, i32
  }
  func.func @transform_1(%arg0: i32, %arg1: i32) -> (i32, i32) {
    %c0_i32 = arith.constant 0 : i32
    %c0_i32_0 = arith.constant 0 : i32
    return %c0_i32, %arg1 : i32, i32
  }
  func.func @transform_2(%arg0: i32, %arg1: i32) -> (i32, i32) {
    %c0_i32 = arith.constant 0 : i32
    %c0_i32_0 = arith.constant 0 : i32
    return %c0_i32, %arg1 : i32, i32
  }
  func.func @transform_3(%arg0: i32, %arg1: i32) -> (i32, i32) {
    %c0_i32 = arith.constant 0 : i32
    %c0_i32_0 = arith.constant 0 : i32
    return %arg1, %c0_i32 : i32, i32
  }
  func.func @transform_4(%arg0: i32, %arg1: i32) -> (i32, i32, i32, i32) {
    %c0_i32 = arith.constant 0 : i32
    %c0_i32_0 = arith.constant 0 : i32
    %c0_i32_1 = arith.constant 0 : i32
    %c0_i32_2 = arith.constant 0 : i32
    return %arg0, %c0_i32, %c0_i32_0, %c0_i32_1 : i32, i32, i32, i32
  }
  func.func @transform_5(%arg0: i32, %arg1: i32) -> (i32, i32, i32, i32) {
    %c0_i32 = arith.constant 0 : i32
    %c0_i32_0 = arith.constant 0 : i32
    %c0_i32_1 = arith.constant 0 : i32
    %c0_i32_2 = arith.constant 0 : i32
    return %arg0, %c0_i32, %c0_i32_0, %c0_i32_1 : i32, i32, i32, i32
  }
}

</mosaic_0001>

<llo_original>
// kernel: dcn_layer_forward.3
$region0: #{dcn_layer_forward.3}
  #allocation0 [shape = 'u32[]', space=smem, size = 0x4, offset = 0x4, fixed_abs, tag = 'smem constant byte address 0x4 - core index']
  #allocation1 [shape = 'u32[144,128]{1,0:T(1,128)}', space=vmem, size = 0x12000, scoped, tag = 'internal scratch']
  %s0 = inlined_call_operand.vmem [shape: f32[512,4], index: 0, kind: input, shape index: {}]
  %s1 = inlined_call_operand.vmem [shape: f32[1,4], index: 1, kind: input, shape index: {}]
  %s2 = inlined_call_operand.vmem [shape: f32[1,4], index: 2, kind: input, shape index: {}]
  %s3 = inlined_call_operand.vmem [shape: f32[512,4], index: 3, kind: output, shape index: {}]
  %s4 = sld [smem:[#allocation0]]
  $region45: #{dcn_layer_forward.3} parent=0
    _
  %s6 = ssub.s32 1, %s4
  %s7 = scalar_select 0, %s6, %s4
  loop: start=0, step=1, limit=4
  $region2: #{dcn_layer_forward.3} parent=0 // loop_pre_header
    _
  $region3: #{dcn_layer_forward.3} parent=0 // loop_header
    %s9 = sphi 0, %s13
    %p10 = scmp.ge.s32.totalorder %s9, 4
    %s19 = sphi 0, %s21
    %s22 = sphi 0, %s19
    %s23 = sphi 0, %s22
    %s39 = sphi 0, %s23
    %s43 = sphi 0, %s43
    %s45 = sphi 0, %s43
    %s46 = sphi 0, %s45
    %s60 = sphi 0, %s46
    %s64 = sphi 0, %s64
    %s66 = sphi 0, %s64
    %s67 = sphi 0, %s66
    %s81 = sphi 0, %s67
    %s87 = sphi 0, %s89
    %s90 = sphi 0, %s87
    %s91 = sphi 0, %s90
    %s107 = sphi 0, %s91
  $region4: #{dcn_layer_forward.3} parent=0 // loop_header_branch
    %12 = sbr.rel (%p10) target = $region8
  $region5: #{dcn_layer_forward.3} parent=0 // loop_body
    %s14 = ssub.s32 %s9, 1
    %s15 = ssub.s32 %s9, 2
    %s16 = sadd.s32 %s9, 1
    %s17 = ssub.s32 %s9, %s16
    %p18 = scmp.eq.s32.totalorder %s17, 0
    %s20 = sadd.s32 %s19, 1
    %s21 = scalar_select %p18, %s19, %s20
    %p24 = pneg %p18
    %p25 = scmp.eq.s32.totalorder %s9, 1
    %p26 = por %p24, %p25
    %p27 = scmp.ne.s32.totalorder %s19, %s22
    %p28 = scmp.eq.s32.totalorder %s9, 0
    %p29 = por %p27, %p28
    %p30 = scmp.ne.s32.totalorder %s19, %s22
    %p31 = scmp.eq.s32.totalorder %s14, 1
    %p32 = por %p30, %p31
    %p33 = scmp.ne.s32.totalorder %s22, %s23
    %p34 = scmp.eq.s32.totalorder %s14, 0
    %p35 = por %p33, %p34
    %p36 = scmp.ne.s32.totalorder %s22, %s23
    %p37 = scmp.eq.s32.totalorder %s15, 1
    %p38 = por %p36, %p37
    %p40 = scmp.ne.s32.totalorder %s23, %s39
    %p41 = scmp.eq.s32.totalorder %s15, 0
    %p42 = por %p40, %p41
    %s44 = sadd.s32 %s43, 1
    %p47 = scmp.eq.s32.totalorder %s9, 1
    %p48 = scmp.ne.s32.totalorder %s43, %s45
    %p49 = scmp.eq.s32.totalorder %s9, 0
    %p50 = por %p48, %p49
    %p51 = scmp.ne.s32.totalorder %s43, %s45
    %p52 = scmp.eq.s32.totalorder %s14, 1
    %p53 = por %p51, %p52
    %p54 = scmp.ne.s32.totalorder %s45, %s46
    %p55 = scmp.eq.s32.totalorder %s14, 0
    %p56 = por %p54, %p55
    %p57 = scmp.ne.s32.totalorder %s45, %s46
    %p58 = scmp.eq.s32.totalorder %s15, 1
    %p59 = por %p57, %p58
    %p61 = scmp.ne.s32.totalorder %s46, %s60
    %p62 = scmp.eq.s32.totalorder %s15, 0
    %p63 = por %p61, %p62
    %s65 = sadd.s32 %s64, 1
    %p68 = scmp.eq.s32.totalorder %s9, 1
    %p69 = scmp.ne.s32.totalorder %s64, %s66
    %p70 = scmp.eq.s32.totalorder %s9, 0
    %p71 = por %p69, %p70
    %p72 = scmp.ne.s32.totalorder %s64, %s66
    %p73 = scmp.eq.s32.totalorder %s14, 1
    %p74 = por %p72, %p73
    %p75 = scmp.ne.s32.totalorder %s66, %s67
    %p76 = scmp.eq.s32.totalorder %s14, 0
    %p77 = por %p75, %p76
    %p78 = scmp.ne.s32.totalorder %s66, %s67
    %p79 = scmp.eq.s32.totalorder %s15, 1
    %p80 = por %p78, %p79
    %p82 = scmp.ne.s32.totalorder %s67, %s81
    %p83 = scmp.eq.s32.totalorder %s15, 0
    %p84 = por %p82, %p83
    %s85 = ssub.s32 %s9, %s16
    %p86 = scmp.eq.s32.totalorder %s85, 0
    %s88 = sadd.s32 %s87, 1
    %s89 = scalar_select %p86, %s87, %s88
    %p92 = pneg %p86
    %p93 = scmp.eq.s32.totalorder %s9, 1
    %p94 = por %p92, %p93
    %p95 = scmp.ne.s32.totalorder %s87, %s90
    %p96 = scmp.eq.s32.totalorder %s9, 0
    %p97 = por %p95, %p96
    %p98 = scmp.ne.s32.totalorder %s87, %s90
    %p99 = scmp.eq.s32.totalorder %s14, 1
    %p100 = por %p98, %p99
    %p101 = scmp.ne.s32.totalorder %s90, %s91
    %p102 = scmp.eq.s32.totalorder %s14, 0
    %p103 = por %p101, %p102
    %p104 = scmp.ne.s32.totalorder %s90, %s91
    %p105 = scmp.eq.s32.totalorder %s15, 1
    %p106 = por %p104, %p105
    %p108 = scmp.ne.s32.totalorder %s91, %s107
    %p109 = scmp.eq.s32.totalorder %s15, 0
    %p110 = por %p108, %p109
    %p111 = scmp.le.s32.totalorder 1, %s9
    %p112 = scmp.lt.s32.totalorder %s9, 3
    %p113 = pnand %p111, %p112
    %p114 = pneg %p113
    // Predicated region
    $region9: #{dcn_layer_forward.3} parent=5 // pred_check
      _
    $region10: #{dcn_layer_forward.3} parent=5 // pred_check_branch
      %116 = sbr.rel (%p113) target = $region12
    $region11: #{dcn_layer_forward.3} parent=5 // pred_region
      %s117 = ssub.s32 %s9, 1
      // Predicated region
      $region13: #{dcn_layer_forward.3} parent=11 // pred_check
        %p118 = pneg %p56
      $region14: #{dcn_layer_forward.3} parent=11 // pred_check_branch
        %120 = sbr.rel (%p118) target = $region16
      $region15: #{dcn_layer_forward.3} parent=11 // pred_region
        _
      $region16: #{dcn_layer_forward.3} parent=11 // pred_fallthru
        _
      // Predicated region
      $region17: #{dcn_layer_forward.3} parent=11 // pred_check
        %p121 = pneg %p77
      $region18: #{dcn_layer_forward.3} parent=11 // pred_check_branch
        %123 = sbr.rel (%p121) target = $region20
      $region19: #{dcn_layer_forward.3} parent=11 // pred_region
        _
      $region20: #{dcn_layer_forward.3} parent=11 // pred_fallthru
        _
    $region12: #{dcn_layer_forward.3} parent=5 // pred_fallthru
      _
    %p124 = scmp.lt.s32.totalorder %s9, 2
    // Predicated region
    $region21: #{dcn_layer_forward.3} parent=5 // pred_check
      %p125 = pneg %p124
    $region22: #{dcn_layer_forward.3} parent=5 // pred_check_branch
      %127 = sbr.rel (%p125) target = $region24
    $region23: #{dcn_layer_forward.3} parent=5 // pred_region
      // Predicated region
      $region25: #{dcn_layer_forward.3} parent=23 // pred_check
        %p128 = pneg %p29
      $region26: #{dcn_layer_forward.3} parent=23 // pred_check_branch
        %130 = sbr.rel (%p128) target = $region28
      $region27: #{dcn_layer_forward.3} parent=23 // pred_region
        %s131 = smul.u32 32, %s9
        %p132 = scmp.lt.s32.totalorder %s131, 63
        %s133 = scalar_select %p132, %s131, 63
        %s134 = smul.addr %s133, 8
        %s135 = scalar_lea.vmem %s0, %s134
        %s136 = smul.u32 32, %s9
      $region28: #{dcn_layer_forward.3} parent=23 // pred_fallthru
        _
    $region24: #{dcn_layer_forward.3} parent=5 // pred_fallthru
      _
    %p137 = scmp.le.s32.totalorder 1, %s9
    %p138 = scmp.lt.s32.totalorder %s9, 3
    %p139 = pnand %p137, %p138
    %p140 = pneg %p139
    // Predicated region
    $region29: #{dcn_layer_forward.3} parent=5 // pred_check
      _
    $region30: #{dcn_layer_forward.3} parent=5 // pred_check_branch
      %142 = sbr.rel (%p139) target = $region32
    $region31: #{dcn_layer_forward.3} parent=5 // pred_region
      %s143 = ssub.s32 %s9, 1
      %s144 = smul.u32 32, %s14
      %p145 = scmp.lt.s32.totalorder %s144, 63
      %s146 = scalar_select %p145, %s144, 63
      %s147 = smul.addr %s146, 8
      %s148 = scalar_lea.vmem %s0, %s147
      %p149 = pneg %p35
      %p150 = pneg %p32
      %p151 = pneg %p56
      %p152 = pneg %p53
      %p153 = pneg %p77
      %p154 = pneg %p74
      %p155 = pneg %p103
      %p156 = pneg %p100
      %s157 = smul.u32 32, %s14
      %p158 = scmp.lt.s32.totalorder %s157, 63
      %s159 = scalar_select %p158, %s157, 63
      %s160 = smul.addr %s159, 8
      %s161 = scalar_lea.vmem %s3, %s160
      %s162 = smul.u32 32, %s14
      %p163 = scmp.lt.s32.totalorder %s162, 63
      %s164 = scalar_select %p163, %s162, 63
      %s165 = smul.addr %s164, 8
      %s166 = scalar_lea.vmem %s0, %s165
      %s167 = smul.u32 32, %s14
      %s168 = smul.u32 32, %s14
      %p169 = scmp.lt.s32.totalorder %s168, 63
      %s170 = scalar_select %p169, %s168, 63
      %s171 = smul.addr %s170, 8
      %s172 = scalar_lea.vmem %s3, %s171
      %s173 = smul.u32 32, %s14
      %v174 = vld [vmem:[%s166] sm:$0xff]
      %v175 = vld [vmem:[%s166 + $0x8] sm:$0xff]
      %v176 = vld [vmem:[%s166 + $0x10] sm:$0xff]
      %v177 = vld [vmem:[%s166 + $0x18] sm:$0xff]
      %v178 = vld [vmem:[%s166 + $0x20] sm:$0xff]
      %v179 = vld [vmem:[%s166 + $0x28] sm:$0xff]
      %v180 = vld [vmem:[%s166 + $0x30] sm:$0xff]
      %v181 = vld [vmem:[%s166 + $0x38] sm:$0xff]
      %v182 = vld [vmem:[%s166 + $0x40] sm:$0xff]
      %v183 = vld [vmem:[%s166 + $0x48] sm:$0xff]
      %v184 = vld [vmem:[%s166 + $0x50] sm:$0xff]
      %v185 = vld [vmem:[%s166 + $0x58] sm:$0xff]
      %v186 = vld [vmem:[%s166 + $0x60] sm:$0xff]
      %v187 = vld [vmem:[%s166 + $0x68] sm:$0xff]
      %v188 = vld [vmem:[%s166 + $0x70] sm:$0xff]
      %v189 = vld [vmem:[%s166 + $0x78] sm:$0xff]
      %v190 = vld [vmem:[%s166 + $0x80] sm:$0xff]
      %v191 = vld [vmem:[%s166 + $0x88] sm:$0xff]
      %v192 = vld [vmem:[%s166 + $0x90] sm:$0xff]
      %v193 = vld [vmem:[%s166 + $0x98] sm:$0xff]
      %v194 = vld [vmem:[%s166 + $0xa0] sm:$0xff]
      %v195 = vld [vmem:[%s166 + $0xa8] sm:$0xff]
      %v196 = vld [vmem:[%s166 + $0xb0] sm:$0xff]
      %v197 = vld [vmem:[%s166 + $0xb8] sm:$0xff]
      %v198 = vld [vmem:[%s166 + $0xc0] sm:$0xff]
      %v199 = vld [vmem:[%s166 + $0xc8] sm:$0xff]
      %v200 = vld [vmem:[%s166 + $0xd0] sm:$0xff]
      %v201 = vld [vmem:[%s166 + $0xd8] sm:$0xff]
      %v202 = vld [vmem:[%s166 + $0xe0] sm:$0xff]
      %v203 = vld [vmem:[%s166 + $0xe8] sm:$0xff]
      %v204 = vld [vmem:[%s166 + $0xf0] sm:$0xff]
      %v205 = vld [vmem:[%s166 + $0xf8] sm:$0xff]
      %vm206 = vcmask 31744
      %v207 = vsel %vm206, %v174, 0.0
      %208 = vadd.xlane.f32.xlu0 %v207
      %v209 = vpop.xlane.xlu0 %208
      %v210 = vsel %vm206, %v175, 0.0
      %211 = vadd.xlane.f32.xlu0 %v210
      %v212 = vpop.xlane.xlu0 %211
      %v213 = vsel %vm206, %v176, 0.0
      %214 = vadd.xlane.f32.xlu0 %v213
      %v215 = vpop.xlane.xlu0 %214
      %v216 = vsel %vm206, %v177, 0.0
      %217 = vadd.xlane.f32.xlu0 %v216
      %v218 = vpop.xlane.xlu0 %217
      %v219 = vsel %vm206, %v178, 0.0
      %220 = vadd.xlane.f32.xlu0 %v219
      %v221 = vpop.xlane.xlu0 %220
      %v222 = vsel %vm206, %v179, 0.0
      %223 = vadd.xlane.f32.xlu0 %v222
      %v224 = vpop.xlane.xlu0 %223
      %v225 = vsel %vm206, %v180, 0.0
      %226 = vadd.xlane.f32.xlu0 %v225
      %v227 = vpop.xlane.xlu0 %226
      %v228 = vsel %vm206, %v181, 0.0
      %229 = vadd.xlane.f32.xlu0 %v228
      %v230 = vpop.xlane.xlu0 %229
      %v231 = vsel %vm206, %v182, 0.0
      %232 = vadd.xlane.f32.xlu0 %v231
      %v233 = vpop.xlane.xlu0 %232
      %v234 = vsel %vm206, %v183, 0.0
      %235 = vadd.xlane.f32.xlu0 %v234
      %v236 = vpop.xlane.xlu0 %235
      %v237 = vsel %vm206, %v184, 0.0
      %238 = vadd.xlane.f32.xlu0 %v237
      %v239 = vpop.xlane.xlu0 %238
      %v240 = vsel %vm206, %v185, 0.0
      %241 = vadd.xlane.f32.xlu0 %v240
      %v242 = vpop.xlane.xlu0 %241
      %v243 = vsel %vm206, %v186, 0.0
      %244 = vadd.xlane.f32.xlu0 %v243
      %v245 = vpop.xlane.xlu0 %244
      %v246 = vsel %vm206, %v187, 0.0
      %247 = vadd.xlane.f32.xlu0 %v246
      %v248 = vpop.xlane.xlu0 %247
      %v249 = vsel %vm206, %v188, 0.0
      %250 = vadd.xlane.f32.xlu0 %v249
      %v251 = vpop.xlane.xlu0 %250
      %v252 = vsel %vm206, %v189, 0.0
      %253 = vadd.xlane.f32.xlu0 %v252
      %v254 = vpop.xlane.xlu0 %253
      %v255 = vsel %vm206, %v190, 0.0
      %256 = vadd.xlane.f32.xlu0 %v255
      %v257 = vpop.xlane.xlu0 %256
      %v258 = vsel %vm206, %v191, 0.0
      %259 = vadd.xlane.f32.xlu0 %v258
      %v260 = vpop.xlane.xlu0 %259
      %v261 = vsel %vm206, %v192, 0.0
      %262 = vadd.xlane.f32.xlu0 %v261
      %v263 = vpop.xlane.xlu0 %262
      %v264 = vsel %vm206, %v193, 0.0
      %265 = vadd.xlane.f32.xlu0 %v264
      %v266 = vpop.xlane.xlu0 %265
      %v267 = vsel %vm206, %v194, 0.0
      %268 = vadd.xlane.f32.xlu0 %v267
      %v269 = vpop.xlane.xlu0 %268
      %v270 = vsel %vm206, %v195, 0.0
      %271 = vadd.xlane.f32.xlu0 %v270
      %v272 = vpop.xlane.xlu0 %271
      %v273 = vsel %vm206, %v196, 0.0
      %274 = vadd.xlane.f32.xlu0 %v273
      %v275 = vpop.xlane.xlu0 %274
      %v276 = vsel %vm206, %v197, 0.0
      %277 = vadd.xlane.f32.xlu0 %v276
      %v278 = vpop.xlane.xlu0 %277
      %v279 = vsel %vm206, %v198, 0.0
      %280 = vadd.xlane.f32.xlu0 %v279
      %v281 = vpop.xlane.xlu0 %280
      %v282 = vsel %vm206, %v199, 0.0
      %283 = vadd.xlane.f32.xlu0 %v282
      %v284 = vpop.xlane.xlu0 %283
      %v285 = vsel %vm206, %v200, 0.0
      %286 = vadd.xlane.f32.xlu0 %v285
      %v287 = vpop.xlane.xlu0 %286
      %v288 = vsel %vm206, %v201, 0.0
      %289 = vadd.xlane.f32.xlu0 %v288
      %v290 = vpop.xlane.xlu0 %289
      %v291 = vsel %vm206, %v202, 0.0
      %292 = vadd.xlane.f32.xlu0 %v291
      %v293 = vpop.xlane.xlu0 %292
      %v294 = vsel %vm206, %v203, 0.0
      %295 = vadd.xlane.f32.xlu0 %v294
      %v296 = vpop.xlane.xlu0 %295
      %v297 = vsel %vm206, %v204, 0.0
      %298 = vadd.xlane.f32.xlu0 %v297
      %v299 = vpop.xlane.xlu0 %298
      %v300 = vsel %vm206, %v205, 0.0
      %301 = vadd.xlane.f32.xlu0 %v300
      %v302 = vpop.xlane.xlu0 %301
      %v303 = vrcp.pop 4.0
      %v304 = vmul.f32 %v209, %v303
      %v305 = vmul.f32 %v212, %v303
      %v306 = vmul.f32 %v215, %v303
      %v307 = vmul.f32 %v218, %v303
      %v308 = vmul.f32 %v221, %v303
      %v309 = vmul.f32 %v224, %v303
      %v310 = vmul.f32 %v227, %v303
      %v311 = vmul.f32 %v230, %v303
      %v312 = vmul.f32 %v233, %v303
      %v313 = vmul.f32 %v236, %v303
      %v314 = vmul.f32 %v239, %v303
      %v315 = vmul.f32 %v242, %v303
      %v316 = vmul.f32 %v245, %v303
      %v317 = vmul.f32 %v248, %v303
      %v318 = vmul.f32 %v251, %v303
      %v319 = vmul.f32 %v254, %v303
      %v320 = vmul.f32 %v257, %v303
      %v321 = vmul.f32 %v260, %v303
      %v322 = vmul.f32 %v263, %v303
      %v323 = vmul.f32 %v266, %v303
      %v324 = vmul.f32 %v269, %v303
      %v325 = vmul.f32 %v272, %v303
      %v326 = vmul.f32 %v275, %v303
      %v327 = vmul.f32 %v278, %v303
      %v328 = vmul.f32 %v281, %v303
      %v329 = vmul.f32 %v284, %v303
      %v330 = vmul.f32 %v287, %v303
      %v331 = vmul.f32 %v290, %v303
      %v332 = vmul.f32 %v293, %v303
      %v333 = vmul.f32 %v296, %v303
      %v334 = vmul.f32 %v299, %v303
      %v335 = vmul.f32 %v302, %v303
      %v336 = vsub.f32 %v174, %v304
      %v337 = vsub.f32 %v175, %v305
      %v338 = vsub.f32 %v176, %v306
      %v339 = vsub.f32 %v177, %v307
      %v340 = vsub.f32 %v178, %v308
      %v341 = vsub.f32 %v179, %v309
      %v342 = vsub.f32 %v180, %v310
      %v343 = vsub.f32 %v181, %v311
      %v344 = vsub.f32 %v182, %v312
      %v345 = vsub.f32 %v183, %v313
      %v346 = vsub.f32 %v184, %v314
      %v347 = vsub.f32 %v185, %v315
      %v348 = vsub.f32 %v186, %v316
      %v349 = vsub.f32 %v187, %v317
      %v350 = vsub.f32 %v188, %v318
      %v351 = vsub.f32 %v189, %v319
      %v352 = vsub.f32 %v190, %v320
      %v353 = vsub.f32 %v191, %v321
      %v354 = vsub.f32 %v192, %v322
      %v355 = vsub.f32 %v193, %v323
      %v356 = vsub.f32 %v194, %v324
      %v357 = vsub.f32 %v195, %v325
      %v358 = vsub.f32 %v196, %v326
      %v359 = vsub.f32 %v197, %v327
      %v360 = vsub.f32 %v198, %v328
      %v361 = vsub.f32 %v199, %v329
      %v362 = vsub.f32 %v200, %v330
      %v363 = vsub.f32 %v201, %v331
      %v364 = vsub.f32 %v202, %v332
      %v365 = vsub.f32 %v203, %v333
      %v366 = vsub.f32 %v204, %v334
      %v367 = vsub.f32 %v205, %v335
      %v368 = vmul.f32 %v336, %v336
      %v369 = vmul.f32 %v337, %v337
      %v370 = vmul.f32 %v338, %v338
      %v371 = vmul.f32 %v339, %v339
      %v372 = vmul.f32 %v340, %v340
      %v373 = vmul.f32 %v341, %v341
      %v374 = vmul.f32 %v342, %v342
      %v375 = vmul.f32 %v343, %v343
      %v376 = vmul.f32 %v344, %v344
      %v377 = vmul.f32 %v345, %v345
      %v378 = vmul.f32 %v346, %v346
      %v379 = vmul.f32 %v347, %v347
      %v380 = vmul.f32 %v348, %v348
      %v381 = vmul.f32 %v349, %v349
      %v382 = vmul.f32 %v350, %v350
      %v383 = vmul.f32 %v351, %v351
      %v384 = vmul.f32 %v352, %v352
      %v385 = vmul.f32 %v353, %v353
      %v386 = vmul.f32 %v354, %v354
      %v387 = vmul.f32 %v355, %v355
      %v388 = vmul.f32 %v356, %v356
      %v389 = vmul.f32 %v357, %v357
      %v390 = vmul.f32 %v358, %v358
      %v391 = vmul.f32 %v359, %v359
      %v392 = vmul.f32 %v360, %v360
      %v393 = vmul.f32 %v361, %v361
      %v394 = vmul.f32 %v362, %v362
      %v395 = vmul.f32 %v363, %v363
      %v396 = vmul.f32 %v364, %v364
      %v397 = vmul.f32 %v365, %v365
      %v398 = vmul.f32 %v366, %v366
      %v399 = vmul.f32 %v367, %v367
      %v400 = vsel %vm206, %v368, 0.0
      %401 = vadd.xlane.f32.xlu0 %v400
      %v402 = vpop.xlane.xlu0 %401
      %v403 = vsel %vm206, %v369, 0.0
      %404 = vadd.xlane.f32.xlu0 %v403
      %v405 = vpop.xlane.xlu0 %404
      %v406 = vsel %vm206, %v370, 0.0
      %407 = vadd.xlane.f32.xlu0 %v406
      %v408 = vpop.xlane.xlu0 %407
      %v409 = vsel %vm206, %v371, 0.0
      %410 = vadd.xlane.f32.xlu0 %v409
      %v411 = vpop.xlane.xlu0 %410
      %v412 = vsel %vm206, %v372, 0.0
      %413 = vadd.xlane.f32.xlu0 %v412
      %v414 = vpop.xlane.xlu0 %413
      %v415 = vsel %vm206, %v373, 0.0
      %416 = vadd.xlane.f32.xlu0 %v415
      %v417 = vpop.xlane.xlu0 %416
      %v418 = vsel %vm206, %v374, 0.0
      %419 = vadd.xlane.f32.xlu0 %v418
      %v420 = vpop.xlane.xlu0 %419
      %v421 = vsel %vm206, %v375, 0.0
      %422 = vadd.xlane.f32.xlu0 %v421
      %v423 = vpop.xlane.xlu0 %422
      %v424 = vsel %vm206, %v376, 0.0
      %425 = vadd.xlane.f32.xlu0 %v424
      %v426 = vpop.xlane.xlu0 %425
      %v427 = vsel %vm206, %v377, 0.0
      %428 = vadd.xlane.f32.xlu0 %v427
      %v429 = vpop.xlane.xlu0 %428
      %v430 = vsel %vm206, %v378, 0.0
      %431 = vadd.xlane.f32.xlu0 %v430
      %v432 = vpop.xlane.xlu0 %431
      %v433 = vsel %vm206, %v379, 0.0
      %434 = vadd.xlane.f32.xlu0 %v433
      %v435 = vpop.xlane.xlu0 %434
      %v436 = vsel %vm206, %v380, 0.0
      %437 = vadd.xlane.f32.xlu0 %v436
      %v438 = vpop.xlane.xlu0 %437
      %v439 = vsel %vm206, %v381, 0.0
      %440 = vadd.xlane.f32.xlu0 %v439
      %v441 = vpop.xlane.xlu0 %440
      %v442 = vsel %vm206, %v382, 0.0
      %443 = vadd.xlane.f32.xlu0 %v442
      %v444 = vpop.xlane.xlu0 %443
      %v445 = vsel %vm206, %v383, 0.0
      %446 = vadd.xlane.f32.xlu0 %v445
      %v447 = vpop.xlane.xlu0 %446
      %v448 = vsel %vm206, %v384, 0.0
      %449 = vadd.xlane.f32.xlu0 %v448
      %v450 = vpop.xlane.xlu0 %449
      %v451 = vsel %vm206, %v385, 0.0
      %452 = vadd.xlane.f32.xlu0 %v451
      %v453 = vpop.xlane.xlu0 %452
      %v454 = vsel %vm206, %v386, 0.0
      %455 = vadd.xlane.f32.xlu0 %v454
      %v456 = vpop.xlane.xlu0 %455
      %v457 = vsel %vm206, %v387, 0.0
      %458 = vadd.xlane.f32.xlu0 %v457
      %v459 = vpop.xlane.xlu0 %458
      %v460 = vsel %vm206, %v388, 0.0
      %461 = vadd.xlane.f32.xlu0 %v460
      %v462 = vpop.xlane.xlu0 %461
      %v463 = vsel %vm206, %v389, 0.0
      %464 = vadd.xlane.f32.xlu0 %v463
      %v465 = vpop.xlane.xlu0 %464
      %v466 = vsel %vm206, %v390, 0.0
      %467 = vadd.xlane.f32.xlu0 %v466
      %v468 = vpop.xlane.xlu0 %467
      %v469 = vsel %vm206, %v391, 0.0
      %470 = vadd.xlane.f32.xlu0 %v469
      %v471 = vpop.xlane.xlu0 %470
      %v472 = vsel %vm206, %v392, 0.0
      %473 = vadd.xlane.f32.xlu0 %v472
      %v474 = vpop.xlane.xlu0 %473
      %v475 = vsel %vm206, %v393, 0.0
      %476 = vadd.xlane.f32.xlu0 %v475
      %v477 = vpop.xlane.xlu0 %476
      %v478 = vsel %vm206, %v394, 0.0
      %479 = vadd.xlane.f32.xlu0 %v478
      %v480 = vpop.xlane.xlu0 %479
      %v481 = vsel %vm206, %v395, 0.0
      %482 = vadd.xlane.f32.xlu0 %v481
      %v483 = vpop.xlane.xlu0 %482
      %v484 = vsel %vm206, %v396, 0.0
      %485 = vadd.xlane.f32.xlu0 %v484
      %v486 = vpop.xlane.xlu0 %485
      %v487 = vsel %vm206, %v397, 0.0
      %488 = vadd.xlane.f32.xlu0 %v487
      %v489 = vpop.xlane.xlu0 %488
      %v490 = vsel %vm206, %v398, 0.0
      %491 = vadd.xlane.f32.xlu0 %v490
      %v492 = vpop.xlane.xlu0 %491
      %v493 = vsel %vm206, %v399, 0.0
      %494 = vadd.xlane.f32.xlu0 %v493
      %v495 = vpop.xlane.xlu0 %494
      %v496 = vmul.f32 %v402, %v303
      %v497 = vmul.f32 %v405, %v303
      %v498 = vmul.f32 %v408, %v303
      %v499 = vmul.f32 %v411, %v303
      %v500 = vmul.f32 %v414, %v303
      %v501 = vmul.f32 %v417, %v303
      %v502 = vmul.f32 %v420, %v303
      %v503 = vmul.f32 %v423, %v303
      %v504 = vmul.f32 %v426, %v303
      %v505 = vmul.f32 %v429, %v303
      %v506 = vmul.f32 %v432, %v303
      %v507 = vmul.f32 %v435, %v303
      %v508 = vmul.f32 %v438, %v303
      %v509 = vmul.f32 %v441, %v303
      %v510 = vmul.f32 %v444, %v303
      %v511 = vmul.f32 %v447, %v303
      %v512 = vmul.f32 %v450, %v303
      %v513 = vmul.f32 %v453, %v303
      %v514 = vmul.f32 %v456, %v303
      %v515 = vmul.f32 %v459, %v303
      %v516 = vmul.f32 %v462, %v303
      %v517 = vmul.f32 %v465, %v303
      %v518 = vmul.f32 %v468, %v303
      %v519 = vmul.f32 %v471, %v303
      %v520 = vmul.f32 %v474, %v303
      %v521 = vmul.f32 %v477, %v303
      %v522 = vmul.f32 %v480, %v303
      %v523 = vmul.f32 %v483, %v303
      %v524 = vmul.f32 %v486, %v303
      %v525 = vmul.f32 %v489, %v303
      %v526 = vmul.f32 %v492, %v303
      %v527 = vmul.f32 %v495, %v303
      %v528 = vadd.f32 %v496, 1e-06
      %v529 = vadd.f32 %v497, 1e-06
      %v530 = vadd.f32 %v498, 1e-06
      %v531 = vadd.f32 %v499, 1e-06
      %v532 = vadd.f32 %v500, 1e-06
      %v533 = vadd.f32 %v501, 1e-06
      %v534 = vadd.f32 %v502, 1e-06
      %v535 = vadd.f32 %v503, 1e-06
      %v536 = vadd.f32 %v504, 1e-06
      %v537 = vadd.f32 %v505, 1e-06
      %v538 = vadd.f32 %v506, 1e-06
      %v539 = vadd.f32 %v507, 1e-06
      %v540 = vadd.f32 %v508, 1e-06
      %v541 = vadd.f32 %v509, 1e-06
      %v542 = vadd.f32 %v510, 1e-06
      %v543 = vadd.f32 %v511, 1e-06
      %v544 = vadd.f32 %v512, 1e-06
      %v545 = vadd.f32 %v513, 1e-06
      %v546 = vadd.f32 %v514, 1e-06
      %v547 = vadd.f32 %v515, 1e-06
      %v548 = vadd.f32 %v516, 1e-06
      %v549 = vadd.f32 %v517, 1e-06
      %v550 = vadd.f32 %v518, 1e-06
      %v551 = vadd.f32 %v519, 1e-06
      %v552 = vadd.f32 %v520, 1e-06
      %v553 = vadd.f32 %v521, 1e-06
      %v554 = vadd.f32 %v522, 1e-06
      %v555 = vadd.f32 %v523, 1e-06
      %v556 = vadd.f32 %v524, 1e-06
      %v557 = vadd.f32 %v525, 1e-06
      %v558 = vadd.f32 %v526, 1e-06
      %v559 = vadd.f32 %v527, 1e-06
      %v560 = vrsqrt.pop %v528
      %v561 = vrsqrt.pop %v529
      %v562 = vrsqrt.pop %v530
      %v563 = vrsqrt.pop %v531
      %v564 = vrsqrt.pop %v532
      %v565 = vrsqrt.pop %v533
      %v566 = vrsqrt.pop %v534
      %v567 = vrsqrt.pop %v535
      %v568 = vrsqrt.pop %v536
      %v569 = vrsqrt.pop %v537
      %v570 = vrsqrt.pop %v538
      %v571 = vrsqrt.pop %v539
      %v572 = vrsqrt.pop %v540
      %v573 = vrsqrt.pop %v541
      %v574 = vrsqrt.pop %v542
      %v575 = vrsqrt.pop %v543
      %v576 = vrsqrt.pop %v544
      %v577 = vrsqrt.pop %v545
      %v578 = vrsqrt.pop %v546
      %v579 = vrsqrt.pop %v547
      %v580 = vrsqrt.pop %v548
      %v581 = vrsqrt.pop %v549
      %v582 = vrsqrt.pop %v550
      %v583 = vrsqrt.pop %v551
      %v584 = vrsqrt.pop %v552
      %v585 = vrsqrt.pop %v553
      %v586 = vrsqrt.pop %v554
      %v587 = vrsqrt.pop %v555
      %v588 = vrsqrt.pop %v556
      %v589 = vrsqrt.pop %v557
      %v590 = vrsqrt.pop %v558
      %v591 = vrsqrt.pop %v559
      %v592 = vmul.f32 %v336, %v560
      %v593 = vmul.f32 %v337, %v561
      %v594 = vmul.f32 %v338, %v562
      %v595 = vmul.f32 %v339, %v563
      %v596 = vmul.f32 %v340, %v564
      %v597 = vmul.f32 %v341, %v565
      %v598 = vmul.f32 %v342, %v566
      %v599 = vmul.f32 %v343, %v567
      %v600 = vmul.f32 %v344, %v568
      %v601 = vmul.f32 %v345, %v569
      %v602 = vmul.f32 %v346, %v570
      %v603 = vmul.f32 %v347, %v571
      %v604 = vmul.f32 %v348, %v572
      %v605 = vmul.f32 %v349, %v573
      %v606 = vmul.f32 %v350, %v574
      %v607 = vmul.f32 %v351, %v575
      %v608 = vmul.f32 %v352, %v576
      %v609 = vmul.f32 %v353, %v577
      %v610 = vmul.f32 %v354, %v578
      %v611 = vmul.f32 %v355, %v579
      %v612 = vmul.f32 %v356, %v580
      %v613 = vmul.f32 %v357, %v581
      %v614 = vmul.f32 %v358, %v582
      %v615 = vmul.f32 %v359, %v583
      %v616 = vmul.f32 %v360, %v584
      %v617 = vmul.f32 %v361, %v585
      %v618 = vmul.f32 %v362, %v586
      %v619 = vmul.f32 %v363, %v587
      %v620 = vmul.f32 %v364, %v588
      %v621 = vmul.f32 %v365, %v589
      %v622 = vmul.f32 %v366, %v590
      %v623 = vmul.f32 %v367, %v591
      %v624 = vld [vmem:[%s1] sm:$0x1]
      %v626 = vlaneseq
      %v627 = vshrl.u32 %v626, 7
      %v628 = vsub.s32 0, %v627
      %v629 = vrot.slane %v624, %v628
      %v631 = vmul.f32 %v592, %v629
      %v632 = vmul.f32 %v593, %v629
      %v633 = vmul.f32 %v594, %v629
      %v634 = vmul.f32 %v595, %v629
      %v635 = vmul.f32 %v596, %v629
      %v636 = vmul.f32 %v597, %v629
      %v637 = vmul.f32 %v598, %v629
      %v638 = vmul.f32 %v599, %v629
      %v639 = vmul.f32 %v600, %v629
      %v640 = vmul.f32 %v601, %v629
      %v641 = vmul.f32 %v602, %v629
      %v642 = vmul.f32 %v603, %v629
      %v643 = vmul.f32 %v604, %v629
      %v644 = vmul.f32 %v605, %v629
      %v645 = vmul.f32 %v606, %v629
      %v646 = vmul.f32 %v607, %v629
      %v647 = vmul.f32 %v608, %v629
      %v648 = vmul.f32 %v609, %v629
      %v649 = vmul.f32 %v610, %v629
      %v650 = vmul.f32 %v611, %v629
      %v651 = vmul.f32 %v612, %v629
      %v652 = vmul.f32 %v613, %v629
      %v653 = vmul.f32 %v614, %v629
      %v654 = vmul.f32 %v615, %v629
      %v655 = vmul.f32 %v616, %v629
      %v656 = vmul.f32 %v617, %v629
      %v657 = vmul.f32 %v618, %v629
      %v658 = vmul.f32 %v619, %v629
      %v659 = vmul.f32 %v620, %v629
      %v660 = vmul.f32 %v621, %v629
      %v661 = vmul.f32 %v622, %v629
      %v662 = vmul.f32 %v623, %v629
      %v663 = vld [vmem:[%s2] sm:$0x1]
      %v665 = vlaneseq
      %v666 = vshrl.u32 %v665, 7
      %v667 = vsub.s32 0, %v666
      %v668 = vrot.slane %v663, %v667
      %v670 = vadd.f32 %v631, %v668
      %v671 = vadd.f32 %v632, %v668
      %v672 = vadd.f32 %v633, %v668
      %v673 = vadd.f32 %v634, %v668
      %v674 = vadd.f32 %v635, %v668
      %v675 = vadd.f32 %v636, %v668
      %v676 = vadd.f32 %v637, %v668
      %v677 = vadd.f32 %v638, %v668
      %v678 = vadd.f32 %v639, %v668
      %v679 = vadd.f32 %v640, %v668
      %v680 = vadd.f32 %v641, %v668
      %v681 = vadd.f32 %v642, %v668
      %v682 = vadd.f32 %v643, %v668
      %v683 = vadd.f32 %v644, %v668
      %v684 = vadd.f32 %v645, %v668
      %v685 = vadd.f32 %v646, %v668
      %v686 = vadd.f32 %v647, %v668
      %v687 = vadd.f32 %v648, %v668
      %v688 = vadd.f32 %v649, %v668
      %v689 = vadd.f32 %v650, %v668
      %v690 = vadd.f32 %v651, %v668
      %v691 = vadd.f32 %v652, %v668
      %v692 = vadd.f32 %v653, %v668
      %v693 = vadd.f32 %v654, %v668
      %v694 = vadd.f32 %v655, %v668
      %v695 = vadd.f32 %v656, %v668
      %v696 = vadd.f32 %v657, %v668
      %v697 = vadd.f32 %v658, %v668
      %v698 = vadd.f32 %v659, %v668
      %v699 = vadd.f32 %v660, %v668
      %v700 = vadd.f32 %v661, %v668
      %v701 = vadd.f32 %v662, %v668
      %702 = vst.msk [vmem:[%s172] sm:$0xff] %vm206, %v670
      %703 = vst.msk [vmem:[%s172 + $0x8] sm:$0xff] %vm206, %v671
      %704 = vst.msk [vmem:[%s172 + $0x10] sm:$0xff] %vm206, %v672
      %705 = vst.msk [vmem:[%s172 + $0x18] sm:$0xff] %vm206, %v673
      %706 = vst.msk [vmem:[%s172 + $0x20] sm:$0xff] %vm206, %v674
      %707 = vst.msk [vmem:[%s172 + $0x28] sm:$0xff] %vm206, %v675
      %708 = vst.msk [vmem:[%s172 + $0x30] sm:$0xff] %vm206, %v676
      %709 = vst.msk [vmem:[%s172 + $0x38] sm:$0xff] %vm206, %v677
      %710 = vst.msk [vmem:[%s172 + $0x40] sm:$0xff] %vm206, %v678
      %711 = vst.msk [vmem:[%s172 + $0x48] sm:$0xff] %vm206, %v679
      %712 = vst.msk [vmem:[%s172 + $0x50] sm:$0xff] %vm206, %v680
      %713 = vst.msk [vmem:[%s172 + $0x58] sm:$0xff] %vm206, %v681
      %714 = vst.msk [vmem:[%s172 + $0x60] sm:$0xff] %vm206, %v682
      %715 = vst.msk [vmem:[%s172 + $0x68] sm:$0xff] %vm206, %v683
      %716 = vst.msk [vmem:[%s172 + $0x70] sm:$0xff] %vm206, %v684
      %717 = vst.msk [vmem:[%s172 + $0x78] sm:$0xff] %vm206, %v685
      %718 = vst.msk [vmem:[%s172 + $0x80] sm:$0xff] %vm206, %v686
      %719 = vst.msk [vmem:[%s172 + $0x88] sm:$0xff] %vm206, %v687
      %720 = vst.msk [vmem:[%s172 + $0x90] sm:$0xff] %vm206, %v688
      %721 = vst.msk [vmem:[%s172 + $0x98] sm:$0xff] %vm206, %v689
      %722 = vst.msk [vmem:[%s172 + $0xa0] sm:$0xff] %vm206, %v690
      %723 = vst.msk [vmem:[%s172 + $0xa8] sm:$0xff] %vm206, %v691
      %724 = vst.msk [vmem:[%s172 + $0xb0] sm:$0xff] %vm206, %v692
      %725 = vst.msk [vmem:[%s172 + $0xb8] sm:$0xff] %vm206, %v693
      %726 = vst.msk [vmem:[%s172 + $0xc0] sm:$0xff] %vm206, %v694
      %727 = vst.msk [vmem:[%s172 + $0xc8] sm:$0xff] %vm206, %v695
      %728 = vst.msk [vmem:[%s172 + $0xd0] sm:$0xff] %vm206, %v696
      %729 = vst.msk [vmem:[%s172 + $0xd8] sm:$0xff] %vm206, %v697
      %730 = vst.msk [vmem:[%s172 + $0xe0] sm:$0xff] %vm206, %v698
      %731 = vst.msk [vmem:[%s172 + $0xe8] sm:$0xff] %vm206, %v699
      %732 = vst.msk [vmem:[%s172 + $0xf0] sm:$0xff] %vm206, %v700
      %733 = vst.msk [vmem:[%s172 + $0xf8] sm:$0xff] %vm206, %v701
      %s734 = smul.u32 32, %s14
      %p735 = scmp.lt.s32.totalorder %s734, 63
      %s736 = scalar_select %p735, %s734, 63
      %s737 = smul.addr %s736, 8
      %s738 = scalar_lea.vmem %s3, %s737
      // Predicated region
      $region33: #{dcn_layer_forward.3} parent=31 // pred_check
        %p739 = pneg %p100
      $region34: #{dcn_layer_forward.3} parent=31 // pred_check_branch
        %741 = sbr.rel (%p739) target = $region36
      $region35: #{dcn_layer_forward.3} parent=31 // pred_region
        %s742 = smul.u32 32, %s14
      $region36: #{dcn_layer_forward.3} parent=31 // pred_fallthru
        _
    $region32: #{dcn_layer_forward.3} parent=5 // pred_fallthru
      _
    %p743 = scmp.le.s32.totalorder 2, %s9
    // Predicated region
    $region37: #{dcn_layer_forward.3} parent=5 // pred_check
      %p744 = pneg %p743
    $region38: #{dcn_layer_forward.3} parent=5 // pred_check_branch
      %746 = sbr.rel (%p744) target = $region40
    $region39: #{dcn_layer_forward.3} parent=5 // pred_region
      %s747 = ssub.s32 %s9, 2
      // Predicated region
      $region41: #{dcn_layer_forward.3} parent=39 // pred_check
        %p748 = pneg %p106
      $region42: #{dcn_layer_forward.3} parent=39 // pred_check_branch
        %750 = sbr.rel (%p748) target = $region44
      $region43: #{dcn_layer_forward.3} parent=39 // pred_region
        %s751 = smul.u32 32, %s15
        %p752 = scmp.lt.s32.totalorder %s751, 63
        %s753 = scalar_select %p752, %s751, 63
        %s754 = smul.addr %s753, 8
        %s755 = scalar_lea.vmem %s3, %s754
      $region44: #{dcn_layer_forward.3} parent=39 // pred_fallthru
        _
    $region40: #{dcn_layer_forward.3} parent=5 // pred_fallthru
      _
  $region6: #{dcn_layer_forward.3} parent=0 // loop_footer
    %s13 = sadd.s32 1, %s9
  $region7: #{dcn_layer_forward.3} parent=0 // loop_footer_branch
    %8 = sbr.rel target = $region3
  $region8: #{dcn_layer_forward.3} parent=0 // loop_exit
    _

// kernel: dcn_layer_forward.4
$region0: #{dcn_layer_forward.4}
  #allocation0 [shape = 'u32[]', space=smem, size = 0x4, offset = 0x4, fixed_abs, tag = 'smem constant byte address 0x4 - core index']
  #allocation1 [shape = 'u32[144,128]{1,0:T(1,128)}', space=vmem, size = 0x12000, scoped, tag = 'internal scratch']
  %s0 = inlined_call_operand.vmem [shape: f32[512,4], index: 0, kind: input, shape index: {}]
  %s1 = inlined_call_operand.vmem [shape: f32[512,4], index: 1, kind: input, shape index: {}]
  %s2 = inlined_call_operand.vmem [shape: f32[1,4], index: 2, kind: input, shape index: {}]
  %s3 = inlined_call_operand.vmem [shape: f32[1,4], index: 3, kind: input, shape index: {}]
  %s4 = inlined_call_operand.vmem [shape: f32[4,16], index: 4, kind: input, shape index: {}]
  %s5 = inlined_call_operand.vmem [shape: f32[512,4], index: 5, kind: output, shape index: {0}]
  %s6 = inlined_call_operand.vmem [shape: f32[512,16], index: 6, kind: output, shape index: {1}]
  %7 = xla_tuple %s5, %s6
  %s8 = sld [smem:[#allocation0]]
  $region61: #{dcn_layer_forward.4} parent=0
    _
  %s10 = ssub.s32 1, %s8
  %s11 = scalar_select 0, %s10, %s8
  loop: start=0, step=1, limit=4
  $region2: #{dcn_layer_forward.4} parent=0 // loop_pre_header
    _
  $region3: #{dcn_layer_forward.4} parent=0 // loop_header
    %s13 = sphi 0, %s17
    %p14 = scmp.ge.s32.totalorder %s13, 4
    %s23 = sphi 0, %s25
    %s26 = sphi 0, %s23
    %s27 = sphi 0, %s26
    %s43 = sphi 0, %s27
    %s49 = sphi 0, %s51
    %s52 = sphi 0, %s49
    %s53 = sphi 0, %s52
    %s69 = sphi 0, %s53
    %s73 = sphi 0, %s73
    %s75 = sphi 0, %s73
    %s76 = sphi 0, %s75
    %s90 = sphi 0, %s76
    %s94 = sphi 0, %s94
    %s96 = sphi 0, %s94
    %s97 = sphi 0, %s96
    %s111 = sphi 0, %s97
    %s115 = sphi 0, %s115
    %s117 = sphi 0, %s115
    %s118 = sphi 0, %s117
    %s132 = sphi 0, %s118
    %s138 = sphi 0, %s140
    %s141 = sphi 0, %s138
    %s142 = sphi 0, %s141
    %s158 = sphi 0, %s142
    %s164 = sphi 0, %s166
    %s167 = sphi 0, %s164
    %s168 = sphi 0, %s167
    %s184 = sphi 0, %s168
  $region4: #{dcn_layer_forward.4} parent=0 // loop_header_branch
    %16 = sbr.rel (%p14) target = $region8
  $region5: #{dcn_layer_forward.4} parent=0 // loop_body
    %s18 = ssub.s32 %s13, 1
    %s19 = ssub.s32 %s13, 2
    %s20 = sadd.s32 %s13, 1
    %s21 = ssub.s32 %s13, %s20
    %p22 = scmp.eq.s32.totalorder %s21, 0
    %s24 = sadd.s32 %s23, 1
    %s25 = scalar_select %p22, %s23, %s24
    %p28 = pneg %p22
    %p29 = scmp.eq.s32.totalorder %s13, 1
    %p30 = por %p28, %p29
    %p31 = scmp.ne.s32.totalorder %s23, %s26
    %p32 = scmp.eq.s32.totalorder %s13, 0
    %p33 = por %p31, %p32
    %p34 = scmp.ne.s32.totalorder %s23, %s26
    %p35 = scmp.eq.s32.totalorder %s18, 1
    %p36 = por %p34, %p35
    %p37 = scmp.ne.s32.totalorder %s26, %s27
    %p38 = scmp.eq.s32.totalorder %s18, 0
    %p39 = por %p37, %p38
    %p40 = scmp.ne.s32.totalorder %s26, %s27
    %p41 = scmp.eq.s32.totalorder %s19, 1
    %p42 = por %p40, %p41
    %p44 = scmp.ne.s32.totalorder %s27, %s43
    %p45 = scmp.eq.s32.totalorder %s19, 0
    %p46 = por %p44, %p45
    %s47 = ssub.s32 %s13, %s20
    %p48 = scmp.eq.s32.totalorder %s47, 0
    %s50 = sadd.s32 %s49, 1
    %s51 = scalar_select %p48, %s49, %s50
    %p54 = pneg %p48
    %p55 = scmp.eq.s32.totalorder %s13, 1
    %p56 = por %p54, %p55
    %p57 = scmp.ne.s32.totalorder %s49, %s52
    %p58 = scmp.eq.s32.totalorder %s13, 0
    %p59 = por %p57, %p58
    %p60 = scmp.ne.s32.totalorder %s49, %s52
    %p61 = scmp.eq.s32.totalorder %s18, 1
    %p62 = por %p60, %p61
    %p63 = scmp.ne.s32.totalorder %s52, %s53
    %p64 = scmp.eq.s32.totalorder %s18, 0
    %p65 = por %p63, %p64
    %p66 = scmp.ne.s32.totalorder %s52, %s53
    %p67 = scmp.eq.s32.totalorder %s19, 1
    %p68 = por %p66, %p67
    %p70 = scmp.ne.s32.totalorder %s53, %s69
    %p71 = scmp.eq.s32.totalorder %s19, 0
    %p72 = por %p70, %p71
    %s74 = sadd.s32 %s73, 1
    %p77 = scmp.eq.s32.totalorder %s13, 1
    %p78 = scmp.ne.s32.totalorder %s73, %s75
    %p79 = scmp.eq.s32.totalorder %s13, 0
    %p80 = por %p78, %p79
    %p81 = scmp.ne.s32.totalorder %s73, %s75
    %p82 = scmp.eq.s32.totalorder %s18, 1
    %p83 = por %p81, %p82
    %p84 = scmp.ne.s32.totalorder %s75, %s76
    %p85 = scmp.eq.s32.totalorder %s18, 0
    %p86 = por %p84, %p85
    %p87 = scmp.ne.s32.totalorder %s75, %s76
    %p88 = scmp.eq.s32.totalorder %s19, 1
    %p89 = por %p87, %p88
    %p91 = scmp.ne.s32.totalorder %s76, %s90
    %p92 = scmp.eq.s32.totalorder %s19, 0
    %p93 = por %p91, %p92
    %s95 = sadd.s32 %s94, 1
    %p98 = scmp.eq.s32.totalorder %s13, 1
    %p99 = scmp.ne.s32.totalorder %s94, %s96
    %p100 = scmp.eq.s32.totalorder %s13, 0
    %p101 = por %p99, %p100
    %p102 = scmp.ne.s32.totalorder %s94, %s96
    %p103 = scmp.eq.s32.totalorder %s18, 1
    %p104 = por %p102, %p103
    %p105 = scmp.ne.s32.totalorder %s96, %s97
    %p106 = scmp.eq.s32.totalorder %s18, 0
    %p107 = por %p105, %p106
    %p108 = scmp.ne.s32.totalorder %s96, %s97
    %p109 = scmp.eq.s32.totalorder %s19, 1
    %p110 = por %p108, %p109
    %p112 = scmp.ne.s32.totalorder %s97, %s111
    %p113 = scmp.eq.s32.totalorder %s19, 0
    %p114 = por %p112, %p113
    %s116 = sadd.s32 %s115, 1
    %p119 = scmp.eq.s32.totalorder %s13, 1
    %p120 = scmp.ne.s32.totalorder %s115, %s117
    %p121 = scmp.eq.s32.totalorder %s13, 0
    %p122 = por %p120, %p121
    %p123 = scmp.ne.s32.totalorder %s115, %s117
    %p124 = scmp.eq.s32.totalorder %s18, 1
    %p125 = por %p123, %p124
    %p126 = scmp.ne.s32.totalorder %s117, %s118
    %p127 = scmp.eq.s32.totalorder %s18, 0
    %p128 = por %p126, %p127
    %p129 = scmp.ne.s32.totalorder %s117, %s118
    %p130 = scmp.eq.s32.totalorder %s19, 1
    %p131 = por %p129, %p130
    %p133 = scmp.ne.s32.totalorder %s118, %s132
    %p134 = scmp.eq.s32.totalorder %s19, 0
    %p135 = por %p133, %p134
    %s136 = ssub.s32 %s13, %s20
    %p137 = scmp.eq.s32.totalorder %s136, 0
    %s139 = sadd.s32 %s138, 1
    %s140 = scalar_select %p137, %s138, %s139
    %p143 = pneg %p137
    %p144 = scmp.eq.s32.totalorder %s13, 1
    %p145 = por %p143, %p144
    %p146 = scmp.ne.s32.totalorder %s138, %s141
    %p147 = scmp.eq.s32.totalorder %s13, 0
    %p148 = por %p146, %p147
    %p149 = scmp.ne.s32.totalorder %s138, %s141
    %p150 = scmp.eq.s32.totalorder %s18, 1
    %p151 = por %p149, %p150
    %p152 = scmp.ne.s32.totalorder %s141, %s142
    %p153 = scmp.eq.s32.totalorder %s18, 0
    %p154 = por %p152, %p153
    %p155 = scmp.ne.s32.totalorder %s141, %s142
    %p156 = scmp.eq.s32.totalorder %s19, 1
    %p157 = por %p155, %p156
    %p159 = scmp.ne.s32.totalorder %s142, %s158
    %p160 = scmp.eq.s32.totalorder %s19, 0
    %p161 = por %p159, %p160
    %s162 = ssub.s32 %s13, %s20
    %p163 = scmp.eq.s32.totalorder %s162, 0
    %s165 = sadd.s32 %s164, 1
    %s166 = scalar_select %p163, %s164, %s165
    %p169 = pneg %p163
    %p170 = scmp.eq.s32.totalorder %s13, 1
    %p171 = por %p169, %p170
    %p172 = scmp.ne.s32.totalorder %s164, %s167
    %p173 = scmp.eq.s32.totalorder %s13, 0
    %p174 = por %p172, %p173
    %p175 = scmp.ne.s32.totalorder %s164, %s167
    %p176 = scmp.eq.s32.totalorder %s18, 1
    %p177 = por %p175, %p176
    %p178 = scmp.ne.s32.totalorder %s167, %s168
    %p179 = scmp.eq.s32.totalorder %s18, 0
    %p180 = por %p178, %p179
    %p181 = scmp.ne.s32.totalorder %s167, %s168
    %p182 = scmp.eq.s32.totalorder %s19, 1
    %p183 = por %p181, %p182
    %p185 = scmp.ne.s32.totalorder %s168, %s184
    %p186 = scmp.eq.s32.totalorder %s19, 0
    %p187 = por %p185, %p186
    %p188 = scmp.le.s32.totalorder 1, %s13
    %p189 = scmp.lt.s32.totalorder %s13, 3
    %p190 = pnand %p188, %p189
    %p191 = pneg %p190
    // Predicated region
    $region9: #{dcn_layer_forward.4} parent=5 // pred_check
      _
    $region10: #{dcn_layer_forward.4} parent=5 // pred_check_branch
      %193 = sbr.rel (%p190) target = $region12
    $region11: #{dcn_layer_forward.4} parent=5 // pred_region
      %s194 = ssub.s32 %s13, 1
      // Predicated region
      $region13: #{dcn_layer_forward.4} parent=11 // pred_check
        %p195 = pneg %p86
      $region14: #{dcn_layer_forward.4} parent=11 // pred_check_branch
        %197 = sbr.rel (%p195) target = $region16
      $region15: #{dcn_layer_forward.4} parent=11 // pred_region
        _
      $region16: #{dcn_layer_forward.4} parent=11 // pred_fallthru
        _
      // Predicated region
      $region17: #{dcn_layer_forward.4} parent=11 // pred_check
        %p198 = pneg %p107
      $region18: #{dcn_layer_forward.4} parent=11 // pred_check_branch
        %200 = sbr.rel (%p198) target = $region20
      $region19: #{dcn_layer_forward.4} parent=11 // pred_region
        _
      $region20: #{dcn_layer_forward.4} parent=11 // pred_fallthru
        _
      // Predicated region
      $region21: #{dcn_layer_forward.4} parent=11 // pred_check
        %p201 = pneg %p128
      $region22: #{dcn_layer_forward.4} parent=11 // pred_check_branch
        %203 = sbr.rel (%p201) target = $region24
      $region23: #{dcn_layer_forward.4} parent=11 // pred_region
        _
      $region24: #{dcn_layer_forward.4} parent=11 // pred_fallthru
        _
    $region12: #{dcn_layer_forward.4} parent=5 // pred_fallthru
      _
    %p204 = scmp.lt.s32.totalorder %s13, 2
    // Predicated region
    $region25: #{dcn_layer_forward.4} parent=5 // pred_check
      %p205 = pneg %p204
    $region26: #{dcn_layer_forward.4} parent=5 // pred_check_branch
      %207 = sbr.rel (%p205) target = $region28
    $region27: #{dcn_layer_forward.4} parent=5 // pred_region
      // Predicated region
      $region29: #{dcn_layer_forward.4} parent=27 // pred_check
        %p208 = pneg %p33
      $region30: #{dcn_layer_forward.4} parent=27 // pred_check_branch
        %210 = sbr.rel (%p208) target = $region32
      $region31: #{dcn_layer_forward.4} parent=27 // pred_region
        %s211 = smul.u32 32, %s13
        %p212 = scmp.lt.s32.totalorder %s211, 63
        %s213 = scalar_select %p212, %s211, 63
        %s214 = smul.addr %s213, 8
        %s215 = scalar_lea.vmem %s0, %s214
        %s216 = smul.u32 32, %s13
      $region32: #{dcn_layer_forward.4} parent=27 // pred_fallthru
        _
      // Predicated region
      $region33: #{dcn_layer_forward.4} parent=27 // pred_check
        %p217 = pneg %p59
      $region34: #{dcn_layer_forward.4} parent=27 // pred_check_branch
        %219 = sbr.rel (%p217) target = $region36
      $region35: #{dcn_layer_forward.4} parent=27 // pred_region
        %s220 = smul.u32 32, %s13
        %p221 = scmp.lt.s32.totalorder %s220, 63
        %s222 = scalar_select %p221, %s220, 63
        %s223 = smul.addr %s222, 8
        %s224 = scalar_lea.vmem %s1, %s223
        %s225 = smul.u32 32, %s13
      $region36: #{dcn_layer_forward.4} parent=27 // pred_fallthru
        _
    $region28: #{dcn_layer_forward.4} parent=5 // pred_fallthru
      _
    %p226 = scmp.le.s32.totalorder 1, %s13
    %p227 = scmp.lt.s32.totalorder %s13, 3
    %p228 = pnand %p226, %p227
    %p229 = pneg %p228
    // Predicated region
    $region37: #{dcn_layer_forward.4} parent=5 // pred_check
      _
    $region38: #{dcn_layer_forward.4} parent=5 // pred_check_branch
      %231 = sbr.rel (%p228) target = $region40
    $region39: #{dcn_layer_forward.4} parent=5 // pred_region
      %s232 = ssub.s32 %s13, 1
      %s233 = smul.u32 32, %s18
      %p234 = scmp.lt.s32.totalorder %s233, 63
      %s235 = scalar_select %p234, %s233, 63
      %s236 = smul.addr %s235, 8
      %s237 = scalar_lea.vmem %s0, %s236
      %p238 = pneg %p39
      %p239 = pneg %p36
      %s240 = smul.u32 32, %s18
      %p241 = scmp.lt.s32.totalorder %s240, 63
      %s242 = scalar_select %p241, %s240, 63
      %s243 = smul.addr %s242, 8
      %s244 = scalar_lea.vmem %s1, %s243
      %p245 = pneg %p65
      %p246 = pneg %p62
      %p247 = pneg %p86
      %p248 = pneg %p83
      %p249 = pneg %p107
      %p250 = pneg %p104
      %p251 = pneg %p128
      %p252 = pneg %p125
      %p253 = pneg %p154
      %p254 = pneg %p151
      %s255 = smul.u32 32, %s18
      %p256 = scmp.lt.s32.totalorder %s255, 63
      %s257 = scalar_select %p256, %s255, 63
      %s258 = smul.addr %s257, 8
      %s259 = scalar_lea.vmem %s5, %s258
      %p260 = pneg %p180
      %p261 = pneg %p177
      %s262 = smul.u32 32, %s18
      %p263 = scmp.lt.s32.totalorder %s262, 63
      %s264 = scalar_select %p263, %s262, 63
      %s265 = smul.addr %s264, 8
      %s266 = scalar_lea.vmem %s6, %s265
      %s267 = smul.u32 32, %s18
      %p268 = scmp.lt.s32.totalorder %s267, 63
      %s269 = scalar_select %p268, %s267, 63
      %s270 = smul.addr %s269, 8
      %s271 = scalar_lea.vmem %s0, %s270
      %s272 = smul.u32 32, %s18
      %s273 = smul.u32 32, %s18
      %p274 = scmp.lt.s32.totalorder %s273, 63
      %s275 = scalar_select %p274, %s273, 63
      %s276 = smul.addr %s275, 8
      %s277 = scalar_lea.vmem %s1, %s276
      %s278 = smul.u32 32, %s18
      %s279 = smul.u32 32, %s18
      %p280 = scmp.lt.s32.totalorder %s279, 63
      %s281 = scalar_select %p280, %s279, 63
      %s282 = smul.addr %s281, 8
      %s283 = scalar_lea.vmem %s5, %s282
      %s284 = smul.u32 32, %s18
      %s285 = smul.u32 32, %s18
      %p286 = scmp.lt.s32.totalorder %s285, 63
      %s287 = scalar_select %p286, %s285, 63
      %s288 = smul.addr %s287, 8
      %s289 = scalar_lea.vmem %s6, %s288
      %s290 = smul.u32 32, %s18
      %v291 = vld [vmem:[%s271] sm:$0xff]
      %v292 = vld [vmem:[%s271 + $0x8] sm:$0xff]
      %v293 = vld [vmem:[%s271 + $0x10] sm:$0xff]
      %v294 = vld [vmem:[%s271 + $0x18] sm:$0xff]
      %v295 = vld [vmem:[%s271 + $0x20] sm:$0xff]
      %v296 = vld [vmem:[%s271 + $0x28] sm:$0xff]
      %v297 = vld [vmem:[%s271 + $0x30] sm:$0xff]
      %v298 = vld [vmem:[%s271 + $0x38] sm:$0xff]
      %v299 = vld [vmem:[%s271 + $0x40] sm:$0xff]
      %v300 = vld [vmem:[%s271 + $0x48] sm:$0xff]
      %v301 = vld [vmem:[%s271 + $0x50] sm:$0xff]
      %v302 = vld [vmem:[%s271 + $0x58] sm:$0xff]
      %v303 = vld [vmem:[%s271 + $0x60] sm:$0xff]
      %v304 = vld [vmem:[%s271 + $0x68] sm:$0xff]
      %v305 = vld [vmem:[%s271 + $0x70] sm:$0xff]
      %v306 = vld [vmem:[%s271 + $0x78] sm:$0xff]
      %v307 = vld [vmem:[%s271 + $0x80] sm:$0xff]
      %v308 = vld [vmem:[%s271 + $0x88] sm:$0xff]
      %v309 = vld [vmem:[%s271 + $0x90] sm:$0xff]
      %v310 = vld [vmem:[%s271 + $0x98] sm:$0xff]
      %v311 = vld [vmem:[%s271 + $0xa0] sm:$0xff]
      %v312 = vld [vmem:[%s271 + $0xa8] sm:$0xff]
      %v313 = vld [vmem:[%s271 + $0xb0] sm:$0xff]
      %v314 = vld [vmem:[%s271 + $0xb8] sm:$0xff]
      %v315 = vld [vmem:[%s271 + $0xc0] sm:$0xff]
      %v316 = vld [vmem:[%s271 + $0xc8] sm:$0xff]
      %v317 = vld [vmem:[%s271 + $0xd0] sm:$0xff]
      %v318 = vld [vmem:[%s271 + $0xd8] sm:$0xff]
      %v319 = vld [vmem:[%s271 + $0xe0] sm:$0xff]
      %v320 = vld [vmem:[%s271 + $0xe8] sm:$0xff]
      %v321 = vld [vmem:[%s271 + $0xf0] sm:$0xff]
      %v322 = vld [vmem:[%s271 + $0xf8] sm:$0xff]
      %v323 = vld [vmem:[%s277] sm:$0xff]
      %v324 = vld [vmem:[%s277 + $0x8] sm:$0xff]
      %v325 = vld [vmem:[%s277 + $0x10] sm:$0xff]
      %v326 = vld [vmem:[%s277 + $0x18] sm:$0xff]
      %v327 = vld [vmem:[%s277 + $0x20] sm:$0xff]
      %v328 = vld [vmem:[%s277 + $0x28] sm:$0xff]
      %v329 = vld [vmem:[%s277 + $0x30] sm:$0xff]
      %v330 = vld [vmem:[%s277 + $0x38] sm:$0xff]
      %v331 = vld [vmem:[%s277 + $0x40] sm:$0xff]
      %v332 = vld [vmem:[%s277 + $0x48] sm:$0xff]
      %v333 = vld [vmem:[%s277 + $0x50] sm:$0xff]
      %v334 = vld [vmem:[%s277 + $0x58] sm:$0xff]
      %v335 = vld [vmem:[%s277 + $0x60] sm:$0xff]
      %v336 = vld [vmem:[%s277 + $0x68] sm:$0xff]
      %v337 = vld [vmem:[%s277 + $0x70] sm:$0xff]
      %v338 = vld [vmem:[%s277 + $0x78] sm:$0xff]
      %v339 = vld [vmem:[%s277 + $0x80] sm:$0xff]
      %v340 = vld [vmem:[%s277 + $0x88] sm:$0xff]
      %v341 = vld [vmem:[%s277 + $0x90] sm:$0xff]
      %v342 = vld [vmem:[%s277 + $0x98] sm:$0xff]
      %v343 = vld [vmem:[%s277 + $0xa0] sm:$0xff]
      %v344 = vld [vmem:[%s277 + $0xa8] sm:$0xff]
      %v345 = vld [vmem:[%s277 + $0xb0] sm:$0xff]
      %v346 = vld [vmem:[%s277 + $0xb8] sm:$0xff]
      %v347 = vld [vmem:[%s277 + $0xc0] sm:$0xff]
      %v348 = vld [vmem:[%s277 + $0xc8] sm:$0xff]
      %v349 = vld [vmem:[%s277 + $0xd0] sm:$0xff]
      %v350 = vld [vmem:[%s277 + $0xd8] sm:$0xff]
      %v351 = vld [vmem:[%s277 + $0xe0] sm:$0xff]
      %v352 = vld [vmem:[%s277 + $0xe8] sm:$0xff]
      %v353 = vld [vmem:[%s277 + $0xf0] sm:$0xff]
      %v354 = vld [vmem:[%s277 + $0xf8] sm:$0xff]
      %v355 = vadd.f32 %v291, %v323
      %v356 = vadd.f32 %v292, %v324
      %v357 = vadd.f32 %v293, %v325
      %v358 = vadd.f32 %v294, %v326
      %v359 = vadd.f32 %v295, %v327
      %v360 = vadd.f32 %v296, %v328
      %v361 = vadd.f32 %v297, %v329
      %v362 = vadd.f32 %v298, %v330
      %v363 = vadd.f32 %v299, %v331
      %v364 = vadd.f32 %v300, %v332
      %v365 = vadd.f32 %v301, %v333
      %v366 = vadd.f32 %v302, %v334
      %v367 = vadd.f32 %v303, %v335
      %v368 = vadd.f32 %v304, %v336
      %v369 = vadd.f32 %v305, %v337
      %v370 = vadd.f32 %v306, %v338
      %v371 = vadd.f32 %v307, %v339
      %v372 = vadd.f32 %v308, %v340
      %v373 = vadd.f32 %v309, %v341
      %v374 = vadd.f32 %v310, %v342
      %v375 = vadd.f32 %v311, %v343
      %v376 = vadd.f32 %v312, %v344
      %v377 = vadd.f32 %v313, %v345
      %v378 = vadd.f32 %v314, %v346
      %v379 = vadd.f32 %v315, %v347
      %v380 = vadd.f32 %v316, %v348
      %v381 = vadd.f32 %v317, %v349
      %v382 = vadd.f32 %v318, %v350
      %v383 = vadd.f32 %v319, %v351
      %v384 = vadd.f32 %v320, %v352
      %v385 = vadd.f32 %v321, %v353
      %v386 = vadd.f32 %v322, %v354
      %vm387 = vcmask 31744
      %388 = vst.msk [vmem:[%s283] sm:$0xff] %vm387, %v355
      %389 = vst.msk [vmem:[%s283 + $0x8] sm:$0xff] %vm387, %v356
      %390 = vst.msk [vmem:[%s283 + $0x10] sm:$0xff] %vm387, %v357
      %391 = vst.msk [vmem:[%s283 + $0x18] sm:$0xff] %vm387, %v358
      %392 = vst.msk [vmem:[%s283 + $0x20] sm:$0xff] %vm387, %v359
      %393 = vst.msk [vmem:[%s283 + $0x28] sm:$0xff] %vm387, %v360
      %394 = vst.msk [vmem:[%s283 + $0x30] sm:$0xff] %vm387, %v361
      %395 = vst.msk [vmem:[%s283 + $0x38] sm:$0xff] %vm387, %v362
      %396 = vst.msk [vmem:[%s283 + $0x40] sm:$0xff] %vm387, %v363
      %397 = vst.msk [vmem:[%s283 + $0x48] sm:$0xff] %vm387, %v364
      %398 = vst.msk [vmem:[%s283 + $0x50] sm:$0xff] %vm387, %v365
      %399 = vst.msk [vmem:[%s283 + $0x58] sm:$0xff] %vm387, %v366
      %400 = vst.msk [vmem:[%s283 + $0x60] sm:$0xff] %vm387, %v367
      %401 = vst.msk [vmem:[%s283 + $0x68] sm:$0xff] %vm387, %v368
      %402 = vst.msk [vmem:[%s283 + $0x70] sm:$0xff] %vm387, %v369
      %403 = vst.msk [vmem:[%s283 + $0x78] sm:$0xff] %vm387, %v370
      %404 = vst.msk [vmem:[%s283 + $0x80] sm:$0xff] %vm387, %v371
      %405 = vst.msk [vmem:[%s283 + $0x88] sm:$0xff] %vm387, %v372
      %406 = vst.msk [vmem:[%s283 + $0x90] sm:$0xff] %vm387, %v373
      %407 = vst.msk [vmem:[%s283 + $0x98] sm:$0xff] %vm387, %v374
      %408 = vst.msk [vmem:[%s283 + $0xa0] sm:$0xff] %vm387, %v375
      %409 = vst.msk [vmem:[%s283 + $0xa8] sm:$0xff] %vm387, %v376
      %410 = vst.msk [vmem:[%s283 + $0xb0] sm:$0xff] %vm387, %v377
      %411 = vst.msk [vmem:[%s283 + $0xb8] sm:$0xff] %vm387, %v378
      %412 = vst.msk [vmem:[%s283 + $0xc0] sm:$0xff] %vm387, %v379
      %413 = vst.msk [vmem:[%s283 + $0xc8] sm:$0xff] %vm387, %v380
      %414 = vst.msk [vmem:[%s283 + $0xd0] sm:$0xff] %vm387, %v381
      %415 = vst.msk [vmem:[%s283 + $0xd8] sm:$0xff] %vm387, %v382
      %416 = vst.msk [vmem:[%s283 + $0xe0] sm:$0xff] %vm387, %v383
      %417 = vst.msk [vmem:[%s283 + $0xe8] sm:$0xff] %vm387, %v384
      %418 = vst.msk [vmem:[%s283 + $0xf0] sm:$0xff] %vm387, %v385
      %419 = vst.msk [vmem:[%s283 + $0xf8] sm:$0xff] %vm387, %v386
      %v420 = vsel %vm387, %v355, 0.0
      %421 = vadd.xlane.f32.xlu0 %v420
      %v422 = vpop.xlane.xlu0 %421
      %v423 = vsel %vm387, %v356, 0.0
      %424 = vadd.xlane.f32.xlu0 %v423
      %v425 = vpop.xlane.xlu0 %424
      %v426 = vsel %vm387, %v357, 0.0
      %427 = vadd.xlane.f32.xlu0 %v426
      %v428 = vpop.xlane.xlu0 %427
      %v429 = vsel %vm387, %v358, 0.0
      %430 = vadd.xlane.f32.xlu0 %v429
      %v431 = vpop.xlane.xlu0 %430
      %v432 = vsel %vm387, %v359, 0.0
      %433 = vadd.xlane.f32.xlu0 %v432
      %v434 = vpop.xlane.xlu0 %433
      %v435 = vsel %vm387, %v360, 0.0
      %436 = vadd.xlane.f32.xlu0 %v435
      %v437 = vpop.xlane.xlu0 %436
      %v438 = vsel %vm387, %v361, 0.0
      %439 = vadd.xlane.f32.xlu0 %v438
      %v440 = vpop.xlane.xlu0 %439
      %v441 = vsel %vm387, %v362, 0.0
      %442 = vadd.xlane.f32.xlu0 %v441
      %v443 = vpop.xlane.xlu0 %442
      %v444 = vsel %vm387, %v363, 0.0
      %445 = vadd.xlane.f32.xlu0 %v444
      %v446 = vpop.xlane.xlu0 %445
      %v447 = vsel %vm387, %v364, 0.0
      %448 = vadd.xlane.f32.xlu0 %v447
      %v449 = vpop.xlane.xlu0 %448
      %v450 = vsel %vm387, %v365, 0.0
      %451 = vadd.xlane.f32.xlu0 %v450
      %v452 = vpop.xlane.xlu0 %451
      %v453 = vsel %vm387, %v366, 0.0
      %454 = vadd.xlane.f32.xlu0 %v453
      %v455 = vpop.xlane.xlu0 %454
      %v456 = vsel %vm387, %v367, 0.0
      %457 = vadd.xlane.f32.xlu0 %v456
      %v458 = vpop.xlane.xlu0 %457
      %v459 = vsel %vm387, %v368, 0.0
      %460 = vadd.xlane.f32.xlu0 %v459
      %v461 = vpop.xlane.xlu0 %460
      %v462 = vsel %vm387, %v369, 0.0
      %463 = vadd.xlane.f32.xlu0 %v462
      %v464 = vpop.xlane.xlu0 %463
      %v465 = vsel %vm387, %v370, 0.0
      %466 = vadd.xlane.f32.xlu0 %v465
      %v467 = vpop.xlane.xlu0 %466
      %v468 = vsel %vm387, %v371, 0.0
      %469 = vadd.xlane.f32.xlu0 %v468
      %v470 = vpop.xlane.xlu0 %469
      %v471 = vsel %vm387, %v372, 0.0
      %472 = vadd.xlane.f32.xlu0 %v471
      %v473 = vpop.xlane.xlu0 %472
      %v474 = vsel %vm387, %v373, 0.0
      %475 = vadd.xlane.f32.xlu0 %v474
      %v476 = vpop.xlane.xlu0 %475
      %v477 = vsel %vm387, %v374, 0.0
      %478 = vadd.xlane.f32.xlu0 %v477
      %v479 = vpop.xlane.xlu0 %478
      %v480 = vsel %vm387, %v375, 0.0
      %481 = vadd.xlane.f32.xlu0 %v480
      %v482 = vpop.xlane.xlu0 %481
      %v483 = vsel %vm387, %v376, 0.0
      %484 = vadd.xlane.f32.xlu0 %v483
      %v485 = vpop.xlane.xlu0 %484
      %v486 = vsel %vm387, %v377, 0.0
      %487 = vadd.xlane.f32.xlu0 %v486
      %v488 = vpop.xlane.xlu0 %487
      %v489 = vsel %vm387, %v378, 0.0
      %490 = vadd.xlane.f32.xlu0 %v489
      %v491 = vpop.xlane.xlu0 %490
      %v492 = vsel %vm387, %v379, 0.0
      %493 = vadd.xlane.f32.xlu0 %v492
      %v494 = vpop.xlane.xlu0 %493
      %v495 = vsel %vm387, %v380, 0.0
      %496 = vadd.xlane.f32.xlu0 %v495
      %v497 = vpop.xlane.xlu0 %496
      %v498 = vsel %vm387, %v381, 0.0
      %499 = vadd.xlane.f32.xlu0 %v498
      %v500 = vpop.xlane.xlu0 %499
      %v501 = vsel %vm387, %v382, 0.0
      %502 = vadd.xlane.f32.xlu0 %v501
      %v503 = vpop.xlane.xlu0 %502
      %v504 = vsel %vm387, %v383, 0.0
      %505 = vadd.xlane.f32.xlu0 %v504
      %v506 = vpop.xlane.xlu0 %505
      %v507 = vsel %vm387, %v384, 0.0
      %508 = vadd.xlane.f32.xlu0 %v507
      %v509 = vpop.xlane.xlu0 %508
      %v510 = vsel %vm387, %v385, 0.0
      %511 = vadd.xlane.f32.xlu0 %v510
      %v512 = vpop.xlane.xlu0 %511
      %v513 = vsel %vm387, %v386, 0.0
      %514 = vadd.xlane.f32.xlu0 %v513
      %v515 = vpop.xlane.xlu0 %514
      %v516 = vrcp.pop 4.0
      %v517 = vmul.f32 %v422, %v516
      %v518 = vmul.f32 %v425, %v516
      %v519 = vmul.f32 %v428, %v516
      %v520 = vmul.f32 %v431, %v516
      %v521 = vmul.f32 %v434, %v516
      %v522 = vmul.f32 %v437, %v516
      %v523 = vmul.f32 %v440, %v516
      %v524 = vmul.f32 %v443, %v516
      %v525 = vmul.f32 %v446, %v516
      %v526 = vmul.f32 %v449, %v516
      %v527 = vmul.f32 %v452, %v516
      %v528 = vmul.f32 %v455, %v516
      %v529 = vmul.f32 %v458, %v516
      %v530 = vmul.f32 %v461, %v516
      %v531 = vmul.f32 %v464, %v516
      %v532 = vmul.f32 %v467, %v516
      %v533 = vmul.f32 %v470, %v516
      %v534 = vmul.f32 %v473, %v516
      %v535 = vmul.f32 %v476, %v516
      %v536 = vmul.f32 %v479, %v516
      %v537 = vmul.f32 %v482, %v516
      %v538 = vmul.f32 %v485, %v516
      %v539 = vmul.f32 %v488, %v516
      %v540 = vmul.f32 %v491, %v516
      %v541 = vmul.f32 %v494, %v516
      %v542 = vmul.f32 %v497, %v516
      %v543 = vmul.f32 %v500, %v516
      %v544 = vmul.f32 %v503, %v516
      %v545 = vmul.f32 %v506, %v516
      %v546 = vmul.f32 %v509, %v516
      %v547 = vmul.f32 %v512, %v516
      %v548 = vmul.f32 %v515, %v516
      %v549 = vsub.f32 %v355, %v517
      %v550 = vsub.f32 %v356, %v518
      %v551 = vsub.f32 %v357, %v519
      %v552 = vsub.f32 %v358, %v520
      %v553 = vsub.f32 %v359, %v521
      %v554 = vsub.f32 %v360, %v522
      %v555 = vsub.f32 %v361, %v523
      %v556 = vsub.f32 %v362, %v524
      %v557 = vsub.f32 %v363, %v525
      %v558 = vsub.f32 %v364, %v526
      %v559 = vsub.f32 %v365, %v527
      %v560 = vsub.f32 %v366, %v528
      %v561 = vsub.f32 %v367, %v529
      %v562 = vsub.f32 %v368, %v530
      %v563 = vsub.f32 %v369, %v531
      %v564 = vsub.f32 %v370, %v532
      %v565 = vsub.f32 %v371, %v533
      %v566 = vsub.f32 %v372, %v534
      %v567 = vsub.f32 %v373, %v535
      %v568 = vsub.f32 %v374, %v536
      %v569 = vsub.f32 %v375, %v537
      %v570 = vsub.f32 %v376, %v538
      %v571 = vsub.f32 %v377, %v539
      %v572 = vsub.f32 %v378, %v540
      %v573 = vsub.f32 %v379, %v541
      %v574 = vsub.f32 %v380, %v542
      %v575 = vsub.f32 %v381, %v543
      %v576 = vsub.f32 %v382, %v544
      %v577 = vsub.f32 %v383, %v545
      %v578 = vsub.f32 %v384, %v546
      %v579 = vsub.f32 %v385, %v547
      %v580 = vsub.f32 %v386, %v548
      %v581 = vmul.f32 %v549, %v549
      %v582 = vmul.f32 %v550, %v550
      %v583 = vmul.f32 %v551, %v551
      %v584 = vmul.f32 %v552, %v552
      %v585 = vmul.f32 %v553, %v553
      %v586 = vmul.f32 %v554, %v554
      %v587 = vmul.f32 %v555, %v555
      %v588 = vmul.f32 %v556, %v556
      %v589 = vmul.f32 %v557, %v557
      %v590 = vmul.f32 %v558, %v558
      %v591 = vmul.f32 %v559, %v559
      %v592 = vmul.f32 %v560, %v560
      %v593 = vmul.f32 %v561, %v561
      %v594 = vmul.f32 %v562, %v562
      %v595 = vmul.f32 %v563, %v563
      %v596 = vmul.f32 %v564, %v564
      %v597 = vmul.f32 %v565, %v565
      %v598 = vmul.f32 %v566, %v566
      %v599 = vmul.f32 %v567, %v567
      %v600 = vmul.f32 %v568, %v568
      %v601 = vmul.f32 %v569, %v569
      %v602 = vmul.f32 %v570, %v570
      %v603 = vmul.f32 %v571, %v571
      %v604 = vmul.f32 %v572, %v572
      %v605 = vmul.f32 %v573, %v573
      %v606 = vmul.f32 %v574, %v574
      %v607 = vmul.f32 %v575, %v575
      %v608 = vmul.f32 %v576, %v576
      %v609 = vmul.f32 %v577, %v577
      %v610 = vmul.f32 %v578, %v578
      %v611 = vmul.f32 %v579, %v579
      %v612 = vmul.f32 %v580, %v580
      %v613 = vsel %vm387, %v581, 0.0
      %614 = vadd.xlane.f32.xlu0 %v613
      %v615 = vpop.xlane.xlu0 %614
      %v616 = vsel %vm387, %v582, 0.0
      %617 = vadd.xlane.f32.xlu0 %v616
      %v618 = vpop.xlane.xlu0 %617
      %v619 = vsel %vm387, %v583, 0.0
      %620 = vadd.xlane.f32.xlu0 %v619
      %v621 = vpop.xlane.xlu0 %620
      %v622 = vsel %vm387, %v584, 0.0
      %623 = vadd.xlane.f32.xlu0 %v622
      %v624 = vpop.xlane.xlu0 %623
      %v625 = vsel %vm387, %v585, 0.0
      %626 = vadd.xlane.f32.xlu0 %v625
      %v627 = vpop.xlane.xlu0 %626
      %v628 = vsel %vm387, %v586, 0.0
      %629 = vadd.xlane.f32.xlu0 %v628
      %v630 = vpop.xlane.xlu0 %629
      %v631 = vsel %vm387, %v587, 0.0
      %632 = vadd.xlane.f32.xlu0 %v631
      %v633 = vpop.xlane.xlu0 %632
      %v634 = vsel %vm387, %v588, 0.0
      %635 = vadd.xlane.f32.xlu0 %v634
      %v636 = vpop.xlane.xlu0 %635
      %v637 = vsel %vm387, %v589, 0.0
      %638 = vadd.xlane.f32.xlu0 %v637
      %v639 = vpop.xlane.xlu0 %638
      %v640 = vsel %vm387, %v590, 0.0
      %641 = vadd.xlane.f32.xlu0 %v640
      %v642 = vpop.xlane.xlu0 %641
      %v643 = vsel %vm387, %v591, 0.0
      %644 = vadd.xlane.f32.xlu0 %v643
      %v645 = vpop.xlane.xlu0 %644
      %v646 = vsel %vm387, %v592, 0.0
      %647 = vadd.xlane.f32.xlu0 %v646
      %v648 = vpop.xlane.xlu0 %647
      %v649 = vsel %vm387, %v593, 0.0
      %650 = vadd.xlane.f32.xlu0 %v649
      %v651 = vpop.xlane.xlu0 %650
      %v652 = vsel %vm387, %v594, 0.0
      %653 = vadd.xlane.f32.xlu0 %v652
      %v654 = vpop.xlane.xlu0 %653
      %v655 = vsel %vm387, %v595, 0.0
      %656 = vadd.xlane.f32.xlu0 %v655
      %v657 = vpop.xlane.xlu0 %656
      %v658 = vsel %vm387, %v596, 0.0
      %659 = vadd.xlane.f32.xlu0 %v658
      %v660 = vpop.xlane.xlu0 %659
      %v661 = vsel %vm387, %v597, 0.0
      %662 = vadd.xlane.f32.xlu0 %v661
      %v663 = vpop.xlane.xlu0 %662
      %v664 = vsel %vm387, %v598, 0.0
      %665 = vadd.xlane.f32.xlu0 %v664
      %v666 = vpop.xlane.xlu0 %665
      %v667 = vsel %vm387, %v599, 0.0
      %668 = vadd.xlane.f32.xlu0 %v667
      %v669 = vpop.xlane.xlu0 %668
      %v670 = vsel %vm387, %v600, 0.0
      %671 = vadd.xlane.f32.xlu0 %v670
      %v672 = vpop.xlane.xlu0 %671
      %v673 = vsel %vm387, %v601, 0.0
      %674 = vadd.xlane.f32.xlu0 %v673
      %v675 = vpop.xlane.xlu0 %674
      %v676 = vsel %vm387, %v602, 0.0
      %677 = vadd.xlane.f32.xlu0 %v676
      %v678 = vpop.xlane.xlu0 %677
      %v679 = vsel %vm387, %v603, 0.0
      %680 = vadd.xlane.f32.xlu0 %v679
      %v681 = vpop.xlane.xlu0 %680
      %v682 = vsel %vm387, %v604, 0.0
      %683 = vadd.xlane.f32.xlu0 %v682
      %v684 = vpop.xlane.xlu0 %683
      %v685 = vsel %vm387, %v605, 0.0
      %686 = vadd.xlane.f32.xlu0 %v685
      %v687 = vpop.xlane.xlu0 %686
      %v688 = vsel %vm387, %v606, 0.0
      %689 = vadd.xlane.f32.xlu0 %v688
      %v690 = vpop.xlane.xlu0 %689
      %v691 = vsel %vm387, %v607, 0.0
      %692 = vadd.xlane.f32.xlu0 %v691
      %v693 = vpop.xlane.xlu0 %692
      %v694 = vsel %vm387, %v608, 0.0
      %695 = vadd.xlane.f32.xlu0 %v694
      %v696 = vpop.xlane.xlu0 %695
      %v697 = vsel %vm387, %v609, 0.0
      %698 = vadd.xlane.f32.xlu0 %v697
      %v699 = vpop.xlane.xlu0 %698
      %v700 = vsel %vm387, %v610, 0.0
      %701 = vadd.xlane.f32.xlu0 %v700
      %v702 = vpop.xlane.xlu0 %701
      %v703 = vsel %vm387, %v611, 0.0
      %704 = vadd.xlane.f32.xlu0 %v703
      %v705 = vpop.xlane.xlu0 %704
      %v706 = vsel %vm387, %v612, 0.0
      %707 = vadd.xlane.f32.xlu0 %v706
      %v708 = vpop.xlane.xlu0 %707
      %v709 = vmul.f32 %v615, %v516
      %v710 = vmul.f32 %v618, %v516
      %v711 = vmul.f32 %v621, %v516
      %v712 = vmul.f32 %v624, %v516
      %v713 = vmul.f32 %v627, %v516
      %v714 = vmul.f32 %v630, %v516
      %v715 = vmul.f32 %v633, %v516
      %v716 = vmul.f32 %v636, %v516
      %v717 = vmul.f32 %v639, %v516
      %v718 = vmul.f32 %v642, %v516
      %v719 = vmul.f32 %v645, %v516
      %v720 = vmul.f32 %v648, %v516
      %v721 = vmul.f32 %v651, %v516
      %v722 = vmul.f32 %v654, %v516
      %v723 = vmul.f32 %v657, %v516
      %v724 = vmul.f32 %v660, %v516
      %v725 = vmul.f32 %v663, %v516
      %v726 = vmul.f32 %v666, %v516
      %v727 = vmul.f32 %v669, %v516
      %v728 = vmul.f32 %v672, %v516
      %v729 = vmul.f32 %v675, %v516
      %v730 = vmul.f32 %v678, %v516
      %v731 = vmul.f32 %v681, %v516
      %v732 = vmul.f32 %v684, %v516
      %v733 = vmul.f32 %v687, %v516
      %v734 = vmul.f32 %v690, %v516
      %v735 = vmul.f32 %v693, %v516
      %v736 = vmul.f32 %v696, %v516
      %v737 = vmul.f32 %v699, %v516
      %v738 = vmul.f32 %v702, %v516
      %v739 = vmul.f32 %v705, %v516
      %v740 = vmul.f32 %v708, %v516
      %v741 = vadd.f32 %v709, 1e-06
      %v742 = vadd.f32 %v710, 1e-06
      %v743 = vadd.f32 %v711, 1e-06
      %v744 = vadd.f32 %v712, 1e-06
      %v745 = vadd.f32 %v713, 1e-06
      %v746 = vadd.f32 %v714, 1e-06
      %v747 = vadd.f32 %v715, 1e-06
      %v748 = vadd.f32 %v716, 1e-06
      %v749 = vadd.f32 %v717, 1e-06
      %v750 = vadd.f32 %v718, 1e-06
      %v751 = vadd.f32 %v719, 1e-06
      %v752 = vadd.f32 %v720, 1e-06
      %v753 = vadd.f32 %v721, 1e-06
      %v754 = vadd.f32 %v722, 1e-06
      %v755 = vadd.f32 %v723, 1e-06
      %v756 = vadd.f32 %v724, 1e-06
      %v757 = vadd.f32 %v725, 1e-06
      %v758 = vadd.f32 %v726, 1e-06
      %v759 = vadd.f32 %v727, 1e-06
      %v760 = vadd.f32 %v728, 1e-06
      %v761 = vadd.f32 %v729, 1e-06
      %v762 = vadd.f32 %v730, 1e-06
      %v763 = vadd.f32 %v731, 1e-06
      %v764 = vadd.f32 %v732, 1e-06
      %v765 = vadd.f32 %v733, 1e-06
      %v766 = vadd.f32 %v734, 1e-06
      %v767 = vadd.f32 %v735, 1e-06
      %v768 = vadd.f32 %v736, 1e-06
      %v769 = vadd.f32 %v737, 1e-06
      %v770 = vadd.f32 %v738, 1e-06
      %v771 = vadd.f32 %v739, 1e-06
      %v772 = vadd.f32 %v740, 1e-06
      %v773 = vrsqrt.pop %v741
      %v774 = vrsqrt.pop %v742
      %v775 = vrsqrt.pop %v743
      %v776 = vrsqrt.pop %v744
      %v777 = vrsqrt.pop %v745
      %v778 = vrsqrt.pop %v746
      %v779 = vrsqrt.pop %v747
      %v780 = vrsqrt.pop %v748
      %v781 = vrsqrt.pop %v749
      %v782 = vrsqrt.pop %v750
      %v783 = vrsqrt.pop %v751
      %v784 = vrsqrt.pop %v752
      %v785 = vrsqrt.pop %v753
      %v786 = vrsqrt.pop %v754
      %v787 = vrsqrt.pop %v755
      %v788 = vrsqrt.pop %v756
      %v789 = vrsqrt.pop %v757
      %v790 = vrsqrt.pop %v758
      %v791 = vrsqrt.pop %v759
      %v792 = vrsqrt.pop %v760
      %v793 = vrsqrt.pop %v761
      %v794 = vrsqrt.pop %v762
      %v795 = vrsqrt.pop %v763
      %v796 = vrsqrt.pop %v764
      %v797 = vrsqrt.pop %v765
      %v798 = vrsqrt.pop %v766
      %v799 = vrsqrt.pop %v767
      %v800 = vrsqrt.pop %v768
      %v801 = vrsqrt.pop %v769
      %v802 = vrsqrt.pop %v770
      %v803 = vrsqrt.pop %v771
      %v804 = vrsqrt.pop %v772
      %v805 = vmul.f32 %v549, %v773
      %v806 = vmul.f32 %v550, %v774
      %v807 = vmul.f32 %v551, %v775
      %v808 = vmul.f32 %v552, %v776
      %v809 = vmul.f32 %v553, %v777
      %v810 = vmul.f32 %v554, %v778
      %v811 = vmul.f32 %v555, %v779
      %v812 = vmul.f32 %v556, %v780
      %v813 = vmul.f32 %v557, %v781
      %v814 = vmul.f32 %v558, %v782
      %v815 = vmul.f32 %v559, %v783
      %v816 = vmul.f32 %v560, %v784
      %v817 = vmul.f32 %v561, %v785
      %v818 = vmul.f32 %v562, %v786
      %v819 = vmul.f32 %v563, %v787
      %v820 = vmul.f32 %v564, %v788
      %v821 = vmul.f32 %v565, %v789
      %v822 = vmul.f32 %v566, %v790
      %v823 = vmul.f32 %v567, %v791
      %v824 = vmul.f32 %v568, %v792
      %v825 = vmul.f32 %v569, %v793
      %v826 = vmul.f32 %v570, %v794
      %v827 = vmul.f32 %v571, %v795
      %v828 = vmul.f32 %v572, %v796
      %v829 = vmul.f32 %v573, %v797
      %v830 = vmul.f32 %v574, %v798
      %v831 = vmul.f32 %v575, %v799
      %v832 = vmul.f32 %v576, %v800
      %v833 = vmul.f32 %v577, %v801
      %v834 = vmul.f32 %v578, %v802
      %v835 = vmul.f32 %v579, %v803
      %v836 = vmul.f32 %v580, %v804
      %v837 = vld [vmem:[%s2] sm:$0x1]
      %v839 = vlaneseq
      %v840 = vshrl.u32 %v839, 7
      %v841 = vsub.s32 0, %v840
      %v842 = vrot.slane %v837, %v841
      %v844 = vmul.f32 %v805, %v842
      %v845 = vmul.f32 %v806, %v842
      %v846 = vmul.f32 %v807, %v842
      %v847 = vmul.f32 %v808, %v842
      %v848 = vmul.f32 %v809, %v842
      %v849 = vmul.f32 %v810, %v842
      %v850 = vmul.f32 %v811, %v842
      %v851 = vmul.f32 %v812, %v842
      %v852 = vmul.f32 %v813, %v842
      %v853 = vmul.f32 %v814, %v842
      %v854 = vmul.f32 %v815, %v842
      %v855 = vmul.f32 %v816, %v842
      %v856 = vmul.f32 %v817, %v842
      %v857 = vmul.f32 %v818, %v842
      %v858 = vmul.f32 %v819, %v842
      %v859 = vmul.f32 %v820, %v842
      %v860 = vmul.f32 %v821, %v842
      %v861 = vmul.f32 %v822, %v842
      %v862 = vmul.f32 %v823, %v842
      %v863 = vmul.f32 %v824, %v842
      %v864 = vmul.f32 %v825, %v842
      %v865 = vmul.f32 %v826, %v842
      %v866 = vmul.f32 %v827, %v842
      %v867 = vmul.f32 %v828, %v842
      %v868 = vmul.f32 %v829, %v842
      %v869 = vmul.f32 %v830, %v842
      %v870 = vmul.f32 %v831, %v842
      %v871 = vmul.f32 %v832, %v842
      %v872 = vmul.f32 %v833, %v842
      %v873 = vmul.f32 %v834, %v842
      %v874 = vmul.f32 %v835, %v842
      %v875 = vmul.f32 %v836, %v842
      %v876 = vld [vmem:[%s3] sm:$0x1]
      %v878 = vlaneseq
      %v879 = vshrl.u32 %v878, 7
      %v880 = vsub.s32 0, %v879
      %v881 = vrot.slane %v876, %v880
      %v883 = vadd.f32 %v844, %v881
      %v884 = vadd.f32 %v845, %v881
      %v885 = vadd.f32 %v846, %v881
      %v886 = vadd.f32 %v847, %v881
      %v887 = vadd.f32 %v848, %v881
      %v888 = vadd.f32 %v849, %v881
      %v889 = vadd.f32 %v850, %v881
      %v890 = vadd.f32 %v851, %v881
      %v891 = vadd.f32 %v852, %v881
      %v892 = vadd.f32 %v853, %v881
      %v893 = vadd.f32 %v854, %v881
      %v894 = vadd.f32 %v855, %v881
      %v895 = vadd.f32 %v856, %v881
      %v896 = vadd.f32 %v857, %v881
      %v897 = vadd.f32 %v858, %v881
      %v898 = vadd.f32 %v859, %v881
      %v899 = vadd.f32 %v860, %v881
      %v900 = vadd.f32 %v861, %v881
      %v901 = vadd.f32 %v862, %v881
      %v902 = vadd.f32 %v863, %v881
      %v903 = vadd.f32 %v864, %v881
      %v904 = vadd.f32 %v865, %v881
      %v905 = vadd.f32 %v866, %v881
      %v906 = vadd.f32 %v867, %v881
      %v907 = vadd.f32 %v868, %v881
      %v908 = vadd.f32 %v869, %v881
      %v909 = vadd.f32 %v870, %v881
      %v910 = vadd.f32 %v871, %v881
      %v911 = vadd.f32 %v872, %v881
      %v912 = vadd.f32 %v873, %v881
      %v913 = vadd.f32 %v874, %v881
      %v914 = vadd.f32 %v875, %v881
      %v915 = vld [vmem:[%s4] sm:$0xf]
      %v917 = vsel %vm387, %v883, 0
      %v920 = vsel %vm387, %v884, 0
      %v923 = vsel %vm387, %v885, 0
      %v926 = vsel %vm387, %v886, 0
      %v929 = vsel %vm387, %v887, 0
      %v932 = vsel %vm387, %v888, 0
      %v935 = vsel %vm387, %v889, 0
      %v938 = vsel %vm387, %v890, 0
      %v941 = vsel %vm387, %v891, 0
      %v944 = vsel %vm387, %v892, 0
      %v947 = vsel %vm387, %v893, 0
      %v950 = vsel %vm387, %v894, 0
      %v953 = vsel %vm387, %v895, 0
      %v956 = vsel %vm387, %v896, 0
      %v959 = vsel %vm387, %v897, 0
      %v962 = vsel %vm387, %v898, 0
      %v965 = vsel %vm387, %v899, 0
      %v968 = vsel %vm387, %v900, 0
      %v971 = vsel %vm387, %v901, 0
      %v974 = vsel %vm387, %v902, 0
      %v977 = vsel %vm387, %v903, 0
      %v980 = vsel %vm387, %v904, 0
      %v983 = vsel %vm387, %v905, 0
      %v986 = vsel %vm387, %v906, 0
      %v989 = vsel %vm387, %v907, 0
      %v992 = vsel %vm387, %v908, 0
      %v995 = vsel %vm387, %v909, 0
      %v998 = vsel %vm387, %v910, 0
      %v1001 = vsel %vm387, %v911, 0
      %v1004 = vsel %vm387, %v912, 0
      %v1007 = vsel %vm387, %v913, 0
      %v1010 = vsel %vm387, %v914, 0
      %vm1012 = vcmask 1043456
      %v1014 = vsel %vm1012, %v915, 0
      %1016 = vmatprep.subr.mxu0 0.0
      %1017 = vmatpush1.msra.mxu0 %v1014
      %1018 = vmatprep.subr.mxu0 0.0
      %1019 = vmatpush1.msra.mxu0 0.0
      %1020 = vmatprep.subr.mxu0 0.0
      %1021 = vmatpush1.msra.mxu0 0.0
      %1022 = vmatprep.subr.mxu0 0.0
      %1023 = vmatpush1.msra.mxu0 0.0
      %1024 = vmatprep.subr.mxu0 0.0
      %1025 = vmatpush1.msra.mxu0 0.0
      %1026 = vmatprep.subr.mxu0 0.0
      %1027 = vmatpush1.msra.mxu0 0.0
      %1028 = vmatprep.subr.mxu0 0.0
      %1029 = vmatpush1.msra.mxu0 0.0
      %1030 = vmatprep.subr.mxu0 0.0
      %1031 = vmatpush1.msra.mxu0 0.0
      %1032 = vmatprep.subr.mxu0 0.0
      %1033 = vmatpush1.msra.mxu0 0.0
      %1034 = vmatprep.subr.mxu0 0.0
      %1035 = vmatpush1.msra.mxu0 0.0
      %1036 = vmatprep.subr.mxu0 0.0
      %1037 = vmatpush1.msra.mxu0 0.0
      %1038 = vmatprep.subr.mxu0 0.0
      %1039 = vmatpush1.msra.mxu0 0.0
      %1040 = vmatprep.subr.mxu0 0.0
      %1041 = vmatpush1.msra.mxu0 0.0
      %1042 = vmatprep.subr.mxu0 0.0
      %1043 = vmatpush1.msra.mxu0 0.0
      %1044 = vmatprep.subr.mxu0 0.0
      %1045 = vmatpush1.msra.mxu0 0.0
      %1046 = vmatprep.subr.mxu0 0.0
      %1047 = vmatpush1.msra.mxu0 0.0
      %1048 = vmatprep.subr.mxu0 0.0
      %1049 = vmatpush1.msra.mxu0 0.0
      %1050 = vmatprep.subr.mxu0 0.0
      %1051 = vmatpush1.msra.mxu0 0.0
      %1052 = vmatprep.subr.mxu0 0.0
      %1053 = vmatpush1.msra.mxu0 0.0
      %1054 = vmatprep.subr.mxu0 0.0
      %1055 = vmatpush1.msra.mxu0 0.0
      %1056 = vmatprep.subr.mxu0 0.0
      %1057 = vmatpush1.msra.mxu0 0.0
      %1058 = vmatprep.subr.mxu0 0.0
      %1059 = vmatpush1.msra.mxu0 0.0
      %1060 = vmatprep.subr.mxu0 0.0
      %1061 = vmatpush1.msra.mxu0 0.0
      %1062 = vmatprep.subr.mxu0 0.0
      %1063 = vmatpush1.msra.mxu0 0.0
      %1064 = vmatprep.subr.mxu0 0.0
      %1065 = vmatpush1.msra.mxu0 0.0
      %1066 = vmatprep.subr.mxu0 0.0
      %1067 = vmatpush1.msra.mxu0 0.0
      %1068 = vmatprep.subr.mxu0 0.0
      %1069 = vmatpush1.msra.mxu0 0.0
      %1070 = vmatprep.subr.mxu0 0.0
      %1071 = vmatpush1.msra.mxu0 0.0
      %1072 = vmatprep.subr.mxu0 0.0
      %1073 = vmatpush1.msra.mxu0 0.0
      %1074 = vmatprep.subr.mxu0 0.0
      %1075 = vmatpush1.msra.mxu0 0.0
      %1076 = vmatprep.subr.mxu0 0.0
      %1077 = vmatpush1.msra.mxu0 0.0
      %1078 = vmatprep.subr.mxu0 0.0
      %1079 = vmatpush1.msra.mxu0 0.0
      %1080 = vmatprep.mubr.f32.mxu0 0.0
      %1081 = vmatmul.mubr.f32.gmra.mrb[0].mxu0 %v917
      %v1082 = vpop.f32.mrb[0].mxu0
      %v1083 = vadd.f32 0.0, %v1082
      %v1084 = vpop.f32.mrb[0].mxu0
      %1085 = vmatprep.mubr.f32.mxu0 0.0
      %1086 = vmatmul.mubr.f32.gmra.mrb[0].mxu0 %v920
      %v1087 = vpop.f32.mrb[0].mxu0
      %v1088 = vadd.f32 0.0, %v1087
      %v1089 = vpop.f32.mrb[0].mxu0
      %1090 = vmatprep.mubr.f32.mxu0 0.0
      %1091 = vmatmul.mubr.f32.gmra.mrb[0].mxu0 %v923
      %v1092 = vpop.f32.mrb[0].mxu0
      %v1093 = vadd.f32 0.0, %v1092
      %v1094 = vpop.f32.mrb[0].mxu0
      %1095 = vmatprep.mubr.f32.mxu0 0.0
      %1096 = vmatmul.mubr.f32.gmra.mrb[0].mxu0 %v926
      %v1097 = vpop.f32.mrb[0].mxu0
      %v1098 = vadd.f32 0.0, %v1097
      %v1099 = vpop.f32.mrb[0].mxu0
      %1100 = vmatprep.mubr.f32.mxu0 0.0
      %1101 = vmatmul.mubr.f32.gmra.mrb[0].mxu0 %v929
      %v1102 = vpop.f32.mrb[0].mxu0
      %v1103 = vadd.f32 0.0, %v1102
      %v1104 = vpop.f32.mrb[0].mxu0
      %1105 = vmatprep.mubr.f32.mxu0 0.0
      %1106 = vmatmul.mubr.f32.gmra.mrb[0].mxu0 %v932
      %v1107 = vpop.f32.mrb[0].mxu0
      %v1108 = vadd.f32 0.0, %v1107
      %v1109 = vpop.f32.mrb[0].mxu0
      %1110 = vmatprep.mubr.f32.mxu0 0.0
      %1111 = vmatmul.mubr.f32.gmra.mrb[0].mxu0 %v935
      %v1112 = vpop.f32.mrb[0].mxu0
      %v1113 = vadd.f32 0.0, %v1112
      %v1114 = vpop.f32.mrb[0].mxu0
      %1115 = vmatprep.mubr.f32.mxu0 0.0
      %1116 = vmatmul.mubr.f32.gmra.mrb[0].mxu0 %v938
      %v1117 = vpop.f32.mrb[0].mxu0
      %v1118 = vadd.f32 0.0, %v1117
      %v1119 = vpop.f32.mrb[0].mxu0
      %1120 = vmatprep.mubr.f32.mxu0 0.0
      %1121 = vmatmul.mubr.f32.gmra.mrb[0].mxu0 %v941
      %v1122 = vpop.f32.mrb[0].mxu0
      %v1123 = vadd.f32 0.0, %v1122
      %v1124 = vpop.f32.mrb[0].mxu0
      %1125 = vmatprep.mubr.f32.mxu0 0.0
      %1126 = vmatmul.mubr.f32.gmra.mrb[0].mxu0 %v944
      %v1127 = vpop.f32.mrb[0].mxu0
      %v1128 = vadd.f32 0.0, %v1127
      %v1129 = vpop.f32.mrb[0].mxu0
      %1130 = vmatprep.mubr.f32.mxu0 0.0
      %1131 = vmatmul.mubr.f32.gmra.mrb[0].mxu0 %v947
      %v1132 = vpop.f32.mrb[0].mxu0
      %v1133 = vadd.f32 0.0, %v1132
      %v1134 = vpop.f32.mrb[0].mxu0
      %1135 = vmatprep.mubr.f32.mxu0 0.0
      %1136 = vmatmul.mubr.f32.gmra.mrb[0].mxu0 %v950
      %v1137 = vpop.f32.mrb[0].mxu0
      %v1138 = vadd.f32 0.0, %v1137
      %v1139 = vpop.f32.mrb[0].mxu0
      %1140 = vmatprep.mubr.f32.mxu0 0.0
      %1141 = vmatmul.mubr.f32.gmra.mrb[0].mxu0 %v953
      %v1142 = vpop.f32.mrb[0].mxu0
      %v1143 = vadd.f32 0.0, %v1142
      %v1144 = vpop.f32.mrb[0].mxu0
      %1145 = vmatprep.mubr.f32.mxu0 0.0
      %1146 = vmatmul.mubr.f32.gmra.mrb[0].mxu0 %v956
      %v1147 = vpop.f32.mrb[0].mxu0
      %v1148 = vadd.f32 0.0, %v1147
      %v1149 = vpop.f32.mrb[0].mxu0
      %1150 = vmatprep.mubr.f32.mxu0 0.0
      %1151 = vmatmul.mubr.f32.gmra.mrb[0].mxu0 %v959
      %v1152 = vpop.f32.mrb[0].mxu0
      %v1153 = vadd.f32 0.0, %v1152
      %v1154 = vpop.f32.mrb[0].mxu0
      %1155 = vmatprep.mubr.f32.mxu0 0.0
      %1156 = vmatmul.mubr.f32.gmra.mrb[0].mxu0 %v962
      %v1157 = vpop.f32.mrb[0].mxu0
      %v1158 = vadd.f32 0.0, %v1157
      %v1159 = vpop.f32.mrb[0].mxu0
      %1160 = vmatprep.mubr.f32.mxu0 0.0
      %1161 = vmatmul.mubr.f32.gmra.mrb[0].mxu0 %v965
      %v1162 = vpop.f32.mrb[0].mxu0
      %v1163 = vadd.f32 0.0, %v1162
      %v1164 = vpop.f32.mrb[0].mxu0
      %1165 = vmatprep.mubr.f32.mxu0 0.0
      %1166 = vmatmul.mubr.f32.gmra.mrb[0].mxu0 %v968
      %v1167 = vpop.f32.mrb[0].mxu0
      %v1168 = vadd.f32 0.0, %v1167
      %v1169 = vpop.f32.mrb[0].mxu0
      %1170 = vmatprep.mubr.f32.mxu0 0.0
      %1171 = vmatmul.mubr.f32.gmra.mrb[0].mxu0 %v971
      %v1172 = vpop.f32.mrb[0].mxu0
      %v1173 = vadd.f32 0.0, %v1172
      %v1174 = vpop.f32.mrb[0].mxu0
      %1175 = vmatprep.mubr.f32.mxu0 0.0
      %1176 = vmatmul.mubr.f32.gmra.mrb[0].mxu0 %v974
      %v1177 = vpop.f32.mrb[0].mxu0
      %v1178 = vadd.f32 0.0, %v1177
      %v1179 = vpop.f32.mrb[0].mxu0
      %1180 = vmatprep.mubr.f32.mxu0 0.0
      %1181 = vmatmul.mubr.f32.gmra.mrb[0].mxu0 %v977
      %v1182 = vpop.f32.mrb[0].mxu0
      %v1183 = vadd.f32 0.0, %v1182
      %v1184 = vpop.f32.mrb[0].mxu0
      %1185 = vmatprep.mubr.f32.mxu0 0.0
      %1186 = vmatmul.mubr.f32.gmra.mrb[0].mxu0 %v980
      %v1187 = vpop.f32.mrb[0].mxu0
      %v1188 = vadd.f32 0.0, %v1187
      %v1189 = vpop.f32.mrb[0].mxu0
      %1190 = vmatprep.mubr.f32.mxu0 0.0
      %1191 = vmatmul.mubr.f32.gmra.mrb[0].mxu0 %v983
      %v1192 = vpop.f32.mrb[0].mxu0
      %v1193 = vadd.f32 0.0, %v1192
      %v1194 = vpop.f32.mrb[0].mxu0
      %1195 = vmatprep.mubr.f32.mxu0 0.0
      %1196 = vmatmul.mubr.f32.gmra.mrb[0].mxu0 %v986
      %v1197 = vpop.f32.mrb[0].mxu0
      %v1198 = vadd.f32 0.0, %v1197
      %v1199 = vpop.f32.mrb[0].mxu0
      %1200 = vmatprep.mubr.f32.mxu0 0.0
      %1201 = vmatmul.mubr.f32.gmra.mrb[0].mxu0 %v989
      %v1202 = vpop.f32.mrb[0].mxu0
      %v1203 = vadd.f32 0.0, %v1202
      %v1204 = vpop.f32.mrb[0].mxu0
      %1205 = vmatprep.mubr.f32.mxu0 0.0
      %1206 = vmatmul.mubr.f32.gmra.mrb[0].mxu0 %v992
      %v1207 = vpop.f32.mrb[0].mxu0
      %v1208 = vadd.f32 0.0, %v1207
      %v1209 = vpop.f32.mrb[0].mxu0
      %1210 = vmatprep.mubr.f32.mxu0 0.0
      %1211 = vmatmul.mubr.f32.gmra.mrb[0].mxu0 %v995
      %v1212 = vpop.f32.mrb[0].mxu0
      %v1213 = vadd.f32 0.0, %v1212
      %v1214 = vpop.f32.mrb[0].mxu0
      %1215 = vmatprep.mubr.f32.mxu0 0.0
      %1216 = vmatmul.mubr.f32.gmra.mrb[0].mxu0 %v998
      %v1217 = vpop.f32.mrb[0].mxu0
      %v1218 = vadd.f32 0.0, %v1217
      %v1219 = vpop.f32.mrb[0].mxu0
      %1220 = vmatprep.mubr.f32.mxu0 0.0
      %1221 = vmatmul.mubr.f32.gmra.mrb[0].mxu0 %v1001
      %v1222 = vpop.f32.mrb[0].mxu0
      %v1223 = vadd.f32 0.0, %v1222
      %v1224 = vpop.f32.mrb[0].mxu0
      %1225 = vmatprep.mubr.f32.mxu0 0.0
      %1226 = vmatmul.mubr.f32.gmra.mrb[0].mxu0 %v1004
      %v1227 = vpop.f32.mrb[0].mxu0
      %v1228 = vadd.f32 0.0, %v1227
      %v1229 = vpop.f32.mrb[0].mxu0
      %1230 = vmatprep.mubr.f32.mxu0 0.0
      %1231 = vmatmul.mubr.f32.gmra.mrb[0].mxu0 %v1007
      %v1232 = vpop.f32.mrb[0].mxu0
      %v1233 = vadd.f32 0.0, %v1232
      %v1234 = vpop.f32.mrb[0].mxu0
      %1235 = vmatprep.mubr.f32.mxu0 0.0
      %1236 = vmatmul.mubr.f32.gmra.mrb[0].mxu0 %v1010
      %v1237 = vpop.f32.mrb[0].mxu0
      %v1238 = vadd.f32 0.0, %v1237
      %v1239 = vpop.f32.mrb[0].mxu0
      %1240 = vdwg.mxu0
      %v1241 = vmul.f32 %v1083, 0.5
      %v1242 = vmul.f32 %v1088, 0.5
      %v1243 = vmul.f32 %v1093, 0.5
      %v1244 = vmul.f32 %v1098, 0.5
      %v1245 = vmul.f32 %v1103, 0.5
      %v1246 = vmul.f32 %v1108, 0.5
      %v1247 = vmul.f32 %v1113, 0.5
      %v1248 = vmul.f32 %v1118, 0.5
      %v1249 = vmul.f32 %v1123, 0.5
      %v1250 = vmul.f32 %v1128, 0.5
      %v1251 = vmul.f32 %v1133, 0.5
      %v1252 = vmul.f32 %v1138, 0.5
      %v1253 = vmul.f32 %v1143, 0.5
      %v1254 = vmul.f32 %v1148, 0.5
      %v1255 = vmul.f32 %v1153, 0.5
      %v1256 = vmul.f32 %v1158, 0.5
      %v1257 = vmul.f32 %v1163, 0.5
      %v1258 = vmul.f32 %v1168, 0.5
      %v1259 = vmul.f32 %v1173, 0.5
      %v1260 = vmul.f32 %v1178, 0.5
      %v1261 = vmul.f32 %v1183, 0.5
      %v1262 = vmul.f32 %v1188, 0.5
      %v1263 = vmul.f32 %v1193, 0.5
      %v1264 = vmul.f32 %v1198, 0.5
      %v1265 = vmul.f32 %v1203, 0.5
      %v1266 = vmul.f32 %v1208, 0.5
      %v1267 = vmul.f32 %v1213, 0.5
      %v1268 = vmul.f32 %v1218, 0.5
      %v1269 = vmul.f32 %v1223, 0.5
      %v1270 = vmul.f32 %v1228, 0.5
      %v1271 = vmul.f32 %v1233, 0.5
      %v1272 = vmul.f32 %v1238, 0.5
      %v1273 = vmul.f32 %v1083, 0.044715
      %v1274 = vmul.f32 %v1088, 0.044715
      %v1275 = vmul.f32 %v1093, 0.044715
      %v1276 = vmul.f32 %v1098, 0.044715
      %v1277 = vmul.f32 %v1103, 0.044715
      %v1278 = vmul.f32 %v1108, 0.044715
      %v1279 = vmul.f32 %v1113, 0.044715
      %v1280 = vmul.f32 %v1118, 0.044715
      %v1281 = vmul.f32 %v1123, 0.044715
      %v1282 = vmul.f32 %v1128, 0.044715
      %v1283 = vmul.f32 %v1133, 0.044715
      %v1284 = vmul.f32 %v1138, 0.044715
      %v1285 = vmul.f32 %v1143, 0.044715
      %v1286 = vmul.f32 %v1148, 0.044715
      %v1287 = vmul.f32 %v1153, 0.044715
      %v1288 = vmul.f32 %v1158, 0.044715
      %v1289 = vmul.f32 %v1163, 0.044715
      %v1290 = vmul.f32 %v1168, 0.044715
      %v1291 = vmul.f32 %v1173, 0.044715
      %v1292 = vmul.f32 %v1178, 0.044715
      %v1293 = vmul.f32 %v1183, 0.044715
      %v1294 = vmul.f32 %v1188, 0.044715
      %v1295 = vmul.f32 %v1193, 0.044715
      %v1296 = vmul.f32 %v1198, 0.044715
      %v1297 = vmul.f32 %v1203, 0.044715
      %v1298 = vmul.f32 %v1208, 0.044715
      %v1299 = vmul.f32 %v1213, 0.044715
      %v1300 = vmul.f32 %v1218, 0.044715
      %v1301 = vmul.f32 %v1223, 0.044715
      %v1302 = vmul.f32 %v1228, 0.044715
      %v1303 = vmul.f32 %v1233, 0.044715
      %v1304 = vmul.f32 %v1238, 0.044715
      %v1305 = vmul.f32 %v1273, %v1083
      %v1306 = vmul.f32 %v1274, %v1088
      %v1307 = vmul.f32 %v1275, %v1093
      %v1308 = vmul.f32 %v1276, %v1098
      %v1309 = vmul.f32 %v1277, %v1103
      %v1310 = vmul.f32 %v1278, %v1108
      %v1311 = vmul.f32 %v1279, %v1113
      %v1312 = vmul.f32 %v1280, %v1118
      %v1313 = vmul.f32 %v1281, %v1123
      %v1314 = vmul.f32 %v1282, %v1128
      %v1315 = vmul.f32 %v1283, %v1133
      %v1316 = vmul.f32 %v1284, %v1138
      %v1317 = vmul.f32 %v1285, %v1143
      %v1318 = vmul.f32 %v1286, %v1148
      %v1319 = vmul.f32 %v1287, %v1153
      %v1320 = vmul.f32 %v1288, %v1158
      %v1321 = vmul.f32 %v1289, %v1163
      %v1322 = vmul.f32 %v1290, %v1168
      %v1323 = vmul.f32 %v1291, %v1173
      %v1324 = vmul.f32 %v1292, %v1178
      %v1325 = vmul.f32 %v1293, %v1183
      %v1326 = vmul.f32 %v1294, %v1188
      %v1327 = vmul.f32 %v1295, %v1193
      %v1328 = vmul.f32 %v1296, %v1198
      %v1329 = vmul.f32 %v1297, %v1203
      %v1330 = vmul.f32 %v1298, %v1208
      %v1331 = vmul.f32 %v1299, %v1213
      %v1332 = vmul.f32 %v1300, %v1218
      %v1333 = vmul.f32 %v1301, %v1223
      %v1334 = vmul.f32 %v1302, %v1228
      %v1335 = vmul.f32 %v1303, %v1233
      %v1336 = vmul.f32 %v1304, %v1238
      %v1337 = vmul.f32 %v1305, %v1083
      %v1338 = vmul.f32 %v1306, %v1088
      %v1339 = vmul.f32 %v1307, %v1093
      %v1340 = vmul.f32 %v1308, %v1098
      %v1341 = vmul.f32 %v1309, %v1103
      %v1342 = vmul.f32 %v1310, %v1108
      %v1343 = vmul.f32 %v1311, %v1113
      %v1344 = vmul.f32 %v1312, %v1118
      %v1345 = vmul.f32 %v1313, %v1123
      %v1346 = vmul.f32 %v1314, %v1128
      %v1347 = vmul.f32 %v1315, %v1133
      %v1348 = vmul.f32 %v1316, %v1138
      %v1349 = vmul.f32 %v1317, %v1143
      %v1350 = vmul.f32 %v1318, %v1148
      %v1351 = vmul.f32 %v1319, %v1153
      %v1352 = vmul.f32 %v1320, %v1158
      %v1353 = vmul.f32 %v1321, %v1163
      %v1354 = vmul.f32 %v1322, %v1168
      %v1355 = vmul.f32 %v1323, %v1173
      %v1356 = vmul.f32 %v1324, %v1178
      %v1357 = vmul.f32 %v1325, %v1183
      %v1358 = vmul.f32 %v1326, %v1188
      %v1359 = vmul.f32 %v1327, %v1193
      %v1360 = vmul.f32 %v1328, %v1198
      %v1361 = vmul.f32 %v1329, %v1203
      %v1362 = vmul.f32 %v1330, %v1208
      %v1363 = vmul.f32 %v1331, %v1213
      %v1364 = vmul.f32 %v1332, %v1218
      %v1365 = vmul.f32 %v1333, %v1223
      %v1366 = vmul.f32 %v1334, %v1228
      %v1367 = vmul.f32 %v1335, %v1233
      %v1368 = vmul.f32 %v1336, %v1238
      %v1369 = vadd.f32 %v1083, %v1337
      %v1370 = vadd.f32 %v1088, %v1338
      %v1371 = vadd.f32 %v1093, %v1339
      %v1372 = vadd.f32 %v1098, %v1340
      %v1373 = vadd.f32 %v1103, %v1341
      %v1374 = vadd.f32 %v1108, %v1342
      %v1375 = vadd.f32 %v1113, %v1343
      %v1376 = vadd.f32 %v1118, %v1344
      %v1377 = vadd.f32 %v1123, %v1345
      %v1378 = vadd.f32 %v1128, %v1346
      %v1379 = vadd.f32 %v1133, %v1347
      %v1380 = vadd.f32 %v1138, %v1348
      %v1381 = vadd.f32 %v1143, %v1349
      %v1382 = vadd.f32 %v1148, %v1350
      %v1383 = vadd.f32 %v1153, %v1351
      %v1384 = vadd.f32 %v1158, %v1352
      %v1385 = vadd.f32 %v1163, %v1353
      %v1386 = vadd.f32 %v1168, %v1354
      %v1387 = vadd.f32 %v1173, %v1355
      %v1388 = vadd.f32 %v1178, %v1356
      %v1389 = vadd.f32 %v1183, %v1357
      %v1390 = vadd.f32 %v1188, %v1358
      %v1391 = vadd.f32 %v1193, %v1359
      %v1392 = vadd.f32 %v1198, %v1360
      %v1393 = vadd.f32 %v1203, %v1361
      %v1394 = vadd.f32 %v1208, %v1362
      %v1395 = vadd.f32 %v1213, %v1363
      %v1396 = vadd.f32 %v1218, %v1364
      %v1397 = vadd.f32 %v1223, %v1365
      %v1398 = vadd.f32 %v1228, %v1366
      %v1399 = vadd.f32 %v1233, %v1367
      %v1400 = vadd.f32 %v1238, %v1368
      %v1401 = vmul.f32 %v1369, 0.7978846
      %v1402 = vmul.f32 %v1370, 0.7978846
      %v1403 = vmul.f32 %v1371, 0.7978846
      %v1404 = vmul.f32 %v1372, 0.7978846
      %v1405 = vmul.f32 %v1373, 0.7978846
      %v1406 = vmul.f32 %v1374, 0.7978846
      %v1407 = vmul.f32 %v1375, 0.7978846
      %v1408 = vmul.f32 %v1376, 0.7978846
      %v1409 = vmul.f32 %v1377, 0.7978846
      %v1410 = vmul.f32 %v1378, 0.7978846
      %v1411 = vmul.f32 %v1379, 0.7978846
      %v1412 = vmul.f32 %v1380, 0.7978846
      %v1413 = vmul.f32 %v1381, 0.7978846
      %v1414 = vmul.f32 %v1382, 0.7978846
      %v1415 = vmul.f32 %v1383, 0.7978846
      %v1416 = vmul.f32 %v1384, 0.7978846
      %v1417 = vmul.f32 %v1385, 0.7978846
      %v1418 = vmul.f32 %v1386, 0.7978846
      %v1419 = vmul.f32 %v1387, 0.7978846
      %v1420 = vmul.f32 %v1388, 0.7978846
      %v1421 = vmul.f32 %v1389, 0.7978846
      %v1422 = vmul.f32 %v1390, 0.7978846
      %v1423 = vmul.f32 %v1391, 0.7978846
      %v1424 = vmul.f32 %v1392, 0.7978846
      %v1425 = vmul.f32 %v1393, 0.7978846
      %v1426 = vmul.f32 %v1394, 0.7978846
      %v1427 = vmul.f32 %v1395, 0.7978846
      %v1428 = vmul.f32 %v1396, 0.7978846
      %v1429 = vmul.f32 %v1397, 0.7978846
      %v1430 = vmul.f32 %v1398, 0.7978846
      %v1431 = vmul.f32 %v1399, 0.7978846
      %v1432 = vmul.f32 %v1400, 0.7978846
      %v1433 = vtanh.pop %v1401
      %v1434 = vtanh.pop %v1402
      %v1435 = vtanh.pop %v1403
      %v1436 = vtanh.pop %v1404
      %v1437 = vtanh.pop %v1405
      %v1438 = vtanh.pop %v1406
      %v1439 = vtanh.pop %v1407
      %v1440 = vtanh.pop %v1408
      %v1441 = vtanh.pop %v1409
      %v1442 = vtanh.pop %v1410
      %v1443 = vtanh.pop %v1411
      %v1444 = vtanh.pop %v1412
      %v1445 = vtanh.pop %v1413
      %v1446 = vtanh.pop %v1414
      %v1447 = vtanh.pop %v1415
      %v1448 = vtanh.pop %v1416
      %v1449 = vtanh.pop %v1417
      %v1450 = vtanh.pop %v1418
      %v1451 = vtanh.pop %v1419
      %v1452 = vtanh.pop %v1420
      %v1453 = vtanh.pop %v1421
      %v1454 = vtanh.pop %v1422
      %v1455 = vtanh.pop %v1423
      %v1456 = vtanh.pop %v1424
      %v1457 = vtanh.pop %v1425
      %v1458 = vtanh.pop %v1426
      %v1459 = vtanh.pop %v1427
      %v1460 = vtanh.pop %v1428
      %v1461 = vtanh.pop %v1429
      %v1462 = vtanh.pop %v1430
      %v1463 = vtanh.pop %v1431
      %v1464 = vtanh.pop %v1432
      %v1465 = vadd.f32 %v1433, 1.0
      %v1466 = vadd.f32 %v1434, 1.0
      %v1467 = vadd.f32 %v1435, 1.0
      %v1468 = vadd.f32 %v1436, 1.0
      %v1469 = vadd.f32 %v1437, 1.0
      %v1470 = vadd.f32 %v1438, 1.0
      %v1471 = vadd.f32 %v1439, 1.0
      %v1472 = vadd.f32 %v1440, 1.0
      %v1473 = vadd.f32 %v1441, 1.0
      %v1474 = vadd.f32 %v1442, 1.0
      %v1475 = vadd.f32 %v1443, 1.0
      %v1476 = vadd.f32 %v1444, 1.0
      %v1477 = vadd.f32 %v1445, 1.0
      %v1478 = vadd.f32 %v1446, 1.0
      %v1479 = vadd.f32 %v1447, 1.0
      %v1480 = vadd.f32 %v1448, 1.0
      %v1481 = vadd.f32 %v1449, 1.0
      %v1482 = vadd.f32 %v1450, 1.0
      %v1483 = vadd.f32 %v1451, 1.0
      %v1484 = vadd.f32 %v1452, 1.0
      %v1485 = vadd.f32 %v1453, 1.0
      %v1486 = vadd.f32 %v1454, 1.0
      %v1487 = vadd.f32 %v1455, 1.0
      %v1488 = vadd.f32 %v1456, 1.0
      %v1489 = vadd.f32 %v1457, 1.0
      %v1490 = vadd.f32 %v1458, 1.0
      %v1491 = vadd.f32 %v1459, 1.0
      %v1492 = vadd.f32 %v1460, 1.0
      %v1493 = vadd.f32 %v1461, 1.0
      %v1494 = vadd.f32 %v1462, 1.0
      %v1495 = vadd.f32 %v1463, 1.0
      %v1496 = vadd.f32 %v1464, 1.0
      %v1497 = vmul.f32 %v1241, %v1465
      %v1498 = vmul.f32 %v1242, %v1466
      %v1499 = vmul.f32 %v1243, %v1467
      %v1500 = vmul.f32 %v1244, %v1468
      %v1501 = vmul.f32 %v1245, %v1469
      %v1502 = vmul.f32 %v1246, %v1470
      %v1503 = vmul.f32 %v1247, %v1471
      %v1504 = vmul.f32 %v1248, %v1472
      %v1505 = vmul.f32 %v1249, %v1473
      %v1506 = vmul.f32 %v1250, %v1474
      %v1507 = vmul.f32 %v1251, %v1475
      %v1508 = vmul.f32 %v1252, %v1476
      %v1509 = vmul.f32 %v1253, %v1477
      %v1510 = vmul.f32 %v1254, %v1478
      %v1511 = vmul.f32 %v1255, %v1479
      %v1512 = vmul.f32 %v1256, %v1480
      %v1513 = vmul.f32 %v1257, %v1481
      %v1514 = vmul.f32 %v1258, %v1482
      %v1515 = vmul.f32 %v1259, %v1483
      %v1516 = vmul.f32 %v1260, %v1484
      %v1517 = vmul.f32 %v1261, %v1485
      %v1518 = vmul.f32 %v1262, %v1486
      %v1519 = vmul.f32 %v1263, %v1487
      %v1520 = vmul.f32 %v1264, %v1488
      %v1521 = vmul.f32 %v1265, %v1489
      %v1522 = vmul.f32 %v1266, %v1490
      %v1523 = vmul.f32 %v1267, %v1491
      %v1524 = vmul.f32 %v1268, %v1492
      %v1525 = vmul.f32 %v1269, %v1493
      %v1526 = vmul.f32 %v1270, %v1494
      %v1527 = vmul.f32 %v1271, %v1495
      %v1528 = vmul.f32 %v1272, %v1496
      %vm1529 = vcmask 130048
      %1530 = vst.msk [vmem:[%s289] sm:$0xff] %vm1529, %v1497
      %1531 = vst.msk [vmem:[%s289 + $0x8] sm:$0xff] %vm1529, %v1498
      %1532 = vst.msk [vmem:[%s289 + $0x10] sm:$0xff] %vm1529, %v1499
      %1533 = vst.msk [vmem:[%s289 + $0x18] sm:$0xff] %vm1529, %v1500
      %1534 = vst.msk [vmem:[%s289 + $0x20] sm:$0xff] %vm1529, %v1501
      %1535 = vst.msk [vmem:[%s289 + $0x28] sm:$0xff] %vm1529, %v1502
      %1536 = vst.msk [vmem:[%s289 + $0x30] sm:$0xff] %vm1529, %v1503
      %1537 = vst.msk [vmem:[%s289 + $0x38] sm:$0xff] %vm1529, %v1504
      %1538 = vst.msk [vmem:[%s289 + $0x40] sm:$0xff] %vm1529, %v1505
      %1539 = vst.msk [vmem:[%s289 + $0x48] sm:$0xff] %vm1529, %v1506
      %1540 = vst.msk [vmem:[%s289 + $0x50] sm:$0xff] %vm1529, %v1507
      %1541 = vst.msk [vmem:[%s289 + $0x58] sm:$0xff] %vm1529, %v1508
      %1542 = vst.msk [vmem:[%s289 + $0x60] sm:$0xff] %vm1529, %v1509
      %1543 = vst.msk [vmem:[%s289 + $0x68] sm:$0xff] %vm1529, %v1510
      %1544 = vst.msk [vmem:[%s289 + $0x70] sm:$0xff] %vm1529, %v1511
      %1545 = vst.msk [vmem:[%s289 + $0x78] sm:$0xff] %vm1529, %v1512
      %1546 = vst.msk [vmem:[%s289 + $0x80] sm:$0xff] %vm1529, %v1513
      %1547 = vst.msk [vmem:[%s289 + $0x88] sm:$0xff] %vm1529, %v1514
      %1548 = vst.msk [vmem:[%s289 + $0x90] sm:$0xff] %vm1529, %v1515
      %1549 = vst.msk [vmem:[%s289 + $0x98] sm:$0xff] %vm1529, %v1516
      %1550 = vst.msk [vmem:[%s289 + $0xa0] sm:$0xff] %vm1529, %v1517
      %1551 = vst.msk [vmem:[%s289 + $0xa8] sm:$0xff] %vm1529, %v1518
      %1552 = vst.msk [vmem:[%s289 + $0xb0] sm:$0xff] %vm1529, %v1519
      %1553 = vst.msk [vmem:[%s289 + $0xb8] sm:$0xff] %vm1529, %v1520
      %1554 = vst.msk [vmem:[%s289 + $0xc0] sm:$0xff] %vm1529, %v1521
      %1555 = vst.msk [vmem:[%s289 + $0xc8] sm:$0xff] %vm1529, %v1522
      %1556 = vst.msk [vmem:[%s289 + $0xd0] sm:$0xff] %vm1529, %v1523
      %1557 = vst.msk [vmem:[%s289 + $0xd8] sm:$0xff] %vm1529, %v1524
      %1558 = vst.msk [vmem:[%s289 + $0xe0] sm:$0xff] %vm1529, %v1525
      %1559 = vst.msk [vmem:[%s289 + $0xe8] sm:$0xff] %vm1529, %v1526
      %1560 = vst.msk [vmem:[%s289 + $0xf0] sm:$0xff] %vm1529, %v1527
      %1561 = vst.msk [vmem:[%s289 + $0xf8] sm:$0xff] %vm1529, %v1528
      %s1562 = smul.u32 32, %s18
      %p1563 = scmp.lt.s32.totalorder %s1562, 63
      %s1564 = scalar_select %p1563, %s1562, 63
      %s1565 = smul.addr %s1564, 8
      %s1566 = scalar_lea.vmem %s5, %s1565
      %s1567 = smul.u32 32, %s18
      %p1568 = scmp.lt.s32.totalorder %s1567, 63
      %s1569 = scalar_select %p1568, %s1567, 63
      %s1570 = smul.addr %s1569, 8
      %s1571 = scalar_lea.vmem %s6, %s1570
      // Predicated region
      $region41: #{dcn_layer_forward.4} parent=39 // pred_check
        %p1572 = pneg %p151
      $region42: #{dcn_layer_forward.4} parent=39 // pred_check_branch
        %1574 = sbr.rel (%p1572) target = $region44
      $region43: #{dcn_layer_forward.4} parent=39 // pred_region
        %s1575 = smul.u32 32, %s18
      $region44: #{dcn_layer_forward.4} parent=39 // pred_fallthru
        _
      // Predicated region
      $region45: #{dcn_layer_forward.4} parent=39 // pred_check
        %p1576 = pneg %p177
      $region46: #{dcn_layer_forward.4} parent=39 // pred_check_branch
        %1578 = sbr.rel (%p1576) target = $region48
      $region47: #{dcn_layer_forward.4} parent=39 // pred_region
        %s1579 = smul.u32 32, %s18
      $region48: #{dcn_layer_forward.4} parent=39 // pred_fallthru
        _
    $region40: #{dcn_layer_forward.4} parent=5 // pred_fallthru
      _
    %p1580 = scmp.le.s32.totalorder 2, %s13
    // Predicated region
    $region49: #{dcn_layer_forward.4} parent=5 // pred_check
      %p1581 = pneg %p1580
    $region50: #{dcn_layer_forward.4} parent=5 // pred_check_branch
      %1583 = sbr.rel (%p1581) target = $region52
    $region51: #{dcn_layer_forward.4} parent=5 // pred_region
      %s1584 = ssub.s32 %s13, 2
      // Predicated region
      $region53: #{dcn_layer_forward.4} parent=51 // pred_check
        %p1585 = pneg %p157
      $region54: #{dcn_layer_forward.4} parent=51 // pred_check_branch
        %1587 = sbr.rel (%p1585) target = $region56
      $region55: #{dcn_layer_forward.4} parent=51 // pred_region
        %s1588 = smul.u32 32, %s19
        %p1589 = scmp.lt.s32.totalorder %s1588, 63
        %s1590 = scalar_select %p1589, %s1588, 63
        %s1591 = smul.addr %s1590, 8
        %s1592 = scalar_lea.vmem %s5, %s1591
      $region56: #{dcn_layer_forward.4} parent=51 // pred_fallthru
        _
      // Predicated region
      $region57: #{dcn_layer_forward.4} parent=51 // pred_check
        %p1593 = pneg %p183
      $region58: #{dcn_layer_forward.4} parent=51 // pred_check_branch
        %1595 = sbr.rel (%p1593) target = $region60
      $region59: #{dcn_layer_forward.4} parent=51 // pred_region
        %s1596 = smul.u32 32, %s19
        %p1597 = scmp.lt.s32.totalorder %s1596, 63
        %s1598 = scalar_select %p1597, %s1596, 63
        %s1599 = smul.addr %s1598, 8
        %s1600 = scalar_lea.vmem %s6, %s1599
      $region60: #{dcn_layer_forward.4} parent=51 // pred_fallthru
        _
    $region52: #{dcn_layer_forward.4} parent=5 // pred_fallthru
      _
  $region6: #{dcn_layer_forward.4} parent=0 // loop_footer
    %s17 = sadd.s32 1, %s13
  $region7: #{dcn_layer_forward.4} parent=0 // loop_footer_branch
    %12 = sbr.rel target = $region3
  $region8: #{dcn_layer_forward.4} parent=0 // loop_exit
    _

// kernel: dcn_layer_forward.5
$region0: #{dcn_layer_forward.5}
  #allocation0 [shape = 'u32[]', space=smem, size = 0x4, offset = 0x4, fixed_abs, tag = 'smem constant byte address 0x4 - core index']
  #allocation1 [shape = 'u32[144,128]{1,0:T(1,128)}', space=vmem, size = 0x12000, scoped, tag = 'internal scratch']
  #allocation2 [shape = 'f32[18,32,16]{2,1,0:T(8,128)}', space=vmem, size = 0x48000, scoped, tag = 'scratch operand']
  #allocation3 [shape = 'f32[256,4]{1,0:T(8,128)}', space=vmem, size = 0x20000, scoped, tag = 'scratch operand']
  %s0 = inlined_call_operand.vmem [shape: f32[2,16,16,16], index: 0, kind: input, shape index: {}]
  %s1 = inlined_call_operand.vmem [shape: f32[9,16], index: 1, kind: input, shape index: {}]
  %s2 = inlined_call_operand.vmem [shape: f32[1,16], index: 2, kind: input, shape index: {}]
  %s3 = inlined_call_operand.vmem [shape: f32[16,4], index: 3, kind: input, shape index: {}]
  %s4 = inlined_call_operand.vmem [shape: f32[2,16,16,4], index: 4, kind: input, shape index: {}]
  %s5 = inlined_call_operand.vmem [shape: f32[2,16,16,4], index: 5, kind: output, shape index: {}]
  %s6 = sld [smem:[#allocation0]]
  $region61: #{dcn_layer_forward.5} parent=0
    _
  %s8 = ssub.s32 1, %s6
  %s9 = scalar_select 0, %s8, %s6
  loop: start=0, step=1, limit=4
  $region2: #{dcn_layer_forward.5} parent=0 // loop_pre_header
    _
  $region3: #{dcn_layer_forward.5} parent=0 // loop_header
    %s11 = sphi 0, %s15
    %p12 = scmp.ge.s32.totalorder %s11, 4
    %s18 = sphi 0, %s30
    %s19 = sphi 0, %s26
    %s20 = sphi 0, %s18
    %s21 = sphi 0, %s19
    %s22 = sphi 0, %s20
    %s23 = sphi 0, %s21
    %s35 = sphi 0, %s37
    %s38 = sphi 0, %s35
    %s39 = sphi 0, %s38
    %s55 = sphi 0, %s39
    %s61 = sphi 0, %s63
    %s64 = sphi 0, %s61
    %s65 = sphi 0, %s64
    %s81 = sphi 0, %s65
    %s87 = sphi 0, %s89
    %s90 = sphi 0, %s87
    %s91 = sphi 0, %s90
    %s107 = sphi 0, %s91
    %s113 = sphi 0, %s115
    %s116 = sphi 0, %s113
    %s117 = sphi 0, %s116
    %s133 = sphi 0, %s117
    %s139 = sphi 0, %s141
    %s142 = sphi 0, %s139
    %s143 = sphi 0, %s142
    %s159 = sphi 0, %s143
    %s165 = sphi 0, %s167
    %s168 = sphi 0, %s165
    %s169 = sphi 0, %s168
    %s185 = sphi 0, %s169
  $region4: #{dcn_layer_forward.5} parent=0 // loop_header_branch
    %14 = sbr.rel (%p12) target = $region8
  $region5: #{dcn_layer_forward.5} parent=0 // loop_body
    %s16 = ssub.s32 %s11, 1
    %s17 = ssub.s32 %s11, 2
    %s24 = sadd.s32 1, %s19
    %p25 = scmp.ge.s32.totalorder %s24, 1
    %s26 = scalar_select %p25, 0, %s24
    %s27 = sadd.s32 1, %s18
    %s28 = scalar_select %p25, %s27, %s18
    %p29 = scmp.ge.s32.totalorder %s28, 2
    %s30 = scalar_select %p29, 0, %s28
    %s31 = ssub.s32 %s18, %s30
    %s32 = ssub.s32 %s19, %s26
    %s33 = sor.u32 %s31, %s32
    %p34 = scmp.eq.s32.totalorder %s33, 0
    %s36 = sadd.s32 %s35, 1
    %s37 = scalar_select %p34, %s35, %s36
    %p40 = pneg %p34
    %p41 = scmp.eq.s32.totalorder %s11, 1
    %p42 = por %p40, %p41
    %p43 = scmp.ne.s32.totalorder %s35, %s38
    %p44 = scmp.eq.s32.totalorder %s11, 0
    %p45 = por %p43, %p44
    %p46 = scmp.ne.s32.totalorder %s35, %s38
    %p47 = scmp.eq.s32.totalorder %s16, 1
    %p48 = por %p46, %p47
    %p49 = scmp.ne.s32.totalorder %s38, %s39
    %p50 = scmp.eq.s32.totalorder %s16, 0
    %p51 = por %p49, %p50
    %p52 = scmp.ne.s32.totalorder %s38, %s39
    %p53 = scmp.eq.s32.totalorder %s17, 1
    %p54 = por %p52, %p53
    %p56 = scmp.ne.s32.totalorder %s39, %s55
    %p57 = scmp.eq.s32.totalorder %s17, 0
    %p58 = por %p56, %p57
    %s59 = ssub.s32 %s19, %s26
    %p60 = scmp.eq.s32.totalorder %s59, 0
    %s62 = sadd.s32 %s61, 1
    %s63 = scalar_select %p60, %s61, %s62
    %p66 = pneg %p60
    %p67 = scmp.eq.s32.totalorder %s11, 1
    %p68 = por %p66, %p67
    %p69 = scmp.ne.s32.totalorder %s61, %s64
    %p70 = scmp.eq.s32.totalorder %s11, 0
    %p71 = por %p69, %p70
    %p72 = scmp.ne.s32.totalorder %s61, %s64
    %p73 = scmp.eq.s32.totalorder %s16, 1
    %p74 = por %p72, %p73
    %p75 = scmp.ne.s32.totalorder %s64, %s65
    %p76 = scmp.eq.s32.totalorder %s16, 0
    %p77 = por %p75, %p76
    %p78 = scmp.ne.s32.totalorder %s64, %s65
    %p79 = scmp.eq.s32.totalorder %s17, 1
    %p80 = por %p78, %p79
    %p82 = scmp.ne.s32.totalorder %s65, %s81
    %p83 = scmp.eq.s32.totalorder %s17, 0
    %p84 = por %p82, %p83
    %s85 = ssub.s32 %s19, %s26
    %p86 = scmp.eq.s32.totalorder %s85, 0
    %s88 = sadd.s32 %s87, 1
    %s89 = scalar_select %p86, %s87, %s88
    %p92 = pneg %p86
    %p93 = scmp.eq.s32.totalorder %s11, 1
    %p94 = por %p92, %p93
    %p95 = scmp.ne.s32.totalorder %s87, %s90
    %p96 = scmp.eq.s32.totalorder %s11, 0
    %p97 = por %p95, %p96
    %p98 = scmp.ne.s32.totalorder %s87, %s90
    %p99 = scmp.eq.s32.totalorder %s16, 1
    %p100 = por %p98, %p99
    %p101 = scmp.ne.s32.totalorder %s90, %s91
    %p102 = scmp.eq.s32.totalorder %s16, 0
    %p103 = por %p101, %p102
    %p104 = scmp.ne.s32.totalorder %s90, %s91
    %p105 = scmp.eq.s32.totalorder %s17, 1
    %p106 = por %p104, %p105
    %p108 = scmp.ne.s32.totalorder %s91, %s107
    %p109 = scmp.eq.s32.totalorder %s17, 0
    %p110 = por %p108, %p109
    %s111 = ssub.s32 %s19, %s26
    %p112 = scmp.eq.s32.totalorder %s111, 0
    %s114 = sadd.s32 %s113, 1
    %s115 = scalar_select %p112, %s113, %s114
    %p118 = pneg %p112
    %p119 = scmp.eq.s32.totalorder %s11, 1
    %p120 = por %p118, %p119
    %p121 = scmp.ne.s32.totalorder %s113, %s116
    %p122 = scmp.eq.s32.totalorder %s11, 0
    %p123 = por %p121, %p122
    %p124 = scmp.ne.s32.totalorder %s113, %s116
    %p125 = scmp.eq.s32.totalorder %s16, 1
    %p126 = por %p124, %p125
    %p127 = scmp.ne.s32.totalorder %s116, %s117
    %p128 = scmp.eq.s32.totalorder %s16, 0
    %p129 = por %p127, %p128
    %p130 = scmp.ne.s32.totalorder %s116, %s117
    %p131 = scmp.eq.s32.totalorder %s17, 1
    %p132 = por %p130, %p131
    %p134 = scmp.ne.s32.totalorder %s117, %s133
    %p135 = scmp.eq.s32.totalorder %s17, 0
    %p136 = por %p134, %p135
    %s137 = ssub.s32 %s18, %s30
    %p138 = scmp.eq.s32.totalorder %s137, 0
    %s140 = sadd.s32 %s139, 1
    %s141 = scalar_select %p138, %s139, %s140
    %p144 = pneg %p138
    %p145 = scmp.eq.s32.totalorder %s11, 1
    %p146 = por %p144, %p145
    %p147 = scmp.ne.s32.totalorder %s139, %s142
    %p148 = scmp.eq.s32.totalorder %s11, 0
    %p149 = por %p147, %p148
    %p150 = scmp.ne.s32.totalorder %s139, %s142
    %p151 = scmp.eq.s32.totalorder %s16, 1
    %p152 = por %p150, %p151
    %p153 = scmp.ne.s32.totalorder %s142, %s143
    %p154 = scmp.eq.s32.totalorder %s16, 0
    %p155 = por %p153, %p154
    %p156 = scmp.ne.s32.totalorder %s142, %s143
    %p157 = scmp.eq.s32.totalorder %s17, 1
    %p158 = por %p156, %p157
    %p160 = scmp.ne.s32.totalorder %s143, %s159
    %p161 = scmp.eq.s32.totalorder %s17, 0
    %p162 = por %p160, %p161
    %s163 = ssub.s32 %s18, %s30
    %p164 = scmp.eq.s32.totalorder %s163, 0
    %s166 = sadd.s32 %s165, 1
    %s167 = scalar_select %p164, %s165, %s166
    %p170 = pneg %p164
    %p171 = scmp.eq.s32.totalorder %s11, 1
    %p172 = por %p170, %p171
    %p173 = scmp.ne.s32.totalorder %s165, %s168
    %p174 = scmp.eq.s32.totalorder %s11, 0
    %p175 = por %p173, %p174
    %p176 = scmp.ne.s32.totalorder %s165, %s168
    %p177 = scmp.eq.s32.totalorder %s16, 1
    %p178 = por %p176, %p177
    %p179 = scmp.ne.s32.totalorder %s168, %s169
    %p180 = scmp.eq.s32.totalorder %s16, 0
    %p181 = por %p179, %p180
    %p182 = scmp.ne.s32.totalorder %s168, %s169
    %p183 = scmp.eq.s32.totalorder %s17, 1
    %p184 = por %p182, %p183
    %p186 = scmp.ne.s32.totalorder %s169, %s185
    %p187 = scmp.eq.s32.totalorder %s17, 0
    %p188 = por %p186, %p187
    %p189 = scmp.le.s32.totalorder 1, %s11
    %p190 = scmp.lt.s32.totalorder %s11, 3
    %p191 = pnand %p189, %p190
    %p192 = pneg %p191
    // Predicated region
    $region9: #{dcn_layer_forward.5} parent=5 // pred_check
      _
    $region10: #{dcn_layer_forward.5} parent=5 // pred_check_branch
      %194 = sbr.rel (%p191) target = $region12
    $region11: #{dcn_layer_forward.5} parent=5 // pred_region
      %s195 = ssub.s32 %s11, 1
      // Predicated region
      $region13: #{dcn_layer_forward.5} parent=11 // pred_check
        %p196 = pneg %p77
      $region14: #{dcn_layer_forward.5} parent=11 // pred_check_branch
        %198 = sbr.rel (%p196) target = $region16
      $region15: #{dcn_layer_forward.5} parent=11 // pred_region
        %p199 = scmp.lt.s32.totalorder %s21, 0
        %s200 = scalar_select %p199, %s21, 0
        %s201 = smul.addr %s200, 8
        %s202 = scalar_lea.vmem %s1, %s201
      $region16: #{dcn_layer_forward.5} parent=11 // pred_fallthru
        _
      // Predicated region
      $region17: #{dcn_layer_forward.5} parent=11 // pred_check
        %p203 = pneg %p103
      $region18: #{dcn_layer_forward.5} parent=11 // pred_check_branch
        %205 = sbr.rel (%p203) target = $region20
      $region19: #{dcn_layer_forward.5} parent=11 // pred_region
        %p206 = scmp.lt.s32.totalorder %s21, 0
        %s207 = scalar_select %p206, %s21, 0
        %s208 = scalar_lea.vmem %s2, %s207
      $region20: #{dcn_layer_forward.5} parent=11 // pred_fallthru
        _
      // Predicated region
      $region21: #{dcn_layer_forward.5} parent=11 // pred_check
        %p209 = pneg %p129
      $region22: #{dcn_layer_forward.5} parent=11 // pred_check_branch
        %211 = sbr.rel (%p209) target = $region24
      $region23: #{dcn_layer_forward.5} parent=11 // pred_region
        %s212 = smul.u32 2, %s21
        %p213 = scmp.lt.s32.totalorder %s212, 1
        %s214 = scalar_select %p213, %s212, 1
        %s215 = smul.addr %s214, 8
        %s216 = scalar_lea.vmem %s3, %s215
        %s217 = smul.u32 2, %s21
      $region24: #{dcn_layer_forward.5} parent=11 // pred_fallthru
        _
    $region12: #{dcn_layer_forward.5} parent=5 // pred_fallthru
      _
    %p218 = scmp.lt.s32.totalorder %s11, 2
    // Predicated region
    $region25: #{dcn_layer_forward.5} parent=5 // pred_check
      %p219 = pneg %p218
    $region26: #{dcn_layer_forward.5} parent=5 // pred_check_branch
      %221 = sbr.rel (%p219) target = $region28
    $region27: #{dcn_layer_forward.5} parent=5 // pred_region
      // Predicated region
      $region29: #{dcn_layer_forward.5} parent=27 // pred_check
        %p222 = pneg %p45
      $region30: #{dcn_layer_forward.5} parent=27 // pred_check_branch
        %224 = sbr.rel (%p222) target = $region32
      $region31: #{dcn_layer_forward.5} parent=27 // pred_region
        %p225 = scmp.lt.s32.totalorder %s18, 1
        %s226 = scalar_select %p225, %s18, 1
        %p227 = scmp.lt.s32.totalorder %s19, 0
        %s228 = scalar_select %p227, %s19, 0
        %s229 = smul.addr %s226, 32
        %s230 = sadd.s32 %s228, %s229
        %s231 = smul.addr %s230, 8
        %s232 = scalar_lea.vmem %s0, %s231
      $region32: #{dcn_layer_forward.5} parent=27 // pred_fallthru
        _
      // Predicated region
      $region33: #{dcn_layer_forward.5} parent=27 // pred_check
        %p233 = pneg %p149
      $region34: #{dcn_layer_forward.5} parent=27 // pred_check_branch
        %235 = sbr.rel (%p233) target = $region36
      $region35: #{dcn_layer_forward.5} parent=27 // pred_region
        %p236 = scmp.lt.s32.totalorder %s18, 1
        %s237 = scalar_select %p236, %s18, 1
        %s238 = smul.addr %s237, 32
        %s239 = smul.addr %s238, 8
        %s240 = scalar_lea.vmem %s4, %s239
      $region36: #{dcn_layer_forward.5} parent=27 // pred_fallthru
        _
    $region28: #{dcn_layer_forward.5} parent=5 // pred_fallthru
      _
    %p241 = scmp.le.s32.totalorder 1, %s11
    %p242 = scmp.lt.s32.totalorder %s11, 3
    %p243 = pnand %p241, %p242
    %p244 = pneg %p243
    // Predicated region
    $region37: #{dcn_layer_forward.5} parent=5 // pred_check
      _
    $region38: #{dcn_layer_forward.5} parent=5 // pred_check_branch
      %246 = sbr.rel (%p243) target = $region40
    $region39: #{dcn_layer_forward.5} parent=5 // pred_region
      %s247 = ssub.s32 %s11, 1
      %p248 = scmp.lt.s32.totalorder %s20, 1
      %s249 = scalar_select %p248, %s20, 1
      %p250 = scmp.lt.s32.totalorder %s21, 0
      %s251 = scalar_select %p250, %s21, 0
      %s252 = smul.addr %s249, 32
      %s253 = sadd.s32 %s251, %s252
      %s254 = smul.addr %s253, 8
      %s255 = scalar_lea.vmem %s0, %s254
      %p256 = pneg %p51
      %p257 = pneg %p48
      %p258 = scmp.lt.s32.totalorder %s21, 0
      %s259 = scalar_select %p258, %s21, 0
      %s260 = smul.addr %s259, 8
      %s261 = scalar_lea.vmem %s1, %s260
      %p262 = pneg %p77
      %p263 = pneg %p74
      %p264 = scmp.lt.s32.totalorder %s21, 0
      %s265 = scalar_select %p264, %s21, 0
      %s266 = scalar_lea.vmem %s2, %s265
      %p267 = pneg %p103
      %p268 = pneg %p100
      %s269 = smul.u32 2, %s21
      %p270 = scmp.lt.s32.totalorder %s269, 1
      %s271 = scalar_select %p270, %s269, 1
      %s272 = smul.addr %s271, 8
      %s273 = scalar_lea.vmem %s3, %s272
      %p274 = pneg %p129
      %p275 = pneg %p126
      %p276 = scmp.lt.s32.totalorder %s20, 1
      %s277 = scalar_select %p276, %s20, 1
      %s278 = smul.addr %s277, 32
      %s279 = smul.addr %s278, 8
      %s280 = scalar_lea.vmem %s4, %s279
      %p281 = pneg %p155
      %p282 = pneg %p152
      %p283 = pneg %p181
      %p284 = pneg %p178
      %p285 = scmp.lt.s32.totalorder %s20, 1
      %s286 = scalar_select %p285, %s20, 1
      %s287 = smul.addr %s286, 32
      %s288 = smul.addr %s287, 8
      %s289 = scalar_lea.vmem %s5, %s288
      %p290 = scmp.lt.s32.totalorder %s20, 1
      %s291 = scalar_select %p290, %s20, 1
      %p292 = scmp.lt.s32.totalorder %s21, 0
      %s293 = scalar_select %p292, %s21, 0
      %s294 = smul.addr %s291, 32
      %s295 = sadd.s32 %s293, %s294
      %s296 = smul.addr %s295, 8
      %s297 = scalar_lea.vmem %s0, %s296
      %p298 = scmp.lt.s32.totalorder %s21, 0
      %s299 = scalar_select %p298, %s21, 0
      %s300 = smul.addr %s299, 8
      %s301 = scalar_lea.vmem %s1, %s300
      %p302 = scmp.lt.s32.totalorder %s21, 0
      %s303 = scalar_select %p302, %s21, 0
      %s304 = scalar_lea.vmem %s2, %s303
      %s305 = smul.u32 2, %s21
      %p306 = scmp.lt.s32.totalorder %s305, 1
      %s307 = scalar_select %p306, %s305, 1
      %s308 = smul.addr %s307, 8
      %s309 = scalar_lea.vmem %s3, %s308
      %s310 = smul.u32 2, %s21
      %p311 = scmp.lt.s32.totalorder %s20, 1
      %s312 = scalar_select %p311, %s20, 1
      %s313 = smul.addr %s312, 32
      %s314 = smul.addr %s313, 8
      %s315 = scalar_lea.vmem %s4, %s314
      %p316 = scmp.lt.s32.totalorder %s20, 1
      %s317 = scalar_select %p316, %s20, 1
      %s318 = smul.addr %s317, 32
      %s319 = smul.addr %s318, 8
      %s320 = scalar_lea.vmem %s5, %s319
      %p321 = scmp.eq.s32.totalorder %s21, 0
      // Predicated region
      $region41: #{dcn_layer_forward.5} parent=39 // pred_check
        %p322 = pneg %p321
      $region42: #{dcn_layer_forward.5} parent=39 // pred_check_branch
        %324 = sbr.rel (%p322) target = $region44
      $region43: #{dcn_layer_forward.5} parent=39 // pred_region
        %vm325 = vcmask 31744
        %326 = vst.msk [vmem:[#allocation3] sm:$0xff] %vm325, 0.0
        %327 = vst.msk [vmem:[#allocation3 + $0x8] sm:$0xff] %vm325, 0.0
        %328 = vst.msk [vmem:[#allocation3 + $0x10] sm:$0xff] %vm325, 0.0
        %329 = vst.msk [vmem:[#allocation3 + $0x18] sm:$0xff] %vm325, 0.0
        %330 = vst.msk [vmem:[#allocation3 + $0x20] sm:$0xff] %vm325, 0.0
        %331 = vst.msk [vmem:[#allocation3 + $0x28] sm:$0xff] %vm325, 0.0
        %332 = vst.msk [vmem:[#allocation3 + $0x30] sm:$0xff] %vm325, 0.0
        %333 = vst.msk [vmem:[#allocation3 + $0x38] sm:$0xff] %vm325, 0.0
        %334 = vst.msk [vmem:[#allocation3 + $0x40] sm:$0xff] %vm325, 0.0
        %335 = vst.msk [vmem:[#allocation3 + $0x48] sm:$0xff] %vm325, 0.0
        %336 = vst.msk [vmem:[#allocation3 + $0x50] sm:$0xff] %vm325, 0.0
        %337 = vst.msk [vmem:[#allocation3 + $0x58] sm:$0xff] %vm325, 0.0
        %338 = vst.msk [vmem:[#allocation3 + $0x60] sm:$0xff] %vm325, 0.0
        %339 = vst.msk [vmem:[#allocation3 + $0x68] sm:$0xff] %vm325, 0.0
        %340 = vst.msk [vmem:[#allocation3 + $0x70] sm:$0xff] %vm325, 0.0
        %341 = vst.msk [vmem:[#allocation3 + $0x78] sm:$0xff] %vm325, 0.0
        %342 = vst.msk [vmem:[#allocation3 + $0x80] sm:$0xff] %vm325, 0.0
        %343 = vst.msk [vmem:[#allocation3 + $0x88] sm:$0xff] %vm325, 0.0
        %344 = vst.msk [vmem:[#allocation3 + $0x90] sm:$0xff] %vm325, 0.0
        %345 = vst.msk [vmem:[#allocation3 + $0x98] sm:$0xff] %vm325, 0.0
        %346 = vst.msk [vmem:[#allocation3 + $0xa0] sm:$0xff] %vm325, 0.0
        %347 = vst.msk [vmem:[#allocation3 + $0xa8] sm:$0xff] %vm325, 0.0
        %348 = vst.msk [vmem:[#allocation3 + $0xb0] sm:$0xff] %vm325, 0.0
        %349 = vst.msk [vmem:[#allocation3 + $0xb8] sm:$0xff] %vm325, 0.0
        %350 = vst.msk [vmem:[#allocation3 + $0xc0] sm:$0xff] %vm325, 0.0
        %351 = vst.msk [vmem:[#allocation3 + $0xc8] sm:$0xff] %vm325, 0.0
        %352 = vst.msk [vmem:[#allocation3 + $0xd0] sm:$0xff] %vm325, 0.0
        %353 = vst.msk [vmem:[#allocation3 + $0xd8] sm:$0xff] %vm325, 0.0
        %354 = vst.msk [vmem:[#allocation3 + $0xe0] sm:$0xff] %vm325, 0.0
        %355 = vst.msk [vmem:[#allocation3 + $0xe8] sm:$0xff] %vm325, 0.0
        %356 = vst.msk [vmem:[#allocation3 + $0xf0] sm:$0xff] %vm325, 0.0
        %357 = vst.msk [vmem:[#allocation3 + $0xf8] sm:$0xff] %vm325, 0.0
        %vm358 = vcmask 130048
        %359 = vst.msk [vmem:[#allocation2] sm:$0xff] %vm358, 0.0
        %360 = vst.msk [vmem:[#allocation2 + $0x8] sm:$0xff] %vm358, 0.0
        %361 = vst.msk [vmem:[#allocation2 + $0x10] sm:$0xff] %vm358, 0.0
        %362 = vst.msk [vmem:[#allocation2 + $0x18] sm:$0xff] %vm358, 0.0
        %363 = vst.msk [vmem:[#allocation2 + $0x20] sm:$0xff] %vm358, 0.0
        %364 = vst.msk [vmem:[#allocation2 + $0x28] sm:$0xff] %vm358, 0.0
        %365 = vst.msk [vmem:[#allocation2 + $0x30] sm:$0xff] %vm358, 0.0
        %366 = vst.msk [vmem:[#allocation2 + $0x38] sm:$0xff] %vm358, 0.0
        %367 = vst.msk [vmem:[#allocation2 + $0x40] sm:$0xff] %vm358, 0.0
        %368 = vst.msk [vmem:[#allocation2 + $0x48] sm:$0xff] %vm358, 0.0
        %369 = vst.msk [vmem:[#allocation2 + $0x50] sm:$0xff] %vm358, 0.0
        %370 = vst.msk [vmem:[#allocation2 + $0x58] sm:$0xff] %vm358, 0.0
        %371 = vst.msk [vmem:[#allocation2 + $0x60] sm:$0xff] %vm358, 0.0
        %372 = vst.msk [vmem:[#allocation2 + $0x68] sm:$0xff] %vm358, 0.0
        %373 = vst.msk [vmem:[#allocation2 + $0x70] sm:$0xff] %vm358, 0.0
        %374 = vst.msk [vmem:[#allocation2 + $0x78] sm:$0xff] %vm358, 0.0
        %375 = vst.msk [vmem:[#allocation2 + $0x80] sm:$0xff] %vm358, 0.0
        %376 = vst.msk [vmem:[#allocation2 + $0x88] sm:$0xff] %vm358, 0.0
        %377 = vst.msk [vmem:[#allocation2 + $0x90] sm:$0xff] %vm358, 0.0
        %378 = vst.msk [vmem:[#allocation2 + $0x98] sm:$0xff] %vm358, 0.0
        %379 = vst.msk [vmem:[#allocation2 + $0xa0] sm:$0xff] %vm358, 0.0
        %380 = vst.msk [vmem:[#allocation2 + $0xa8] sm:$0xff] %vm358, 0.0
        %381 = vst.msk [vmem:[#allocation2 + $0xb0] sm:$0xff] %vm358, 0.0
        %382 = vst.msk [vmem:[#allocation2 + $0xb8] sm:$0xff] %vm358, 0.0
        %383 = vst.msk [vmem:[#allocation2 + $0xc0] sm:$0xff] %vm358, 0.0
        %384 = vst.msk [vmem:[#allocation2 + $0xc8] sm:$0xff] %vm358, 0.0
        %385 = vst.msk [vmem:[#allocation2 + $0xd0] sm:$0xff] %vm358, 0.0
        %386 = vst.msk [vmem:[#allocation2 + $0xd8] sm:$0xff] %vm358, 0.0
        %387 = vst.msk [vmem:[#allocation2 + $0xe0] sm:$0xff] %vm358, 0.0
        %388 = vst.msk [vmem:[#allocation2 + $0xe8] sm:$0xff] %vm358, 0.0
        %389 = vst.msk [vmem:[#allocation2 + $0xf0] sm:$0xff] %vm358, 0.0
        %390 = vst.msk [vmem:[#allocation2 + $0xf8] sm:$0xff] %vm358, 0.0
        %391 = vst.msk [vmem:[#allocation2 + $0x100] sm:$0xff] %vm358, 0.0
        %392 = vst.msk [vmem:[#allocation2 + $0x108] sm:$0xff] %vm358, 0.0
        %393 = vst.msk [vmem:[#allocation2 + $0x110] sm:$0xff] %vm358, 0.0
        %394 = vst.msk [vmem:[#allocation2 + $0x118] sm:$0xff] %vm358, 0.0
        %395 = vst.msk [vmem:[#allocation2 + $0x120] sm:$0xff] %vm358, 0.0
        %396 = vst.msk [vmem:[#allocation2 + $0x128] sm:$0xff] %vm358, 0.0
        %397 = vst.msk [vmem:[#allocation2 + $0x130] sm:$0xff] %vm358, 0.0
        %398 = vst.msk [vmem:[#allocation2 + $0x138] sm:$0xff] %vm358, 0.0
        %399 = vst.msk [vmem:[#allocation2 + $0x140] sm:$0xff] %vm358, 0.0
        %400 = vst.msk [vmem:[#allocation2 + $0x148] sm:$0xff] %vm358, 0.0
        %401 = vst.msk [vmem:[#allocation2 + $0x150] sm:$0xff] %vm358, 0.0
        %402 = vst.msk [vmem:[#allocation2 + $0x158] sm:$0xff] %vm358, 0.0
        %403 = vst.msk [vmem:[#allocation2 + $0x160] sm:$0xff] %vm358, 0.0
        %404 = vst.msk [vmem:[#allocation2 + $0x168] sm:$0xff] %vm358, 0.0
        %405 = vst.msk [vmem:[#allocation2 + $0x170] sm:$0xff] %vm358, 0.0
        %406 = vst.msk [vmem:[#allocation2 + $0x178] sm:$0xff] %vm358, 0.0
        %407 = vst.msk [vmem:[#allocation2 + $0x180] sm:$0xff] %vm358, 0.0
        %408 = vst.msk [vmem:[#allocation2 + $0x188] sm:$0xff] %vm358, 0.0
        %409 = vst.msk [vmem:[#allocation2 + $0x190] sm:$0xff] %vm358, 0.0
        %410 = vst.msk [vmem:[#allocation2 + $0x198] sm:$0xff] %vm358, 0.0
        %411 = vst.msk [vmem:[#allocation2 + $0x1a0] sm:$0xff] %vm358, 0.0
        %412 = vst.msk [vmem:[#allocation2 + $0x1a8] sm:$0xff] %vm358, 0.0
        %413 = vst.msk [vmem:[#allocation2 + $0x1b0] sm:$0xff] %vm358, 0.0
        %414 = vst.msk [vmem:[#allocation2 + $0x1b8] sm:$0xff] %vm358, 0.0
        %415 = vst.msk [vmem:[#allocation2 + $0x1c0] sm:$0xff] %vm358, 0.0
        %416 = vst.msk [vmem:[#allocation2 + $0x1c8] sm:$0xff] %vm358, 0.0
        %417 = vst.msk [vmem:[#allocation2 + $0x1d0] sm:$0xff] %vm358, 0.0
        %418 = vst.msk [vmem:[#allocation2 + $0x1d8] sm:$0xff] %vm358, 0.0
        %419 = vst.msk [vmem:[#allocation2 + $0x1e0] sm:$0xff] %vm358, 0.0
        %420 = vst.msk [vmem:[#allocation2 + $0x1e8] sm:$0xff] %vm358, 0.0
        %421 = vst.msk [vmem:[#allocation2 + $0x1f0] sm:$0xff] %vm358, 0.0
        %422 = vst.msk [vmem:[#allocation2 + $0x1f8] sm:$0xff] %vm358, 0.0
        %423 = vst.msk [vmem:[#allocation2 + $0x200] sm:$0xff] %vm358, 0.0
        %424 = vst.msk [vmem:[#allocation2 + $0x208] sm:$0xff] %vm358, 0.0
        %425 = vst.msk [vmem:[#allocation2 + $0x210] sm:$0xff] %vm358, 0.0
        %426 = vst.msk [vmem:[#allocation2 + $0x218] sm:$0xff] %vm358, 0.0
        %427 = vst.msk [vmem:[#allocation2 + $0x220] sm:$0xff] %vm358, 0.0
        %428 = vst.msk [vmem:[#allocation2 + $0x228] sm:$0xff] %vm358, 0.0
        %429 = vst.msk [vmem:[#allocation2 + $0x230] sm:$0xff] %vm358, 0.0
        %430 = vst.msk [vmem:[#allocation2 + $0x238] sm:$0xff] %vm358, 0.0
      $region44: #{dcn_layer_forward.5} parent=39 // pred_fallthru
        _
      %v431 = vld [vmem:[%s297] sm:$0xff]
      %v432 = vld [vmem:[%s297 + $0x8] sm:$0xff]
      %v433 = vld [vmem:[%s297 + $0x10] sm:$0xff]
      %v434 = vld [vmem:[%s297 + $0x18] sm:$0xff]
      %v435 = vld [vmem:[%s297 + $0x20] sm:$0xff]
      %v436 = vld [vmem:[%s297 + $0x28] sm:$0xff]
      %v437 = vld [vmem:[%s297 + $0x30] sm:$0xff]
      %v438 = vld [vmem:[%s297 + $0x38] sm:$0xff]
      %v439 = vld [vmem:[%s297 + $0x40] sm:$0xff]
      %v440 = vld [vmem:[%s297 + $0x48] sm:$0xff]
      %v441 = vld [vmem:[%s297 + $0x50] sm:$0xff]
      %v442 = vld [vmem:[%s297 + $0x58] sm:$0xff]
      %v443 = vld [vmem:[%s297 + $0x60] sm:$0xff]
      %v444 = vld [vmem:[%s297 + $0x68] sm:$0xff]
      %v445 = vld [vmem:[%s297 + $0x70] sm:$0xff]
      %v446 = vld [vmem:[%s297 + $0x78] sm:$0xff]
      %v447 = vld [vmem:[%s297 + $0x80] sm:$0xff]
      %v448 = vld [vmem:[%s297 + $0x88] sm:$0xff]
      %v449 = vld [vmem:[%s297 + $0x90] sm:$0xff]
      %v450 = vld [vmem:[%s297 + $0x98] sm:$0xff]
      %v451 = vld [vmem:[%s297 + $0xa0] sm:$0xff]
      %v452 = vld [vmem:[%s297 + $0xa8] sm:$0xff]
      %v453 = vld [vmem:[%s297 + $0xb0] sm:$0xff]
      %v454 = vld [vmem:[%s297 + $0xb8] sm:$0xff]
      %v455 = vld [vmem:[%s297 + $0xc0] sm:$0xff]
      %v456 = vld [vmem:[%s297 + $0xc8] sm:$0xff]
      %v457 = vld [vmem:[%s297 + $0xd0] sm:$0xff]
      %v458 = vld [vmem:[%s297 + $0xd8] sm:$0xff]
      %v459 = vld [vmem:[%s297 + $0xe0] sm:$0xff]
      %v460 = vld [vmem:[%s297 + $0xe8] sm:$0xff]
      %v461 = vld [vmem:[%s297 + $0xf0] sm:$0xff]
      %v462 = vld [vmem:[%s297 + $0xf8] sm:$0xff]
      %s463 = scalar_lea.vmem [#allocation2], 32
      %vm464 = vcmask 130048
      %465 = vst.msk [vmem:[%s463 + $0x8] sm:$0xff] %vm464, %v431
      %466 = vst.msk [vmem:[%s463 + $0x10] sm:$0xff] %vm464, %v432
      %467 = vst.msk [vmem:[%s463 + $0x28] sm:$0xff] %vm464, %v433
      %468 = vst.msk [vmem:[%s463 + $0x30] sm:$0xff] %vm464, %v434
      %469 = vst.msk [vmem:[%s463 + $0x48] sm:$0xff] %vm464, %v435
      %470 = vst.msk [vmem:[%s463 + $0x50] sm:$0xff] %vm464, %v436
      %471 = vst.msk [vmem:[%s463 + $0x68] sm:$0xff] %vm464, %v437
      %472 = vst.msk [vmem:[%s463 + $0x70] sm:$0xff] %vm464, %v438
      %473 = vst.msk [vmem:[%s463 + $0x88] sm:$0xff] %vm464, %v439
      %474 = vst.msk [vmem:[%s463 + $0x90] sm:$0xff] %vm464, %v440
      %475 = vst.msk [vmem:[%s463 + $0xa8] sm:$0xff] %vm464, %v441
      %476 = vst.msk [vmem:[%s463 + $0xb0] sm:$0xff] %vm464, %v442
      %477 = vst.msk [vmem:[%s463 + $0xc8] sm:$0xff] %vm464, %v443
      %478 = vst.msk [vmem:[%s463 + $0xd0] sm:$0xff] %vm464, %v444
      %479 = vst.msk [vmem:[%s463 + $0xe8] sm:$0xff] %vm464, %v445
      %480 = vst.msk [vmem:[%s463 + $0xf0] sm:$0xff] %vm464, %v446
      %481 = vst.msk [vmem:[%s463 + $0x108] sm:$0xff] %vm464, %v447
      %482 = vst.msk [vmem:[%s463 + $0x110] sm:$0xff] %vm464, %v448
      %483 = vst.msk [vmem:[%s463 + $0x128] sm:$0xff] %vm464, %v449
      %484 = vst.msk [vmem:[%s463 + $0x130] sm:$0xff] %vm464, %v450
      %485 = vst.msk [vmem:[%s463 + $0x148] sm:$0xff] %vm464, %v451
      %486 = vst.msk [vmem:[%s463 + $0x150] sm:$0xff] %vm464, %v452
      %487 = vst.msk [vmem:[%s463 + $0x168] sm:$0xff] %vm464, %v453
      %488 = vst.msk [vmem:[%s463 + $0x170] sm:$0xff] %vm464, %v454
      %489 = vst.msk [vmem:[%s463 + $0x188] sm:$0xff] %vm464, %v455
      %490 = vst.msk [vmem:[%s463 + $0x190] sm:$0xff] %vm464, %v456
      %491 = vst.msk [vmem:[%s463 + $0x1a8] sm:$0xff] %vm464, %v457
      %492 = vst.msk [vmem:[%s463 + $0x1b0] sm:$0xff] %vm464, %v458
      %493 = vst.msk [vmem:[%s463 + $0x1c8] sm:$0xff] %vm464, %v459
      %494 = vst.msk [vmem:[%s463 + $0x1d0] sm:$0xff] %vm464, %v460
      %495 = vst.msk [vmem:[%s463 + $0x1e8] sm:$0xff] %vm464, %v461
      %496 = vst.msk [vmem:[%s463 + $0x1f0] sm:$0xff] %vm464, %v462
      %v497 = vld [vmem:[#allocation2] sm:$0xff]
      %v498 = vld [vmem:[#allocation2 + $0x8] sm:$0xff]
      %v499 = vld [vmem:[#allocation2 + $0x10] sm:$0xff]
      %v500 = vld [vmem:[#allocation2 + $0x18] sm:$0xff]
      %v501 = vld [vmem:[#allocation2 + $0x20] sm:$0xff]
      %v502 = vld [vmem:[#allocation2 + $0x28] sm:$0xff]
      %v503 = vld [vmem:[#allocation2 + $0x30] sm:$0xff]
      %v504 = vld [vmem:[#allocation2 + $0x38] sm:$0xff]
      %v505 = vld [vmem:[#allocation2 + $0x40] sm:$0xff]
      %v506 = vld [vmem:[#allocation2 + $0x48] sm:$0xff]
      %v507 = vld [vmem:[#allocation2 + $0x50] sm:$0xff]
      %v508 = vld [vmem:[#allocation2 + $0x58] sm:$0xff]
      %v509 = vld [vmem:[#allocation2 + $0x60] sm:$0xff]
      %v510 = vld [vmem:[#allocation2 + $0x68] sm:$0xff]
      %v511 = vld [vmem:[#allocation2 + $0x70] sm:$0xff]
      %v512 = vld [vmem:[#allocation2 + $0x78] sm:$0xff]
      %v513 = vld [vmem:[#allocation2 + $0x80] sm:$0xff]
      %v514 = vld [vmem:[#allocation2 + $0x88] sm:$0xff]
      %v515 = vld [vmem:[#allocation2 + $0x90] sm:$0xff]
      %v516 = vld [vmem:[#allocation2 + $0x98] sm:$0xff]
      %v517 = vld [vmem:[#allocation2 + $0xa0] sm:$0xff]
      %v518 = vld [vmem:[#allocation2 + $0xa8] sm:$0xff]
      %v519 = vld [vmem:[#allocation2 + $0xb0] sm:$0xff]
      %v520 = vld [vmem:[#allocation2 + $0xb8] sm:$0xff]
      %v521 = vld [vmem:[#allocation2 + $0xc0] sm:$0xff]
      %v522 = vld [vmem:[#allocation2 + $0xc8] sm:$0xff]
      %v523 = vld [vmem:[#allocation2 + $0xd0] sm:$0xff]
      %v524 = vld [vmem:[#allocation2 + $0xd8] sm:$0xff]
      %v525 = vld [vmem:[#allocation2 + $0xe0] sm:$0xff]
      %v526 = vld [vmem:[#allocation2 + $0xe8] sm:$0xff]
      %v527 = vld [vmem:[#allocation2 + $0xf0] sm:$0xff]
      %v528 = vld [vmem:[#allocation2 + $0xf8] sm:$0xff]
      %v529 = vld [vmem:[#allocation2 + $0x100] sm:$0xff]
      %v530 = vld [vmem:[#allocation2 + $0x108] sm:$0xff]
      %v531 = vld [vmem:[#allocation2 + $0x110] sm:$0xff]
      %v532 = vld [vmem:[#allocation2 + $0x118] sm:$0xff]
      %v533 = vld [vmem:[#allocation2 + $0x120] sm:$0xff]
      %v534 = vld [vmem:[#allocation2 + $0x128] sm:$0xff]
      %v535 = vld [vmem:[#allocation2 + $0x130] sm:$0xff]
      %v536 = vld [vmem:[#allocation2 + $0x138] sm:$0xff]
      %v537 = vld [vmem:[#allocation2 + $0x140] sm:$0xff]
      %v538 = vld [vmem:[#allocation2 + $0x148] sm:$0xff]
      %v539 = vld [vmem:[#allocation2 + $0x150] sm:$0xff]
      %v540 = vld [vmem:[#allocation2 + $0x158] sm:$0xff]
      %v541 = vld [vmem:[#allocation2 + $0x160] sm:$0xff]
      %v542 = vld [vmem:[#allocation2 + $0x168] sm:$0xff]
      %v543 = vld [vmem:[#allocation2 + $0x170] sm:$0xff]
      %v544 = vld [vmem:[#allocation2 + $0x178] sm:$0xff]
      %v545 = vld [vmem:[#allocation2 + $0x180] sm:$0xff]
      %v546 = vld [vmem:[#allocation2 + $0x188] sm:$0xff]
      %v547 = vld [vmem:[#allocation2 + $0x190] sm:$0xff]
      %v548 = vld [vmem:[#allocation2 + $0x198] sm:$0xff]
      %v549 = vld [vmem:[#allocation2 + $0x1a0] sm:$0xff]
      %v550 = vld [vmem:[#allocation2 + $0x1a8] sm:$0xff]
      %v551 = vld [vmem:[#allocation2 + $0x1b0] sm:$0xff]
      %v552 = vld [vmem:[#allocation2 + $0x1b8] sm:$0xff]
      %v553 = vld [vmem:[#allocation2 + $0x1c0] sm:$0xff]
      %v554 = vld [vmem:[#allocation2 + $0x1c8] sm:$0xff]
      %v555 = vld [vmem:[#allocation2 + $0x1d0] sm:$0xff]
      %v556 = vld [vmem:[#allocation2 + $0x1d8] sm:$0xff]
      %v557 = vld [vmem:[#allocation2 + $0x1e0] sm:$0xff]
      %v558 = vld [vmem:[#allocation2 + $0x1e8] sm:$0xff]
      %v559 = vld [vmem:[#allocation2 + $0x1f0] sm:$0xff]
      %v560 = vld [vmem:[#allocation2 + $0x1f8] sm:$0xff]
      %v561 = vld [vmem:[#allocation2 + $0x200] sm:$0xff]
      %v562 = vld [vmem:[#allocation2 + $0x208] sm:$0xff]
      %v563 = vld [vmem:[#allocation2 + $0x210] sm:$0xff]
      %v564 = vld [vmem:[#allocation2 + $0x218] sm:$0xff]
      %v565 = vld [vmem:[#allocation2 + $0x220] sm:$0xff]
      %v566 = vld [vmem:[#allocation2 + $0x228] sm:$0xff]
      %v567 = vld [vmem:[#allocation2 + $0x230] sm:$0xff]
      %v568 = vld [vmem:[#allocation2 + $0x238] sm:$0xff]
      %v569 = vld [vmem:[%s301] sm:$0xff]
      %v570 = vld [vmem:[%s301 + $0x8] sm:$0x1]
      %v571 = vlaneseq
      %v572 = vshrl.u32 %v571, 7
      %v573 = vsub.s32 0, %v572
      %v574 = vrot.slane %v569, %v573
      %v575 = vmul.f32 %v497, %v574
      %v576 = vmul.f32 %v498, %v574
      %v577 = vmul.f32 %v499, %v574
      %v578 = vmul.f32 %v501, %v574
      %v579 = vmul.f32 %v502, %v574
      %v580 = vmul.f32 %v503, %v574
      %v581 = vmul.f32 %v505, %v574
      %v582 = vmul.f32 %v506, %v574
      %v583 = vmul.f32 %v507, %v574
      %v584 = vmul.f32 %v509, %v574
      %v585 = vmul.f32 %v510, %v574
      %v586 = vmul.f32 %v511, %v574
      %v587 = vmul.f32 %v513, %v574
      %v588 = vmul.f32 %v514, %v574
      %v589 = vmul.f32 %v515, %v574
      %v590 = vmul.f32 %v517, %v574
      %v591 = vmul.f32 %v518, %v574
      %v592 = vmul.f32 %v519, %v574
      %v593 = vmul.f32 %v521, %v574
      %v594 = vmul.f32 %v522, %v574
      %v595 = vmul.f32 %v523, %v574
      %v596 = vmul.f32 %v525, %v574
      %v597 = vmul.f32 %v526, %v574
      %v598 = vmul.f32 %v527, %v574
      %v599 = vmul.f32 %v529, %v574
      %v600 = vmul.f32 %v530, %v574
      %v601 = vmul.f32 %v531, %v574
      %v602 = vmul.f32 %v533, %v574
      %v603 = vmul.f32 %v534, %v574
      %v604 = vmul.f32 %v535, %v574
      %v605 = vmul.f32 %v537, %v574
      %v606 = vmul.f32 %v538, %v574
      %v607 = vmul.f32 %v539, %v574
      %v608 = vmul.f32 %v541, %v574
      %v609 = vmul.f32 %v542, %v574
      %v610 = vmul.f32 %v543, %v574
      %v611 = vmul.f32 %v545, %v574
      %v612 = vmul.f32 %v546, %v574
      %v613 = vmul.f32 %v547, %v574
      %v614 = vmul.f32 %v549, %v574
      %v615 = vmul.f32 %v550, %v574
      %v616 = vmul.f32 %v551, %v574
      %v617 = vmul.f32 %v553, %v574
      %v618 = vmul.f32 %v554, %v574
      %v619 = vmul.f32 %v555, %v574
      %v620 = vmul.f32 %v557, %v574
      %v621 = vmul.f32 %v558, %v574
      %v622 = vmul.f32 %v559, %v574
      %v623 = vlaneseq
      %v624 = vshrl.u32 %v623, 7
      %v625 = vsub.s32 1, %v624
      %v626 = vrot.slane %v569, %v625
      %v627 = vmul.f32 %v498, %v626
      %v628 = vmul.f32 %v499, %v626
      %v629 = vmul.f32 %v502, %v626
      %v630 = vmul.f32 %v503, %v626
      %v631 = vmul.f32 %v506, %v626
      %v632 = vmul.f32 %v507, %v626
      %v633 = vmul.f32 %v510, %v626
      %v634 = vmul.f32 %v511, %v626
      %v635 = vmul.f32 %v514, %v626
      %v636 = vmul.f32 %v515, %v626
      %v637 = vmul.f32 %v518, %v626
      %v638 = vmul.f32 %v519, %v626
      %v639 = vmul.f32 %v522, %v626
      %v640 = vmul.f32 %v523, %v626
      %v641 = vmul.f32 %v526, %v626
      %v642 = vmul.f32 %v527, %v626
      %v643 = vmul.f32 %v530, %v626
      %v644 = vmul.f32 %v531, %v626
      %v645 = vmul.f32 %v534, %v626
      %v646 = vmul.f32 %v535, %v626
      %v647 = vmul.f32 %v538, %v626
      %v648 = vmul.f32 %v539, %v626
      %v649 = vmul.f32 %v542, %v626
      %v650 = vmul.f32 %v543, %v626
      %v651 = vmul.f32 %v546, %v626
      %v652 = vmul.f32 %v547, %v626
      %v653 = vmul.f32 %v550, %v626
      %v654 = vmul.f32 %v551, %v626
      %v655 = vmul.f32 %v554, %v626
      %v656 = vmul.f32 %v555, %v626
      %v657 = vmul.f32 %v558, %v626
      %v658 = vmul.f32 %v559, %v626
      %vm691 = vcmask 1046528
      %v692 = vrot.slane %v627, 1
      %v693 = vrot.slane %v628, 1
      %v694 = vsel %vm691, %v692, %v693
      %v695 = vrot.slane %v629, 1
      %v696 = vrot.slane %v630, 1
      %v697 = vsel %vm691, %v695, %v696
      %v698 = vrot.slane %v631, 1
      %v699 = vrot.slane %v632, 1
      %v700 = vsel %vm691, %v698, %v699
      %v701 = vrot.slane %v633, 1
      %v702 = vrot.slane %v634, 1
      %v703 = vsel %vm691, %v701, %v702
      %v704 = vrot.slane %v635, 1
      %v705 = vrot.slane %v636, 1
      %v706 = vsel %vm691, %v704, %v705
      %v707 = vrot.slane %v637, 1
      %v708 = vrot.slane %v638, 1
      %v709 = vsel %vm691, %v707, %v708
      %v710 = vrot.slane %v639, 1
      %v711 = vrot.slane %v640, 1
      %v712 = vsel %vm691, %v710, %v711
      %v713 = vrot.slane %v641, 1
      %v714 = vrot.slane %v642, 1
      %v715 = vsel %vm691, %v713, %v714
      %v716 = vrot.slane %v643, 1
      %v717 = vrot.slane %v644, 1
      %v718 = vsel %vm691, %v716, %v717
      %v719 = vrot.slane %v645, 1
      %v720 = vrot.slane %v646, 1
      %v721 = vsel %vm691, %v719, %v720
      %v722 = vrot.slane %v647, 1
      %v723 = vrot.slane %v648, 1
      %v724 = vsel %vm691, %v722, %v723
      %v725 = vrot.slane %v649, 1
      %v726 = vrot.slane %v650, 1
      %v727 = vsel %vm691, %v725, %v726
      %v728 = vrot.slane %v651, 1
      %v729 = vrot.slane %v652, 1
      %v730 = vsel %vm691, %v728, %v729
      %v731 = vrot.slane %v653, 1
      %v732 = vrot.slane %v654, 1
      %v733 = vsel %vm691, %v731, %v732
      %v734 = vrot.slane %v655, 1
      %v735 = vrot.slane %v656, 1
      %v736 = vsel %vm691, %v734, %v735
      %v737 = vrot.slane %v657, 1
      %v738 = vrot.slane %v658, 1
      %v739 = vsel %vm691, %v737, %v738
      %v788 = vadd.f32 %v575, %v692
      %v789 = vadd.f32 %v576, %v694
      %v790 = vadd.f32 %v577, %v693
      %v791 = vadd.f32 %v578, %v695
      %v792 = vadd.f32 %v579, %v697
      %v793 = vadd.f32 %v580, %v696
      %v794 = vadd.f32 %v581, %v698
      %v795 = vadd.f32 %v582, %v700
      %v796 = vadd.f32 %v583, %v699
      %v797 = vadd.f32 %v584, %v701
      %v798 = vadd.f32 %v585, %v703
      %v799 = vadd.f32 %v586, %v702
      %v800 = vadd.f32 %v587, %v704
      %v801 = vadd.f32 %v588, %v706
      %v802 = vadd.f32 %v589, %v705
      %v803 = vadd.f32 %v590, %v707
      %v804 = vadd.f32 %v591, %v709
      %v805 = vadd.f32 %v592, %v708
      %v806 = vadd.f32 %v593, %v710
      %v807 = vadd.f32 %v594, %v712
      %v808 = vadd.f32 %v595, %v711
      %v809 = vadd.f32 %v596, %v713
      %v810 = vadd.f32 %v597, %v715
      %v811 = vadd.f32 %v598, %v714
      %v812 = vadd.f32 %v599, %v716
      %v813 = vadd.f32 %v600, %v718
      %v814 = vadd.f32 %v601, %v717
      %v815 = vadd.f32 %v602, %v719
      %v816 = vadd.f32 %v603, %v721
      %v817 = vadd.f32 %v604, %v720
      %v818 = vadd.f32 %v605, %v722
      %v819 = vadd.f32 %v606, %v724
      %v820 = vadd.f32 %v607, %v723
      %v821 = vadd.f32 %v608, %v725
      %v822 = vadd.f32 %v609, %v727
      %v823 = vadd.f32 %v610, %v726
      %v824 = vadd.f32 %v611, %v728
      %v825 = vadd.f32 %v612, %v730
      %v826 = vadd.f32 %v613, %v729
      %v827 = vadd.f32 %v614, %v731
      %v828 = vadd.f32 %v615, %v733
      %v829 = vadd.f32 %v616, %v732
      %v830 = vadd.f32 %v617, %v734
      %v831 = vadd.f32 %v618, %v736
      %v832 = vadd.f32 %v619, %v735
      %v833 = vadd.f32 %v620, %v737
      %v834 = vadd.f32 %v621, %v739
      %v835 = vadd.f32 %v622, %v738
      %v836 = vlaneseq
      %v837 = vshrl.u32 %v836, 7
      %v838 = vsub.s32 2, %v837
      %v839 = vrot.slane %v569, %v838
      %v840 = vmul.f32 %v498, %v839
      %v841 = vmul.f32 %v499, %v839
      %v842 = vmul.f32 %v500, %v839
      %v843 = vmul.f32 %v502, %v839
      %v844 = vmul.f32 %v503, %v839
      %v845 = vmul.f32 %v504, %v839
      %v846 = vmul.f32 %v506, %v839
      %v847 = vmul.f32 %v507, %v839
      %v848 = vmul.f32 %v508, %v839
      %v849 = vmul.f32 %v510, %v839
      %v850 = vmul.f32 %v511, %v839
      %v851 = vmul.f32 %v512, %v839
      %v852 = vmul.f32 %v514, %v839
      %v853 = vmul.f32 %v515, %v839
      %v854 = vmul.f32 %v516, %v839
      %v855 = vmul.f32 %v518, %v839
      %v856 = vmul.f32 %v519, %v839
      %v857 = vmul.f32 %v520, %v839
      %v858 = vmul.f32 %v522, %v839
      %v859 = vmul.f32 %v523, %v839
      %v860 = vmul.f32 %v524, %v839
      %v861 = vmul.f32 %v526, %v839
      %v862 = vmul.f32 %v527, %v839
      %v863 = vmul.f32 %v528, %v839
      %v864 = vmul.f32 %v530, %v839
      %v865 = vmul.f32 %v531, %v839
      %v866 = vmul.f32 %v532, %v839
      %v867 = vmul.f32 %v534, %v839
      %v868 = vmul.f32 %v535, %v839
      %v869 = vmul.f32 %v536, %v839
      %v870 = vmul.f32 %v538, %v839
      %v871 = vmul.f32 %v539, %v839
      %v872 = vmul.f32 %v540, %v839
      %v873 = vmul.f32 %v542, %v839
      %v874 = vmul.f32 %v543, %v839
      %v875 = vmul.f32 %v544, %v839
      %v876 = vmul.f32 %v546, %v839
      %v877 = vmul.f32 %v547, %v839
      %v878 = vmul.f32 %v548, %v839
      %v879 = vmul.f32 %v550, %v839
      %v880 = vmul.f32 %v551, %v839
      %v881 = vmul.f32 %v552, %v839
      %v882 = vmul.f32 %v554, %v839
      %v883 = vmul.f32 %v555, %v839
      %v884 = vmul.f32 %v556, %v839
      %v885 = vmul.f32 %v558, %v839
      %v886 = vmul.f32 %v559, %v839
      %v887 = vmul.f32 %v560, %v839
      %vm936 = vcmask 1045504
      %v937 = vrot.slane %v840, 2
      %v938 = vrot.slane %v841, 2
      %v939 = vsel %vm936, %v937, %v938
      %v940 = vrot.slane %v842, 2
      %v941 = vsel %vm936, %v938, %v940
      %v942 = vrot.slane %v843, 2
      %v943 = vrot.slane %v844, 2
      %v944 = vsel %vm936, %v942, %v943
      %v945 = vrot.slane %v845, 2
      %v946 = vsel %vm936, %v943, %v945
      %v947 = vrot.slane %v846, 2
      %v948 = vrot.slane %v847, 2
      %v949 = vsel %vm936, %v947, %v948
      %v950 = vrot.slane %v848, 2
      %v951 = vsel %vm936, %v948, %v950
      %v952 = vrot.slane %v849, 2
      %v953 = vrot.slane %v850, 2
      %v954 = vsel %vm936, %v952, %v953
      %v955 = vrot.slane %v851, 2
      %v956 = vsel %vm936, %v953, %v955
      %v957 = vrot.slane %v852, 2
      %v958 = vrot.slane %v853, 2
      %v959 = vsel %vm936, %v957, %v958
      %v960 = vrot.slane %v854, 2
      %v961 = vsel %vm936, %v958, %v960
      %v962 = vrot.slane %v855, 2
      %v963 = vrot.slane %v856, 2
      %v964 = vsel %vm936, %v962, %v963
      %v965 = vrot.slane %v857, 2
      %v966 = vsel %vm936, %v963, %v965
      %v967 = vrot.slane %v858, 2
      %v968 = vrot.slane %v859, 2
      %v969 = vsel %vm936, %v967, %v968
      %v970 = vrot.slane %v860, 2
      %v971 = vsel %vm936, %v968, %v970
      %v972 = vrot.slane %v861, 2
      %v973 = vrot.slane %v862, 2
      %v974 = vsel %vm936, %v972, %v973
      %v975 = vrot.slane %v863, 2
      %v976 = vsel %vm936, %v973, %v975
      %v977 = vrot.slane %v864, 2
      %v978 = vrot.slane %v865, 2
      %v979 = vsel %vm936, %v977, %v978
      %v980 = vrot.slane %v866, 2
      %v981 = vsel %vm936, %v978, %v980
      %v982 = vrot.slane %v867, 2
      %v983 = vrot.slane %v868, 2
      %v984 = vsel %vm936, %v982, %v983
      %v985 = vrot.slane %v869, 2
      %v986 = vsel %vm936, %v983, %v985
      %v987 = vrot.slane %v870, 2
      %v988 = vrot.slane %v871, 2
      %v989 = vsel %vm936, %v987, %v988
      %v990 = vrot.slane %v872, 2
      %v991 = vsel %vm936, %v988, %v990
      %v992 = vrot.slane %v873, 2
      %v993 = vrot.slane %v874, 2
      %v994 = vsel %vm936, %v992, %v993
      %v995 = vrot.slane %v875, 2
      %v996 = vsel %vm936, %v993, %v995
      %v997 = vrot.slane %v876, 2
      %v998 = vrot.slane %v877, 2
      %v999 = vsel %vm936, %v997, %v998
      %v1000 = vrot.slane %v878, 2
      %v1001 = vsel %vm936, %v998, %v1000
      %v1002 = vrot.slane %v879, 2
      %v1003 = vrot.slane %v880, 2
      %v1004 = vsel %vm936, %v1002, %v1003
      %v1005 = vrot.slane %v881, 2
      %v1006 = vsel %vm936, %v1003, %v1005
      %v1007 = vrot.slane %v882, 2
      %v1008 = vrot.slane %v883, 2
      %v1009 = vsel %vm936, %v1007, %v1008
      %v1010 = vrot.slane %v884, 2
      %v1011 = vsel %vm936, %v1008, %v1010
      %v1012 = vrot.slane %v885, 2
      %v1013 = vrot.slane %v886, 2
      %v1014 = vsel %vm936, %v1012, %v1013
      %v1015 = vrot.slane %v887, 2
      %v1016 = vsel %vm936, %v1013, %v1015
      %v1065 = vadd.f32 %v788, %v937
      %v1066 = vadd.f32 %v789, %v939
      %v1067 = vadd.f32 %v790, %v941
      %v1068 = vadd.f32 %v791, %v942
      %v1069 = vadd.f32 %v792, %v944
      %v1070 = vadd.f32 %v793, %v946
      %v1071 = vadd.f32 %v794, %v947
      %v1072 = vadd.f32 %v795, %v949
      %v1073 = vadd.f32 %v796, %v951
      %v1074 = vadd.f32 %v797, %v952
      %v1075 = vadd.f32 %v798, %v954
      %v1076 = vadd.f32 %v799, %v956
      %v1077 = vadd.f32 %v800, %v957
      %v1078 = vadd.f32 %v801, %v959
      %v1079 = vadd.f32 %v802, %v961
      %v1080 = vadd.f32 %v803, %v962
      %v1081 = vadd.f32 %v804, %v964
      %v1082 = vadd.f32 %v805, %v966
      %v1083 = vadd.f32 %v806, %v967
      %v1084 = vadd.f32 %v807, %v969
      %v1085 = vadd.f32 %v808, %v971
      %v1086 = vadd.f32 %v809, %v972
      %v1087 = vadd.f32 %v810, %v974
      %v1088 = vadd.f32 %v811, %v976
      %v1089 = vadd.f32 %v812, %v977
      %v1090 = vadd.f32 %v813, %v979
      %v1091 = vadd.f32 %v814, %v981
      %v1092 = vadd.f32 %v815, %v982
      %v1093 = vadd.f32 %v816, %v984
      %v1094 = vadd.f32 %v817, %v986
      %v1095 = vadd.f32 %v818, %v987
      %v1096 = vadd.f32 %v819, %v989
      %v1097 = vadd.f32 %v820, %v991
      %v1098 = vadd.f32 %v821, %v992
      %v1099 = vadd.f32 %v822, %v994
      %v1100 = vadd.f32 %v823, %v996
      %v1101 = vadd.f32 %v824, %v997
      %v1102 = vadd.f32 %v825, %v999
      %v1103 = vadd.f32 %v826, %v1001
      %v1104 = vadd.f32 %v827, %v1002
      %v1105 = vadd.f32 %v828, %v1004
      %v1106 = vadd.f32 %v829, %v1006
      %v1107 = vadd.f32 %v830, %v1007
      %v1108 = vadd.f32 %v831, %v1009
      %v1109 = vadd.f32 %v832, %v1011
      %v1110 = vadd.f32 %v833, %v1012
      %v1111 = vadd.f32 %v834, %v1014
      %v1112 = vadd.f32 %v835, %v1016
      %v1113 = vlaneseq
      %v1114 = vshrl.u32 %v1113, 7
      %v1115 = vsub.s32 3, %v1114
      %v1116 = vrot.slane %v569, %v1115
      %v1117 = vmul.f32 %v501, %v1116
      %v1118 = vmul.f32 %v502, %v1116
      %v1119 = vmul.f32 %v503, %v1116
      %v1120 = vmul.f32 %v505, %v1116
      %v1121 = vmul.f32 %v506, %v1116
      %v1122 = vmul.f32 %v507, %v1116
      %v1123 = vmul.f32 %v509, %v1116
      %v1124 = vmul.f32 %v510, %v1116
      %v1125 = vmul.f32 %v511, %v1116
      %v1126 = vmul.f32 %v513, %v1116
      %v1127 = vmul.f32 %v514, %v1116
      %v1128 = vmul.f32 %v515, %v1116
      %v1129 = vmul.f32 %v517, %v1116
      %v1130 = vmul.f32 %v518, %v1116
      %v1131 = vmul.f32 %v519, %v1116
      %v1132 = vmul.f32 %v521, %v1116
      %v1133 = vmul.f32 %v522, %v1116
      %v1134 = vmul.f32 %v523, %v1116
      %v1135 = vmul.f32 %v525, %v1116
      %v1136 = vmul.f32 %v526, %v1116
      %v1137 = vmul.f32 %v527, %v1116
      %v1138 = vmul.f32 %v529, %v1116
      %v1139 = vmul.f32 %v530, %v1116
      %v1140 = vmul.f32 %v531, %v1116
      %v1141 = vmul.f32 %v533, %v1116
      %v1142 = vmul.f32 %v534, %v1116
      %v1143 = vmul.f32 %v535, %v1116
      %v1144 = vmul.f32 %v537, %v1116
      %v1145 = vmul.f32 %v538, %v1116
      %v1146 = vmul.f32 %v539, %v1116
      %v1147 = vmul.f32 %v541, %v1116
      %v1148 = vmul.f32 %v542, %v1116
      %v1149 = vmul.f32 %v543, %v1116
      %v1150 = vmul.f32 %v545, %v1116
      %v1151 = vmul.f32 %v546, %v1116
      %v1152 = vmul.f32 %v547, %v1116
      %v1153 = vmul.f32 %v549, %v1116
      %v1154 = vmul.f32 %v550, %v1116
      %v1155 = vmul.f32 %v551, %v1116
      %v1156 = vmul.f32 %v553, %v1116
      %v1157 = vmul.f32 %v554, %v1116
      %v1158 = vmul.f32 %v555, %v1116
      %v1159 = vmul.f32 %v557, %v1116
      %v1160 = vmul.f32 %v558, %v1116
      %v1161 = vmul.f32 %v559, %v1116
      %v1162 = vmul.f32 %v561, %v1116
      %v1163 = vmul.f32 %v562, %v1116
      %v1164 = vmul.f32 %v563, %v1116
      %v1165 = vadd.f32 %v1065, %v1117
      %v1166 = vadd.f32 %v1066, %v1118
      %v1167 = vadd.f32 %v1067, %v1119
      %v1168 = vadd.f32 %v1068, %v1120
      %v1169 = vadd.f32 %v1069, %v1121
      %v1170 = vadd.f32 %v1070, %v1122
      %v1171 = vadd.f32 %v1071, %v1123
      %v1172 = vadd.f32 %v1072, %v1124
      %v1173 = vadd.f32 %v1073, %v1125
      %v1174 = vadd.f32 %v1074, %v1126
      %v1175 = vadd.f32 %v1075, %v1127
      %v1176 = vadd.f32 %v1076, %v1128
      %v1177 = vadd.f32 %v1077, %v1129
      %v1178 = vadd.f32 %v1078, %v1130
      %v1179 = vadd.f32 %v1079, %v1131
      %v1180 = vadd.f32 %v1080, %v1132
      %v1181 = vadd.f32 %v1081, %v1133
      %v1182 = vadd.f32 %v1082, %v1134
      %v1183 = vadd.f32 %v1083, %v1135
      %v1184 = vadd.f32 %v1084, %v1136
      %v1185 = vadd.f32 %v1085, %v1137
      %v1186 = vadd.f32 %v1086, %v1138
      %v1187 = vadd.f32 %v1087, %v1139
      %v1188 = vadd.f32 %v1088, %v1140
      %v1189 = vadd.f32 %v1089, %v1141
      %v1190 = vadd.f32 %v1090, %v1142
      %v1191 = vadd.f32 %v1091, %v1143
      %v1192 = vadd.f32 %v1092, %v1144
      %v1193 = vadd.f32 %v1093, %v1145
      %v1194 = vadd.f32 %v1094, %v1146
      %v1195 = vadd.f32 %v1095, %v1147
      %v1196 = vadd.f32 %v1096, %v1148
      %v1197 = vadd.f32 %v1097, %v1149
      %v1198 = vadd.f32 %v1098, %v1150
      %v1199 = vadd.f32 %v1099, %v1151
      %v1200 = vadd.f32 %v1100, %v1152
      %v1201 = vadd.f32 %v1101, %v1153
      %v1202 = vadd.f32 %v1102, %v1154
      %v1203 = vadd.f32 %v1103, %v1155
      %v1204 = vadd.f32 %v1104, %v1156
      %v1205 = vadd.f32 %v1105, %v1157
      %v1206 = vadd.f32 %v1106, %v1158
      %v1207 = vadd.f32 %v1107, %v1159
      %v1208 = vadd.f32 %v1108, %v1160
      %v1209 = vadd.f32 %v1109, %v1161
      %v1210 = vadd.f32 %v1110, %v1162
      %v1211 = vadd.f32 %v1111, %v1163
      %v1212 = vadd.f32 %v1112, %v1164
      %v1213 = vlaneseq
      %v1214 = vshrl.u32 %v1213, 7
      %v1215 = vsub.s32 4, %v1214
      %v1216 = vrot.slane %v569, %v1215
      %v1217 = vmul.f32 %v502, %v1216
      %v1218 = vmul.f32 %v503, %v1216
      %v1219 = vmul.f32 %v506, %v1216
      %v1220 = vmul.f32 %v507, %v1216
      %v1221 = vmul.f32 %v510, %v1216
      %v1222 = vmul.f32 %v511, %v1216
      %v1223 = vmul.f32 %v514, %v1216
      %v1224 = vmul.f32 %v515, %v1216
      %v1225 = vmul.f32 %v518, %v1216
      %v1226 = vmul.f32 %v519, %v1216
      %v1227 = vmul.f32 %v522, %v1216
      %v1228 = vmul.f32 %v523, %v1216
      %v1229 = vmul.f32 %v526, %v1216
      %v1230 = vmul.f32 %v527, %v1216
      %v1231 = vmul.f32 %v530, %v1216
      %v1232 = vmul.f32 %v531, %v1216
      %v1233 = vmul.f32 %v534, %v1216
      %v1234 = vmul.f32 %v535, %v1216
      %v1235 = vmul.f32 %v538, %v1216
      %v1236 = vmul.f32 %v539, %v1216
      %v1237 = vmul.f32 %v542, %v1216
      %v1238 = vmul.f32 %v543, %v1216
      %v1239 = vmul.f32 %v546, %v1216
      %v1240 = vmul.f32 %v547, %v1216
      %v1241 = vmul.f32 %v550, %v1216
      %v1242 = vmul.f32 %v551, %v1216
      %v1243 = vmul.f32 %v554, %v1216
      %v1244 = vmul.f32 %v555, %v1216
      %v1245 = vmul.f32 %v558, %v1216
      %v1246 = vmul.f32 %v559, %v1216
      %v1247 = vmul.f32 %v562, %v1216
      %v1248 = vmul.f32 %v563, %v1216
      %v1281 = vrot.slane %v1217, 1
      %v1282 = vrot.slane %v1218, 1
      %v1283 = vsel %vm691, %v1281, %v1282
      %v1284 = vrot.slane %v1219, 1
      %v1285 = vrot.slane %v1220, 1
      %v1286 = vsel %vm691, %v1284, %v1285
      %v1287 = vrot.slane %v1221, 1
      %v1288 = vrot.slane %v1222, 1
      %v1289 = vsel %vm691, %v1287, %v1288
      %v1290 = vrot.slane %v1223, 1
      %v1291 = vrot.slane %v1224, 1
      %v1292 = vsel %vm691, %v1290, %v1291
      %v1293 = vrot.slane %v1225, 1
      %v1294 = vrot.slane %v1226, 1
      %v1295 = vsel %vm691, %v1293, %v1294
      %v1296 = vrot.slane %v1227, 1
      %v1297 = vrot.slane %v1228, 1
      %v1298 = vsel %vm691, %v1296, %v1297
      %v1299 = vrot.slane %v1229, 1
      %v1300 = vrot.slane %v1230, 1
      %v1301 = vsel %vm691, %v1299, %v1300
      %v1302 = vrot.slane %v1231, 1
      %v1303 = vrot.slane %v1232, 1
      %v1304 = vsel %vm691, %v1302, %v1303
      %v1305 = vrot.slane %v1233, 1
      %v1306 = vrot.slane %v1234, 1
      %v1307 = vsel %vm691, %v1305, %v1306
      %v1308 = vrot.slane %v1235, 1
      %v1309 = vrot.slane %v1236, 1
      %v1310 = vsel %vm691, %v1308, %v1309
      %v1311 = vrot.slane %v1237, 1
      %v1312 = vrot.slane %v1238, 1
      %v1313 = vsel %vm691, %v1311, %v1312
      %v1314 = vrot.slane %v1239, 1
      %v1315 = vrot.slane %v1240, 1
      %v1316 = vsel %vm691, %v1314, %v1315
      %v1317 = vrot.slane %v1241, 1
      %v1318 = vrot.slane %v1242, 1
      %v1319 = vsel %vm691, %v1317, %v1318
      %v1320 = vrot.slane %v1243, 1
      %v1321 = vrot.slane %v1244, 1
      %v1322 = vsel %vm691, %v1320, %v1321
      %v1323 = vrot.slane %v1245, 1
      %v1324 = vrot.slane %v1246, 1
      %v1325 = vsel %vm691, %v1323, %v1324
      %v1326 = vrot.slane %v1247, 1
      %v1327 = vrot.slane %v1248, 1
      %v1328 = vsel %vm691, %v1326, %v1327
      %v1377 = vadd.f32 %v1165, %v1281
      %v1378 = vadd.f32 %v1166, %v1283
      %v1379 = vadd.f32 %v1167, %v1282
      %v1380 = vadd.f32 %v1168, %v1284
      %v1381 = vadd.f32 %v1169, %v1286
      %v1382 = vadd.f32 %v1170, %v1285
      %v1383 = vadd.f32 %v1171, %v1287
      %v1384 = vadd.f32 %v1172, %v1289
      %v1385 = vadd.f32 %v1173, %v1288
      %v1386 = vadd.f32 %v1174, %v1290
      %v1387 = vadd.f32 %v1175, %v1292
      %v1388 = vadd.f32 %v1176, %v1291
      %v1389 = vadd.f32 %v1177, %v1293
      %v1390 = vadd.f32 %v1178, %v1295
      %v1391 = vadd.f32 %v1179, %v1294
      %v1392 = vadd.f32 %v1180, %v1296
      %v1393 = vadd.f32 %v1181, %v1298
      %v1394 = vadd.f32 %v1182, %v1297
      %v1395 = vadd.f32 %v1183, %v1299
      %v1396 = vadd.f32 %v1184, %v1301
      %v1397 = vadd.f32 %v1185, %v1300
      %v1398 = vadd.f32 %v1186, %v1302
      %v1399 = vadd.f32 %v1187, %v1304
      %v1400 = vadd.f32 %v1188, %v1303
      %v1401 = vadd.f32 %v1189, %v1305
      %v1402 = vadd.f32 %v1190, %v1307
      %v1403 = vadd.f32 %v1191, %v1306
      %v1404 = vadd.f32 %v1192, %v1308
      %v1405 = vadd.f32 %v1193, %v1310
      %v1406 = vadd.f32 %v1194, %v1309
      %v1407 = vadd.f32 %v1195, %v1311
      %v1408 = vadd.f32 %v1196, %v1313
      %v1409 = vadd.f32 %v1197, %v1312
      %v1410 = vadd.f32 %v1198, %v1314
      %v1411 = vadd.f32 %v1199, %v1316
      %v1412 = vadd.f32 %v1200, %v1315
      %v1413 = vadd.f32 %v1201, %v1317
      %v1414 = vadd.f32 %v1202, %v1319
      %v1415 = vadd.f32 %v1203, %v1318
      %v1416 = vadd.f32 %v1204, %v1320
      %v1417 = vadd.f32 %v1205, %v1322
      %v1418 = vadd.f32 %v1206, %v1321
      %v1419 = vadd.f32 %v1207, %v1323
      %v1420 = vadd.f32 %v1208, %v1325
      %v1421 = vadd.f32 %v1209, %v1324
      %v1422 = vadd.f32 %v1210, %v1326
      %v1423 = vadd.f32 %v1211, %v1328
      %v1424 = vadd.f32 %v1212, %v1327
      %v1425 = vlaneseq
      %v1426 = vshrl.u32 %v1425, 7
      %v1427 = vsub.s32 5, %v1426
      %v1428 = vrot.slane %v569, %v1427
      %v1429 = vmul.f32 %v502, %v1428
      %v1430 = vmul.f32 %v503, %v1428
      %v1431 = vmul.f32 %v504, %v1428
      %v1432 = vmul.f32 %v506, %v1428
      %v1433 = vmul.f32 %v507, %v1428
      %v1434 = vmul.f32 %v508, %v1428
      %v1435 = vmul.f32 %v510, %v1428
      %v1436 = vmul.f32 %v511, %v1428
      %v1437 = vmul.f32 %v512, %v1428
      %v1438 = vmul.f32 %v514, %v1428
      %v1439 = vmul.f32 %v515, %v1428
      %v1440 = vmul.f32 %v516, %v1428
      %v1441 = vmul.f32 %v518, %v1428
      %v1442 = vmul.f32 %v519, %v1428
      %v1443 = vmul.f32 %v520, %v1428
      %v1444 = vmul.f32 %v522, %v1428
      %v1445 = vmul.f32 %v523, %v1428
      %v1446 = vmul.f32 %v524, %v1428
      %v1447 = vmul.f32 %v526, %v1428
      %v1448 = vmul.f32 %v527, %v1428
      %v1449 = vmul.f32 %v528, %v1428
      %v1450 = vmul.f32 %v530, %v1428
      %v1451 = vmul.f32 %v531, %v1428
      %v1452 = vmul.f32 %v532, %v1428
      %v1453 = vmul.f32 %v534, %v1428
      %v1454 = vmul.f32 %v535, %v1428
      %v1455 = vmul.f32 %v536, %v1428
      %v1456 = vmul.f32 %v538, %v1428
      %v1457 = vmul.f32 %v539, %v1428
      %v1458 = vmul.f32 %v540, %v1428
      %v1459 = vmul.f32 %v542, %v1428
      %v1460 = vmul.f32 %v543, %v1428
      %v1461 = vmul.f32 %v544, %v1428
      %v1462 = vmul.f32 %v546, %v1428
      %v1463 = vmul.f32 %v547, %v1428
      %v1464 = vmul.f32 %v548, %v1428
      %v1465 = vmul.f32 %v550, %v1428
      %v1466 = vmul.f32 %v551, %v1428
      %v1467 = vmul.f32 %v552, %v1428
      %v1468 = vmul.f32 %v554, %v1428
      %v1469 = vmul.f32 %v555, %v1428
      %v1470 = vmul.f32 %v556, %v1428
      %v1471 = vmul.f32 %v558, %v1428
      %v1472 = vmul.f32 %v559, %v1428
      %v1473 = vmul.f32 %v560, %v1428
      %v1474 = vmul.f32 %v562, %v1428
      %v1475 = vmul.f32 %v563, %v1428
      %v1476 = vmul.f32 %v564, %v1428
      %v1525 = vrot.slane %v1429, 2
      %v1526 = vrot.slane %v1430, 2
      %v1527 = vsel %vm936, %v1525, %v1526
      %v1528 = vrot.slane %v1431, 2
      %v1529 = vsel %vm936, %v1526, %v1528
      %v1530 = vrot.slane %v1432, 2
      %v1531 = vrot.slane %v1433, 2
      %v1532 = vsel %vm936, %v1530, %v1531
      %v1533 = vrot.slane %v1434, 2
      %v1534 = vsel %vm936, %v1531, %v1533
      %v1535 = vrot.slane %v1435, 2
      %v1536 = vrot.slane %v1436, 2
      %v1537 = vsel %vm936, %v1535, %v1536
      %v1538 = vrot.slane %v1437, 2
      %v1539 = vsel %vm936, %v1536, %v1538
      %v1540 = vrot.slane %v1438, 2
      %v1541 = vrot.slane %v1439, 2
      %v1542 = vsel %vm936, %v1540, %v1541
      %v1543 = vrot.slane %v1440, 2
      %v1544 = vsel %vm936, %v1541, %v1543
      %v1545 = vrot.slane %v1441, 2
      %v1546 = vrot.slane %v1442, 2
      %v1547 = vsel %vm936, %v1545, %v1546
      %v1548 = vrot.slane %v1443, 2
      %v1549 = vsel %vm936, %v1546, %v1548
      %v1550 = vrot.slane %v1444, 2
      %v1551 = vrot.slane %v1445, 2
      %v1552 = vsel %vm936, %v1550, %v1551
      %v1553 = vrot.slane %v1446, 2
      %v1554 = vsel %vm936, %v1551, %v1553
      %v1555 = vrot.slane %v1447, 2
      %v1556 = vrot.slane %v1448, 2
      %v1557 = vsel %vm936, %v1555, %v1556
      %v1558 = vrot.slane %v1449, 2
      %v1559 = vsel %vm936, %v1556, %v1558
      %v1560 = vrot.slane %v1450, 2
      %v1561 = vrot.slane %v1451, 2
      %v1562 = vsel %vm936, %v1560, %v1561
      %v1563 = vrot.slane %v1452, 2
      %v1564 = vsel %vm936, %v1561, %v1563
      %v1565 = vrot.slane %v1453, 2
      %v1566 = vrot.slane %v1454, 2
      %v1567 = vsel %vm936, %v1565, %v1566
      %v1568 = vrot.slane %v1455, 2
      %v1569 = vsel %vm936, %v1566, %v1568
      %v1570 = vrot.slane %v1456, 2
      %v1571 = vrot.slane %v1457, 2
      %v1572 = vsel %vm936, %v1570, %v1571
      %v1573 = vrot.slane %v1458, 2
      %v1574 = vsel %vm936, %v1571, %v1573
      %v1575 = vrot.slane %v1459, 2
      %v1576 = vrot.slane %v1460, 2
      %v1577 = vsel %vm936, %v1575, %v1576
      %v1578 = vrot.slane %v1461, 2
      %v1579 = vsel %vm936, %v1576, %v1578
      %v1580 = vrot.slane %v1462, 2
      %v1581 = vrot.slane %v1463, 2
      %v1582 = vsel %vm936, %v1580, %v1581
      %v1583 = vrot.slane %v1464, 2
      %v1584 = vsel %vm936, %v1581, %v1583
      %v1585 = vrot.slane %v1465, 2
      %v1586 = vrot.slane %v1466, 2
      %v1587 = vsel %vm936, %v1585, %v1586
      %v1588 = vrot.slane %v1467, 2
      %v1589 = vsel %vm936, %v1586, %v1588
      %v1590 = vrot.slane %v1468, 2
      %v1591 = vrot.slane %v1469, 2
      %v1592 = vsel %vm936, %v1590, %v1591
      %v1593 = vrot.slane %v1470, 2
      %v1594 = vsel %vm936, %v1591, %v1593
      %v1595 = vrot.slane %v1471, 2
      %v1596 = vrot.slane %v1472, 2
      %v1597 = vsel %vm936, %v1595, %v1596
      %v1598 = vrot.slane %v1473, 2
      %v1599 = vsel %vm936, %v1596, %v1598
      %v1600 = vrot.slane %v1474, 2
      %v1601 = vrot.slane %v1475, 2
      %v1602 = vsel %vm936, %v1600, %v1601
      %v1603 = vrot.slane %v1476, 2
      %v1604 = vsel %vm936, %v1601, %v1603
      %v1653 = vadd.f32 %v1377, %v1525
      %v1654 = vadd.f32 %v1378, %v1527
      %v1655 = vadd.f32 %v1379, %v1529
      %v1656 = vadd.f32 %v1380, %v1530
      %v1657 = vadd.f32 %v1381, %v1532
      %v1658 = vadd.f32 %v1382, %v1534
      %v1659 = vadd.f32 %v1383, %v1535
      %v1660 = vadd.f32 %v1384, %v1537
      %v1661 = vadd.f32 %v1385, %v1539
      %v1662 = vadd.f32 %v1386, %v1540
      %v1663 = vadd.f32 %v1387, %v1542
      %v1664 = vadd.f32 %v1388, %v1544
      %v1665 = vadd.f32 %v1389, %v1545
      %v1666 = vadd.f32 %v1390, %v1547
      %v1667 = vadd.f32 %v1391, %v1549
      %v1668 = vadd.f32 %v1392, %v1550
      %v1669 = vadd.f32 %v1393, %v1552
      %v1670 = vadd.f32 %v1394, %v1554
      %v1671 = vadd.f32 %v1395, %v1555
      %v1672 = vadd.f32 %v1396, %v1557
      %v1673 = vadd.f32 %v1397, %v1559
      %v1674 = vadd.f32 %v1398, %v1560
      %v1675 = vadd.f32 %v1399, %v1562
      %v1676 = vadd.f32 %v1400, %v1564
      %v1677 = vadd.f32 %v1401, %v1565
      %v1678 = vadd.f32 %v1402, %v1567
      %v1679 = vadd.f32 %v1403, %v1569
      %v1680 = vadd.f32 %v1404, %v1570
      %v1681 = vadd.f32 %v1405, %v1572
      %v1682 = vadd.f32 %v1406, %v1574
      %v1683 = vadd.f32 %v1407, %v1575
      %v1684 = vadd.f32 %v1408, %v1577
      %v1685 = vadd.f32 %v1409, %v1579
      %v1686 = vadd.f32 %v1410, %v1580
      %v1687 = vadd.f32 %v1411, %v1582
      %v1688 = vadd.f32 %v1412, %v1584
      %v1689 = vadd.f32 %v1413, %v1585
      %v1690 = vadd.f32 %v1414, %v1587
      %v1691 = vadd.f32 %v1415, %v1589
      %v1692 = vadd.f32 %v1416, %v1590
      %v1693 = vadd.f32 %v1417, %v1592
      %v1694 = vadd.f32 %v1418, %v1594
      %v1695 = vadd.f32 %v1419, %v1595
      %v1696 = vadd.f32 %v1420, %v1597
      %v1697 = vadd.f32 %v1421, %v1599
      %v1698 = vadd.f32 %v1422, %v1600
      %v1699 = vadd.f32 %v1423, %v1602
      %v1700 = vadd.f32 %v1424, %v1604
      %v1701 = vlaneseq
      %v1702 = vshrl.u32 %v1701, 7
      %v1703 = vsub.s32 6, %v1702
      %v1704 = vrot.slane %v569, %v1703
      %v1705 = vmul.f32 %v505, %v1704
      %v1706 = vmul.f32 %v506, %v1704
      %v1707 = vmul.f32 %v507, %v1704
      %v1708 = vmul.f32 %v509, %v1704
      %v1709 = vmul.f32 %v510, %v1704
      %v1710 = vmul.f32 %v511, %v1704
      %v1711 = vmul.f32 %v513, %v1704
      %v1712 = vmul.f32 %v514, %v1704
      %v1713 = vmul.f32 %v515, %v1704
      %v1714 = vmul.f32 %v517, %v1704
      %v1715 = vmul.f32 %v518, %v1704
      %v1716 = vmul.f32 %v519, %v1704
      %v1717 = vmul.f32 %v521, %v1704
      %v1718 = vmul.f32 %v522, %v1704
      %v1719 = vmul.f32 %v523, %v1704
      %v1720 = vmul.f32 %v525, %v1704
      %v1721 = vmul.f32 %v526, %v1704
      %v1722 = vmul.f32 %v527, %v1704
      %v1723 = vmul.f32 %v529, %v1704
      %v1724 = vmul.f32 %v530, %v1704
      %v1725 = vmul.f32 %v531, %v1704
      %v1726 = vmul.f32 %v533, %v1704
      %v1727 = vmul.f32 %v534, %v1704
      %v1728 = vmul.f32 %v535, %v1704
      %v1729 = vmul.f32 %v537, %v1704
      %v1730 = vmul.f32 %v538, %v1704
      %v1731 = vmul.f32 %v539, %v1704
      %v1732 = vmul.f32 %v541, %v1704
      %v1733 = vmul.f32 %v542, %v1704
      %v1734 = vmul.f32 %v543, %v1704
      %v1735 = vmul.f32 %v545, %v1704
      %v1736 = vmul.f32 %v546, %v1704
      %v1737 = vmul.f32 %v547, %v1704
      %v1738 = vmul.f32 %v549, %v1704
      %v1739 = vmul.f32 %v550, %v1704
      %v1740 = vmul.f32 %v551, %v1704
      %v1741 = vmul.f32 %v553, %v1704
      %v1742 = vmul.f32 %v554, %v1704
      %v1743 = vmul.f32 %v555, %v1704
      %v1744 = vmul.f32 %v557, %v1704
      %v1745 = vmul.f32 %v558, %v1704
      %v1746 = vmul.f32 %v559, %v1704
      %v1747 = vmul.f32 %v561, %v1704
      %v1748 = vmul.f32 %v562, %v1704
      %v1749 = vmul.f32 %v563, %v1704
      %v1750 = vmul.f32 %v565, %v1704
      %v1751 = vmul.f32 %v566, %v1704
      %v1752 = vmul.f32 %v567, %v1704
      %v1753 = vadd.f32 %v1653, %v1705
      %v1754 = vadd.f32 %v1654, %v1706
      %v1755 = vadd.f32 %v1655, %v1707
      %v1756 = vadd.f32 %v1656, %v1708
      %v1757 = vadd.f32 %v1657, %v1709
      %v1758 = vadd.f32 %v1658, %v1710
      %v1759 = vadd.f32 %v1659, %v1711
      %v1760 = vadd.f32 %v1660, %v1712
      %v1761 = vadd.f32 %v1661, %v1713
      %v1762 = vadd.f32 %v1662, %v1714
      %v1763 = vadd.f32 %v1663, %v1715
      %v1764 = vadd.f32 %v1664, %v1716
      %v1765 = vadd.f32 %v1665, %v1717
      %v1766 = vadd.f32 %v1666, %v1718
      %v1767 = vadd.f32 %v1667, %v1719
      %v1768 = vadd.f32 %v1668, %v1720
      %v1769 = vadd.f32 %v1669, %v1721
      %v1770 = vadd.f32 %v1670, %v1722
      %v1771 = vadd.f32 %v1671, %v1723
      %v1772 = vadd.f32 %v1672, %v1724
      %v1773 = vadd.f32 %v1673, %v1725
      %v1774 = vadd.f32 %v1674, %v1726
      %v1775 = vadd.f32 %v1675, %v1727
      %v1776 = vadd.f32 %v1676, %v1728
      %v1777 = vadd.f32 %v1677, %v1729
      %v1778 = vadd.f32 %v1678, %v1730
      %v1779 = vadd.f32 %v1679, %v1731
      %v1780 = vadd.f32 %v1680, %v1732
      %v1781 = vadd.f32 %v1681, %v1733
      %v1782 = vadd.f32 %v1682, %v1734
      %v1783 = vadd.f32 %v1683, %v1735
      %v1784 = vadd.f32 %v1684, %v1736
      %v1785 = vadd.f32 %v1685, %v1737
      %v1786 = vadd.f32 %v1686, %v1738
      %v1787 = vadd.f32 %v1687, %v1739
      %v1788 = vadd.f32 %v1688, %v1740
      %v1789 = vadd.f32 %v1689, %v1741
      %v1790 = vadd.f32 %v1690, %v1742
      %v1791 = vadd.f32 %v1691, %v1743
      %v1792 = vadd.f32 %v1692, %v1744
      %v1793 = vadd.f32 %v1693, %v1745
      %v1794 = vadd.f32 %v1694, %v1746
      %v1795 = vadd.f32 %v1695, %v1747
      %v1796 = vadd.f32 %v1696, %v1748
      %v1797 = vadd.f32 %v1697, %v1749
      %v1798 = vadd.f32 %v1698, %v1750
      %v1799 = vadd.f32 %v1699, %v1751
      %v1800 = vadd.f32 %v1700, %v1752
      %v1801 = vlaneseq
      %v1802 = vshrl.u32 %v1801, 7
      %v1803 = vsub.s32 7, %v1802
      %v1804 = vrot.slane %v569, %v1803
      %v1805 = vmul.f32 %v506, %v1804
      %v1806 = vmul.f32 %v507, %v1804
      %v1807 = vmul.f32 %v510, %v1804
      %v1808 = vmul.f32 %v511, %v1804
      %v1809 = vmul.f32 %v514, %v1804
      %v1810 = vmul.f32 %v515, %v1804
      %v1811 = vmul.f32 %v518, %v1804
      %v1812 = vmul.f32 %v519, %v1804
      %v1813 = vmul.f32 %v522, %v1804
      %v1814 = vmul.f32 %v523, %v1804
      %v1815 = vmul.f32 %v526, %v1804
      %v1816 = vmul.f32 %v527, %v1804
      %v1817 = vmul.f32 %v530, %v1804
      %v1818 = vmul.f32 %v531, %v1804
      %v1819 = vmul.f32 %v534, %v1804
      %v1820 = vmul.f32 %v535, %v1804
      %v1821 = vmul.f32 %v538, %v1804
      %v1822 = vmul.f32 %v539, %v1804
      %v1823 = vmul.f32 %v542, %v1804
      %v1824 = vmul.f32 %v543, %v1804
      %v1825 = vmul.f32 %v546, %v1804
      %v1826 = vmul.f32 %v547, %v1804
      %v1827 = vmul.f32 %v550, %v1804
      %v1828 = vmul.f32 %v551, %v1804
      %v1829 = vmul.f32 %v554, %v1804
      %v1830 = vmul.f32 %v555, %v1804
      %v1831 = vmul.f32 %v558, %v1804
      %v1832 = vmul.f32 %v559, %v1804
      %v1833 = vmul.f32 %v562, %v1804
      %v1834 = vmul.f32 %v563, %v1804
      %v1835 = vmul.f32 %v566, %v1804
      %v1836 = vmul.f32 %v567, %v1804
      %v1869 = vrot.slane %v1805, 1
      %v1870 = vrot.slane %v1806, 1
      %v1871 = vsel %vm691, %v1869, %v1870
      %v1872 = vrot.slane %v1807, 1
      %v1873 = vrot.slane %v1808, 1
      %v1874 = vsel %vm691, %v1872, %v1873
      %v1875 = vrot.slane %v1809, 1
      %v1876 = vrot.slane %v1810, 1
      %v1877 = vsel %vm691, %v1875, %v1876
      %v1878 = vrot.slane %v1811, 1
      %v1879 = vrot.slane %v1812, 1
      %v1880 = vsel %vm691, %v1878, %v1879
      %v1881 = vrot.slane %v1813, 1
      %v1882 = vrot.slane %v1814, 1
      %v1883 = vsel %vm691, %v1881, %v1882
      %v1884 = vrot.slane %v1815, 1
      %v1885 = vrot.slane %v1816, 1
      %v1886 = vsel %vm691, %v1884, %v1885
      %v1887 = vrot.slane %v1817, 1
      %v1888 = vrot.slane %v1818, 1
      %v1889 = vsel %vm691, %v1887, %v1888
      %v1890 = vrot.slane %v1819, 1
      %v1891 = vrot.slane %v1820, 1
      %v1892 = vsel %vm691, %v1890, %v1891
      %v1893 = vrot.slane %v1821, 1
      %v1894 = vrot.slane %v1822, 1
      %v1895 = vsel %vm691, %v1893, %v1894
      %v1896 = vrot.slane %v1823, 1
      %v1897 = vrot.slane %v1824, 1
      %v1898 = vsel %vm691, %v1896, %v1897
      %v1899 = vrot.slane %v1825, 1
      %v1900 = vrot.slane %v1826, 1
      %v1901 = vsel %vm691, %v1899, %v1900
      %v1902 = vrot.slane %v1827, 1
      %v1903 = vrot.slane %v1828, 1
      %v1904 = vsel %vm691, %v1902, %v1903
      %v1905 = vrot.slane %v1829, 1
      %v1906 = vrot.slane %v1830, 1
      %v1907 = vsel %vm691, %v1905, %v1906
      %v1908 = vrot.slane %v1831, 1
      %v1909 = vrot.slane %v1832, 1
      %v1910 = vsel %vm691, %v1908, %v1909
      %v1911 = vrot.slane %v1833, 1
      %v1912 = vrot.slane %v1834, 1
      %v1913 = vsel %vm691, %v1911, %v1912
      %v1914 = vrot.slane %v1835, 1
      %v1915 = vrot.slane %v1836, 1
      %v1916 = vsel %vm691, %v1914, %v1915
      %v1965 = vadd.f32 %v1753, %v1869
      %v1966 = vadd.f32 %v1754, %v1871
      %v1967 = vadd.f32 %v1755, %v1870
      %v1968 = vadd.f32 %v1756, %v1872
      %v1969 = vadd.f32 %v1757, %v1874
      %v1970 = vadd.f32 %v1758, %v1873
      %v1971 = vadd.f32 %v1759, %v1875
      %v1972 = vadd.f32 %v1760, %v1877
      %v1973 = vadd.f32 %v1761, %v1876
      %v1974 = vadd.f32 %v1762, %v1878
      %v1975 = vadd.f32 %v1763, %v1880
      %v1976 = vadd.f32 %v1764, %v1879
      %v1977 = vadd.f32 %v1765, %v1881
      %v1978 = vadd.f32 %v1766, %v1883
      %v1979 = vadd.f32 %v1767, %v1882
      %v1980 = vadd.f32 %v1768, %v1884
      %v1981 = vadd.f32 %v1769, %v1886
      %v1982 = vadd.f32 %v1770, %v1885
      %v1983 = vadd.f32 %v1771, %v1887
      %v1984 = vadd.f32 %v1772, %v1889
      %v1985 = vadd.f32 %v1773, %v1888
      %v1986 = vadd.f32 %v1774, %v1890
      %v1987 = vadd.f32 %v1775, %v1892
      %v1988 = vadd.f32 %v1776, %v1891
      %v1989 = vadd.f32 %v1777, %v1893
      %v1990 = vadd.f32 %v1778, %v1895
      %v1991 = vadd.f32 %v1779, %v1894
      %v1992 = vadd.f32 %v1780, %v1896
      %v1993 = vadd.f32 %v1781, %v1898
      %v1994 = vadd.f32 %v1782, %v1897
      %v1995 = vadd.f32 %v1783, %v1899
      %v1996 = vadd.f32 %v1784, %v1901
      %v1997 = vadd.f32 %v1785, %v1900
      %v1998 = vadd.f32 %v1786, %v1902
      %v1999 = vadd.f32 %v1787, %v1904
      %v2000 = vadd.f32 %v1788, %v1903
      %v2001 = vadd.f32 %v1789, %v1905
      %v2002 = vadd.f32 %v1790, %v1907
      %v2003 = vadd.f32 %v1791, %v1906
      %v2004 = vadd.f32 %v1792, %v1908
      %v2005 = vadd.f32 %v1793, %v1910
      %v2006 = vadd.f32 %v1794, %v1909
      %v2007 = vadd.f32 %v1795, %v1911
      %v2008 = vadd.f32 %v1796, %v1913
      %v2009 = vadd.f32 %v1797, %v1912
      %v2010 = vadd.f32 %v1798, %v1914
      %v2011 = vadd.f32 %v1799, %v1916
      %v2012 = vadd.f32 %v1800, %v1915
      %v2013 = vlaneseq
      %v2014 = vshrl.u32 %v2013, 7
      %v2015 = vsub.s32 0, %v2014
      %v2016 = vrot.slane %v570, %v2015
      %v2017 = vmul.f32 %v506, %v2016
      %v2018 = vmul.f32 %v507, %v2016
      %v2019 = vmul.f32 %v508, %v2016
      %v2020 = vmul.f32 %v510, %v2016
      %v2021 = vmul.f32 %v511, %v2016
      %v2022 = vmul.f32 %v512, %v2016
      %v2023 = vmul.f32 %v514, %v2016
      %v2024 = vmul.f32 %v515, %v2016
      %v2025 = vmul.f32 %v516, %v2016
      %v2026 = vmul.f32 %v518, %v2016
      %v2027 = vmul.f32 %v519, %v2016
      %v2028 = vmul.f32 %v520, %v2016
      %v2029 = vmul.f32 %v522, %v2016
      %v2030 = vmul.f32 %v523, %v2016
      %v2031 = vmul.f32 %v524, %v2016
      %v2032 = vmul.f32 %v526, %v2016
      %v2033 = vmul.f32 %v527, %v2016
      %v2034 = vmul.f32 %v528, %v2016
      %v2035 = vmul.f32 %v530, %v2016
      %v2036 = vmul.f32 %v531, %v2016
      %v2037 = vmul.f32 %v532, %v2016
      %v2038 = vmul.f32 %v534, %v2016
      %v2039 = vmul.f32 %v535, %v2016
      %v2040 = vmul.f32 %v536, %v2016
      %v2041 = vmul.f32 %v538, %v2016
      %v2042 = vmul.f32 %v539, %v2016
      %v2043 = vmul.f32 %v540, %v2016
      %v2044 = vmul.f32 %v542, %v2016
      %v2045 = vmul.f32 %v543, %v2016
      %v2046 = vmul.f32 %v544, %v2016
      %v2047 = vmul.f32 %v546, %v2016
      %v2048 = vmul.f32 %v547, %v2016
      %v2049 = vmul.f32 %v548, %v2016
      %v2050 = vmul.f32 %v550, %v2016
      %v2051 = vmul.f32 %v551, %v2016
      %v2052 = vmul.f32 %v552, %v2016
      %v2053 = vmul.f32 %v554, %v2016
      %v2054 = vmul.f32 %v555, %v2016
      %v2055 = vmul.f32 %v556, %v2016
      %v2056 = vmul.f32 %v558, %v2016
      %v2057 = vmul.f32 %v559, %v2016
      %v2058 = vmul.f32 %v560, %v2016
      %v2059 = vmul.f32 %v562, %v2016
      %v2060 = vmul.f32 %v563, %v2016
      %v2061 = vmul.f32 %v564, %v2016
      %v2062 = vmul.f32 %v566, %v2016
      %v2063 = vmul.f32 %v567, %v2016
      %v2064 = vmul.f32 %v568, %v2016
      %v2113 = vrot.slane %v2017, 2
      %v2114 = vrot.slane %v2018, 2
      %v2115 = vsel %vm936, %v2113, %v2114
      %v2116 = vrot.slane %v2019, 2
      %v2117 = vsel %vm936, %v2114, %v2116
      %v2118 = vrot.slane %v2020, 2
      %v2119 = vrot.slane %v2021, 2
      %v2120 = vsel %vm936, %v2118, %v2119
      %v2121 = vrot.slane %v2022, 2
      %v2122 = vsel %vm936, %v2119, %v2121
      %v2123 = vrot.slane %v2023, 2
      %v2124 = vrot.slane %v2024, 2
      %v2125 = vsel %vm936, %v2123, %v2124
      %v2126 = vrot.slane %v2025, 2
      %v2127 = vsel %vm936, %v2124, %v2126
      %v2128 = vrot.slane %v2026, 2
      %v2129 = vrot.slane %v2027, 2
      %v2130 = vsel %vm936, %v2128, %v2129
      %v2131 = vrot.slane %v2028, 2
      %v2132 = vsel %vm936, %v2129, %v2131
      %v2133 = vrot.slane %v2029, 2
      %v2134 = vrot.slane %v2030, 2
      %v2135 = vsel %vm936, %v2133, %v2134
      %v2136 = vrot.slane %v2031, 2
      %v2137 = vsel %vm936, %v2134, %v2136
      %v2138 = vrot.slane %v2032, 2
      %v2139 = vrot.slane %v2033, 2
      %v2140 = vsel %vm936, %v2138, %v2139
      %v2141 = vrot.slane %v2034, 2
      %v2142 = vsel %vm936, %v2139, %v2141
      %v2143 = vrot.slane %v2035, 2
      %v2144 = vrot.slane %v2036, 2
      %v2145 = vsel %vm936, %v2143, %v2144
      %v2146 = vrot.slane %v2037, 2
      %v2147 = vsel %vm936, %v2144, %v2146
      %v2148 = vrot.slane %v2038, 2
      %v2149 = vrot.slane %v2039, 2
      %v2150 = vsel %vm936, %v2148, %v2149
      %v2151 = vrot.slane %v2040, 2
      %v2152 = vsel %vm936, %v2149, %v2151
      %v2153 = vrot.slane %v2041, 2
      %v2154 = vrot.slane %v2042, 2
      %v2155 = vsel %vm936, %v2153, %v2154
      %v2156 = vrot.slane %v2043, 2
      %v2157 = vsel %vm936, %v2154, %v2156
      %v2158 = vrot.slane %v2044, 2
      %v2159 = vrot.slane %v2045, 2
      %v2160 = vsel %vm936, %v2158, %v2159
      %v2161 = vrot.slane %v2046, 2
      %v2162 = vsel %vm936, %v2159, %v2161
      %v2163 = vrot.slane %v2047, 2
      %v2164 = vrot.slane %v2048, 2
      %v2165 = vsel %vm936, %v2163, %v2164
      %v2166 = vrot.slane %v2049, 2
      %v2167 = vsel %vm936, %v2164, %v2166
      %v2168 = vrot.slane %v2050, 2
      %v2169 = vrot.slane %v2051, 2
      %v2170 = vsel %vm936, %v2168, %v2169
      %v2171 = vrot.slane %v2052, 2
      %v2172 = vsel %vm936, %v2169, %v2171
      %v2173 = vrot.slane %v2053, 2
      %v2174 = vrot.slane %v2054, 2
      %v2175 = vsel %vm936, %v2173, %v2174
      %v2176 = vrot.slane %v2055, 2
      %v2177 = vsel %vm936, %v2174, %v2176
      %v2178 = vrot.slane %v2056, 2
      %v2179 = vrot.slane %v2057, 2
      %v2180 = vsel %vm936, %v2178, %v2179
      %v2181 = vrot.slane %v2058, 2
      %v2182 = vsel %vm936, %v2179, %v2181
      %v2183 = vrot.slane %v2059, 2
      %v2184 = vrot.slane %v2060, 2
      %v2185 = vsel %vm936, %v2183, %v2184
      %v2186 = vrot.slane %v2061, 2
      %v2187 = vsel %vm936, %v2184, %v2186
      %v2188 = vrot.slane %v2062, 2
      %v2189 = vrot.slane %v2063, 2
      %v2190 = vsel %vm936, %v2188, %v2189
      %v2191 = vrot.slane %v2064, 2
      %v2192 = vsel %vm936, %v2189, %v2191
      %v2241 = vadd.f32 %v1965, %v2113
      %v2242 = vadd.f32 %v1966, %v2115
      %v2243 = vadd.f32 %v1967, %v2117
      %v2244 = vadd.f32 %v1968, %v2118
      %v2245 = vadd.f32 %v1969, %v2120
      %v2246 = vadd.f32 %v1970, %v2122
      %v2247 = vadd.f32 %v1971, %v2123
      %v2248 = vadd.f32 %v1972, %v2125
      %v2249 = vadd.f32 %v1973, %v2127
      %v2250 = vadd.f32 %v1974, %v2128
      %v2251 = vadd.f32 %v1975, %v2130
      %v2252 = vadd.f32 %v1976, %v2132
      %v2253 = vadd.f32 %v1977, %v2133
      %v2254 = vadd.f32 %v1978, %v2135
      %v2255 = vadd.f32 %v1979, %v2137
      %v2256 = vadd.f32 %v1980, %v2138
      %v2257 = vadd.f32 %v1981, %v2140
      %v2258 = vadd.f32 %v1982, %v2142
      %v2259 = vadd.f32 %v1983, %v2143
      %v2260 = vadd.f32 %v1984, %v2145
      %v2261 = vadd.f32 %v1985, %v2147
      %v2262 = vadd.f32 %v1986, %v2148
      %v2263 = vadd.f32 %v1987, %v2150
      %v2264 = vadd.f32 %v1988, %v2152
      %v2265 = vadd.f32 %v1989, %v2153
      %v2266 = vadd.f32 %v1990, %v2155
      %v2267 = vadd.f32 %v1991, %v2157
      %v2268 = vadd.f32 %v1992, %v2158
      %v2269 = vadd.f32 %v1993, %v2160
      %v2270 = vadd.f32 %v1994, %v2162
      %v2271 = vadd.f32 %v1995, %v2163
      %v2272 = vadd.f32 %v1996, %v2165
      %v2273 = vadd.f32 %v1997, %v2167
      %v2274 = vadd.f32 %v1998, %v2168
      %v2275 = vadd.f32 %v1999, %v2170
      %v2276 = vadd.f32 %v2000, %v2172
      %v2277 = vadd.f32 %v2001, %v2173
      %v2278 = vadd.f32 %v2002, %v2175
      %v2279 = vadd.f32 %v2003, %v2177
      %v2280 = vadd.f32 %v2004, %v2178
      %v2281 = vadd.f32 %v2005, %v2180
      %v2282 = vadd.f32 %v2006, %v2182
      %v2283 = vadd.f32 %v2007, %v2183
      %v2284 = vadd.f32 %v2008, %v2185
      %v2285 = vadd.f32 %v2009, %v2187
      %v2286 = vadd.f32 %v2010, %v2188
      %v2287 = vadd.f32 %v2011, %v2190
      %v2288 = vadd.f32 %v2012, %v2192
      %v2289 = vld [vmem:[%s304] sm:$0x1]
      %v2291 = vlaneseq
      %v2292 = vshrl.u32 %v2291, 7
      %v2293 = vsub.s32 0, %v2292
      %v2294 = vrot.slane %v2289, %v2293
      %v2296 = vadd.f32 %v2241, %v2294
      %v2297 = vadd.f32 %v2242, %v2294
      %v2298 = vadd.f32 %v2243, %v2294
      %v2299 = vadd.f32 %v2244, %v2294
      %v2300 = vadd.f32 %v2245, %v2294
      %v2301 = vadd.f32 %v2246, %v2294
      %v2302 = vadd.f32 %v2247, %v2294
      %v2303 = vadd.f32 %v2248, %v2294
      %v2304 = vadd.f32 %v2249, %v2294
      %v2305 = vadd.f32 %v2250, %v2294
      %v2306 = vadd.f32 %v2251, %v2294
      %v2307 = vadd.f32 %v2252, %v2294
      %v2308 = vadd.f32 %v2253, %v2294
      %v2309 = vadd.f32 %v2254, %v2294
      %v2310 = vadd.f32 %v2255, %v2294
      %v2311 = vadd.f32 %v2256, %v2294
      %v2312 = vadd.f32 %v2257, %v2294
      %v2313 = vadd.f32 %v2258, %v2294
      %v2314 = vadd.f32 %v2259, %v2294
      %v2315 = vadd.f32 %v2260, %v2294
      %v2316 = vadd.f32 %v2261, %v2294
      %v2317 = vadd.f32 %v2262, %v2294
      %v2318 = vadd.f32 %v2263, %v2294
      %v2319 = vadd.f32 %v2264, %v2294
      %v2320 = vadd.f32 %v2265, %v2294
      %v2321 = vadd.f32 %v2266, %v2294
      %v2322 = vadd.f32 %v2267, %v2294
      %v2323 = vadd.f32 %v2268, %v2294
      %v2324 = vadd.f32 %v2269, %v2294
      %v2325 = vadd.f32 %v2270, %v2294
      %v2326 = vadd.f32 %v2271, %v2294
      %v2327 = vadd.f32 %v2272, %v2294
      %v2328 = vadd.f32 %v2273, %v2294
      %v2329 = vadd.f32 %v2274, %v2294
      %v2330 = vadd.f32 %v2275, %v2294
      %v2331 = vadd.f32 %v2276, %v2294
      %v2332 = vadd.f32 %v2277, %v2294
      %v2333 = vadd.f32 %v2278, %v2294
      %v2334 = vadd.f32 %v2279, %v2294
      %v2335 = vadd.f32 %v2280, %v2294
      %v2336 = vadd.f32 %v2281, %v2294
      %v2337 = vadd.f32 %v2282, %v2294
      %v2338 = vadd.f32 %v2283, %v2294
      %v2339 = vadd.f32 %v2284, %v2294
      %v2340 = vadd.f32 %v2285, %v2294
      %v2341 = vadd.f32 %v2286, %v2294
      %v2342 = vadd.f32 %v2287, %v2294
      %v2343 = vadd.f32 %v2288, %v2294
      %v2344 = vmul.f32 %v2296, 0.5
      %v2345 = vmul.f32 %v2297, 0.5
      %v2346 = vmul.f32 %v2298, 0.5
      %v2347 = vmul.f32 %v2299, 0.5
      %v2348 = vmul.f32 %v2300, 0.5
      %v2349 = vmul.f32 %v2301, 0.5
      %v2350 = vmul.f32 %v2302, 0.5
      %v2351 = vmul.f32 %v2303, 0.5
      %v2352 = vmul.f32 %v2304, 0.5
      %v2353 = vmul.f32 %v2305, 0.5
      %v2354 = vmul.f32 %v2306, 0.5
      %v2355 = vmul.f32 %v2307, 0.5
      %v2356 = vmul.f32 %v2308, 0.5
      %v2357 = vmul.f32 %v2309, 0.5
      %v2358 = vmul.f32 %v2310, 0.5
      %v2359 = vmul.f32 %v2311, 0.5
      %v2360 = vmul.f32 %v2312, 0.5
      %v2361 = vmul.f32 %v2313, 0.5
      %v2362 = vmul.f32 %v2314, 0.5
      %v2363 = vmul.f32 %v2315, 0.5
      %v2364 = vmul.f32 %v2316, 0.5
      %v2365 = vmul.f32 %v2317, 0.5
      %v2366 = vmul.f32 %v2318, 0.5
      %v2367 = vmul.f32 %v2319, 0.5
      %v2368 = vmul.f32 %v2320, 0.5
      %v2369 = vmul.f32 %v2321, 0.5
      %v2370 = vmul.f32 %v2322, 0.5
      %v2371 = vmul.f32 %v2323, 0.5
      %v2372 = vmul.f32 %v2324, 0.5
      %v2373 = vmul.f32 %v2325, 0.5
      %v2374 = vmul.f32 %v2326, 0.5
      %v2375 = vmul.f32 %v2327, 0.5
      %v2376 = vmul.f32 %v2328, 0.5
      %v2377 = vmul.f32 %v2329, 0.5
      %v2378 = vmul.f32 %v2330, 0.5
      %v2379 = vmul.f32 %v2331, 0.5
      %v2380 = vmul.f32 %v2332, 0.5
      %v2381 = vmul.f32 %v2333, 0.5
      %v2382 = vmul.f32 %v2334, 0.5
      %v2383 = vmul.f32 %v2335, 0.5
      %v2384 = vmul.f32 %v2336, 0.5
      %v2385 = vmul.f32 %v2337, 0.5
      %v2386 = vmul.f32 %v2338, 0.5
      %v2387 = vmul.f32 %v2339, 0.5
      %v2388 = vmul.f32 %v2340, 0.5
      %v2389 = vmul.f32 %v2341, 0.5
      %v2390 = vmul.f32 %v2342, 0.5
      %v2391 = vmul.f32 %v2343, 0.5
      %v2392 = vmul.f32 %v2296, 0.044715
      %v2393 = vmul.f32 %v2297, 0.044715
      %v2394 = vmul.f32 %v2298, 0.044715
      %v2395 = vmul.f32 %v2299, 0.044715
      %v2396 = vmul.f32 %v2300, 0.044715
      %v2397 = vmul.f32 %v2301, 0.044715
      %v2398 = vmul.f32 %v2302, 0.044715
      %v2399 = vmul.f32 %v2303, 0.044715
      %v2400 = vmul.f32 %v2304, 0.044715
      %v2401 = vmul.f32 %v2305, 0.044715
      %v2402 = vmul.f32 %v2306, 0.044715
      %v2403 = vmul.f32 %v2307, 0.044715
      %v2404 = vmul.f32 %v2308, 0.044715
      %v2405 = vmul.f32 %v2309, 0.044715
      %v2406 = vmul.f32 %v2310, 0.044715
      %v2407 = vmul.f32 %v2311, 0.044715
      %v2408 = vmul.f32 %v2312, 0.044715
      %v2409 = vmul.f32 %v2313, 0.044715
      %v2410 = vmul.f32 %v2314, 0.044715
      %v2411 = vmul.f32 %v2315, 0.044715
      %v2412 = vmul.f32 %v2316, 0.044715
      %v2413 = vmul.f32 %v2317, 0.044715
      %v2414 = vmul.f32 %v2318, 0.044715
      %v2415 = vmul.f32 %v2319, 0.044715
      %v2416 = vmul.f32 %v2320, 0.044715
      %v2417 = vmul.f32 %v2321, 0.044715
      %v2418 = vmul.f32 %v2322, 0.044715
      %v2419 = vmul.f32 %v2323, 0.044715
      %v2420 = vmul.f32 %v2324, 0.044715
      %v2421 = vmul.f32 %v2325, 0.044715
      %v2422 = vmul.f32 %v2326, 0.044715
      %v2423 = vmul.f32 %v2327, 0.044715
      %v2424 = vmul.f32 %v2328, 0.044715
      %v2425 = vmul.f32 %v2329, 0.044715
      %v2426 = vmul.f32 %v2330, 0.044715
      %v2427 = vmul.f32 %v2331, 0.044715
      %v2428 = vmul.f32 %v2332, 0.044715
      %v2429 = vmul.f32 %v2333, 0.044715
      %v2430 = vmul.f32 %v2334, 0.044715
      %v2431 = vmul.f32 %v2335, 0.044715
      %v2432 = vmul.f32 %v2336, 0.044715
      %v2433 = vmul.f32 %v2337, 0.044715
      %v2434 = vmul.f32 %v2338, 0.044715
      %v2435 = vmul.f32 %v2339, 0.044715
      %v2436 = vmul.f32 %v2340, 0.044715
      %v2437 = vmul.f32 %v2341, 0.044715
      %v2438 = vmul.f32 %v2342, 0.044715
      %v2439 = vmul.f32 %v2343, 0.044715
      %v2440 = vmul.f32 %v2392, %v2296
      %v2441 = vmul.f32 %v2393, %v2297
      %v2442 = vmul.f32 %v2394, %v2298
      %v2443 = vmul.f32 %v2395, %v2299
      %v2444 = vmul.f32 %v2396, %v2300
      %v2445 = vmul.f32 %v2397, %v2301
      %v2446 = vmul.f32 %v2398, %v2302
      %v2447 = vmul.f32 %v2399, %v2303
      %v2448 = vmul.f32 %v2400, %v2304
      %v2449 = vmul.f32 %v2401, %v2305
      %v2450 = vmul.f32 %v2402, %v2306
      %v2451 = vmul.f32 %v2403, %v2307
      %v2452 = vmul.f32 %v2404, %v2308
      %v2453 = vmul.f32 %v2405, %v2309
      %v2454 = vmul.f32 %v2406, %v2310
      %v2455 = vmul.f32 %v2407, %v2311
      %v2456 = vmul.f32 %v2408, %v2312
      %v2457 = vmul.f32 %v2409, %v2313
      %v2458 = vmul.f32 %v2410, %v2314
      %v2459 = vmul.f32 %v2411, %v2315
      %v2460 = vmul.f32 %v2412, %v2316
      %v2461 = vmul.f32 %v2413, %v2317
      %v2462 = vmul.f32 %v2414, %v2318
      %v2463 = vmul.f32 %v2415, %v2319
      %v2464 = vmul.f32 %v2416, %v2320
      %v2465 = vmul.f32 %v2417, %v2321
      %v2466 = vmul.f32 %v2418, %v2322
      %v2467 = vmul.f32 %v2419, %v2323
      %v2468 = vmul.f32 %v2420, %v2324
      %v2469 = vmul.f32 %v2421, %v2325
      %v2470 = vmul.f32 %v2422, %v2326
      %v2471 = vmul.f32 %v2423, %v2327
      %v2472 = vmul.f32 %v2424, %v2328
      %v2473 = vmul.f32 %v2425, %v2329
      %v2474 = vmul.f32 %v2426, %v2330
      %v2475 = vmul.f32 %v2427, %v2331
      %v2476 = vmul.f32 %v2428, %v2332
      %v2477 = vmul.f32 %v2429, %v2333
      %v2478 = vmul.f32 %v2430, %v2334
      %v2479 = vmul.f32 %v2431, %v2335
      %v2480 = vmul.f32 %v2432, %v2336
      %v2481 = vmul.f32 %v2433, %v2337
      %v2482 = vmul.f32 %v2434, %v2338
      %v2483 = vmul.f32 %v2435, %v2339
      %v2484 = vmul.f32 %v2436, %v2340
      %v2485 = vmul.f32 %v2437, %v2341
      %v2486 = vmul.f32 %v2438, %v2342
      %v2487 = vmul.f32 %v2439, %v2343
      %v2488 = vmul.f32 %v2440, %v2296
      %v2489 = vmul.f32 %v2441, %v2297
      %v2490 = vmul.f32 %v2442, %v2298
      %v2491 = vmul.f32 %v2443, %v2299
      %v2492 = vmul.f32 %v2444, %v2300
      %v2493 = vmul.f32 %v2445, %v2301
      %v2494 = vmul.f32 %v2446, %v2302
      %v2495 = vmul.f32 %v2447, %v2303
      %v2496 = vmul.f32 %v2448, %v2304
      %v2497 = vmul.f32 %v2449, %v2305
      %v2498 = vmul.f32 %v2450, %v2306
      %v2499 = vmul.f32 %v2451, %v2307
      %v2500 = vmul.f32 %v2452, %v2308
      %v2501 = vmul.f32 %v2453, %v2309
      %v2502 = vmul.f32 %v2454, %v2310
      %v2503 = vmul.f32 %v2455, %v2311
      %v2504 = vmul.f32 %v2456, %v2312
      %v2505 = vmul.f32 %v2457, %v2313
      %v2506 = vmul.f32 %v2458, %v2314
      %v2507 = vmul.f32 %v2459, %v2315
      %v2508 = vmul.f32 %v2460, %v2316
      %v2509 = vmul.f32 %v2461, %v2317
      %v2510 = vmul.f32 %v2462, %v2318
      %v2511 = vmul.f32 %v2463, %v2319
      %v2512 = vmul.f32 %v2464, %v2320
      %v2513 = vmul.f32 %v2465, %v2321
      %v2514 = vmul.f32 %v2466, %v2322
      %v2515 = vmul.f32 %v2467, %v2323
      %v2516 = vmul.f32 %v2468, %v2324
      %v2517 = vmul.f32 %v2469, %v2325
      %v2518 = vmul.f32 %v2470, %v2326
      %v2519 = vmul.f32 %v2471, %v2327
      %v2520 = vmul.f32 %v2472, %v2328
      %v2521 = vmul.f32 %v2473, %v2329
      %v2522 = vmul.f32 %v2474, %v2330
      %v2523 = vmul.f32 %v2475, %v2331
      %v2524 = vmul.f32 %v2476, %v2332
      %v2525 = vmul.f32 %v2477, %v2333
      %v2526 = vmul.f32 %v2478, %v2334
      %v2527 = vmul.f32 %v2479, %v2335
      %v2528 = vmul.f32 %v2480, %v2336
      %v2529 = vmul.f32 %v2481, %v2337
      %v2530 = vmul.f32 %v2482, %v2338
      %v2531 = vmul.f32 %v2483, %v2339
      %v2532 = vmul.f32 %v2484, %v2340
      %v2533 = vmul.f32 %v2485, %v2341
      %v2534 = vmul.f32 %v2486, %v2342
      %v2535 = vmul.f32 %v2487, %v2343
      %v2536 = vadd.f32 %v2296, %v2488
      %v2537 = vadd.f32 %v2297, %v2489
      %v2538 = vadd.f32 %v2298, %v2490
      %v2539 = vadd.f32 %v2299, %v2491
      %v2540 = vadd.f32 %v2300, %v2492
      %v2541 = vadd.f32 %v2301, %v2493
      %v2542 = vadd.f32 %v2302, %v2494
      %v2543 = vadd.f32 %v2303, %v2495
      %v2544 = vadd.f32 %v2304, %v2496
      %v2545 = vadd.f32 %v2305, %v2497
      %v2546 = vadd.f32 %v2306, %v2498
      %v2547 = vadd.f32 %v2307, %v2499
      %v2548 = vadd.f32 %v2308, %v2500
      %v2549 = vadd.f32 %v2309, %v2501
      %v2550 = vadd.f32 %v2310, %v2502
      %v2551 = vadd.f32 %v2311, %v2503
      %v2552 = vadd.f32 %v2312, %v2504
      %v2553 = vadd.f32 %v2313, %v2505
      %v2554 = vadd.f32 %v2314, %v2506
      %v2555 = vadd.f32 %v2315, %v2507
      %v2556 = vadd.f32 %v2316, %v2508
      %v2557 = vadd.f32 %v2317, %v2509
      %v2558 = vadd.f32 %v2318, %v2510
      %v2559 = vadd.f32 %v2319, %v2511
      %v2560 = vadd.f32 %v2320, %v2512
      %v2561 = vadd.f32 %v2321, %v2513
      %v2562 = vadd.f32 %v2322, %v2514
      %v2563 = vadd.f32 %v2323, %v2515
      %v2564 = vadd.f32 %v2324, %v2516
      %v2565 = vadd.f32 %v2325, %v2517
      %v2566 = vadd.f32 %v2326, %v2518
      %v2567 = vadd.f32 %v2327, %v2519
      %v2568 = vadd.f32 %v2328, %v2520
      %v2569 = vadd.f32 %v2329, %v2521
      %v2570 = vadd.f32 %v2330, %v2522
      %v2571 = vadd.f32 %v2331, %v2523
      %v2572 = vadd.f32 %v2332, %v2524
      %v2573 = vadd.f32 %v2333, %v2525
      %v2574 = vadd.f32 %v2334, %v2526
      %v2575 = vadd.f32 %v2335, %v2527
      %v2576 = vadd.f32 %v2336, %v2528
      %v2577 = vadd.f32 %v2337, %v2529
      %v2578 = vadd.f32 %v2338, %v2530
      %v2579 = vadd.f32 %v2339, %v2531
      %v2580 = vadd.f32 %v2340, %v2532
      %v2581 = vadd.f32 %v2341, %v2533
      %v2582 = vadd.f32 %v2342, %v2534
      %v2583 = vadd.f32 %v2343, %v2535
      %v2584 = vmul.f32 %v2536, 0.7978846
      %v2585 = vmul.f32 %v2537, 0.7978846
      %v2586 = vmul.f32 %v2538, 0.7978846
      %v2587 = vmul.f32 %v2539, 0.7978846
      %v2588 = vmul.f32 %v2540, 0.7978846
      %v2589 = vmul.f32 %v2541, 0.7978846
      %v2590 = vmul.f32 %v2542, 0.7978846
      %v2591 = vmul.f32 %v2543, 0.7978846
      %v2592 = vmul.f32 %v2544, 0.7978846
      %v2593 = vmul.f32 %v2545, 0.7978846
      %v2594 = vmul.f32 %v2546, 0.7978846
      %v2595 = vmul.f32 %v2547, 0.7978846
      %v2596 = vmul.f32 %v2548, 0.7978846
      %v2597 = vmul.f32 %v2549, 0.7978846
      %v2598 = vmul.f32 %v2550, 0.7978846
      %v2599 = vmul.f32 %v2551, 0.7978846
      %v2600 = vmul.f32 %v2552, 0.7978846
      %v2601 = vmul.f32 %v2553, 0.7978846
      %v2602 = vmul.f32 %v2554, 0.7978846
      %v2603 = vmul.f32 %v2555, 0.7978846
      %v2604 = vmul.f32 %v2556, 0.7978846
      %v2605 = vmul.f32 %v2557, 0.7978846
      %v2606 = vmul.f32 %v2558, 0.7978846
      %v2607 = vmul.f32 %v2559, 0.7978846
      %v2608 = vmul.f32 %v2560, 0.7978846
      %v2609 = vmul.f32 %v2561, 0.7978846
      %v2610 = vmul.f32 %v2562, 0.7978846
      %v2611 = vmul.f32 %v2563, 0.7978846
      %v2612 = vmul.f32 %v2564, 0.7978846
      %v2613 = vmul.f32 %v2565, 0.7978846
      %v2614 = vmul.f32 %v2566, 0.7978846
      %v2615 = vmul.f32 %v2567, 0.7978846
      %v2616 = vmul.f32 %v2568, 0.7978846
      %v2617 = vmul.f32 %v2569, 0.7978846
      %v2618 = vmul.f32 %v2570, 0.7978846
      %v2619 = vmul.f32 %v2571, 0.7978846
      %v2620 = vmul.f32 %v2572, 0.7978846
      %v2621 = vmul.f32 %v2573, 0.7978846
      %v2622 = vmul.f32 %v2574, 0.7978846
      %v2623 = vmul.f32 %v2575, 0.7978846
      %v2624 = vmul.f32 %v2576, 0.7978846
      %v2625 = vmul.f32 %v2577, 0.7978846
      %v2626 = vmul.f32 %v2578, 0.7978846
      %v2627 = vmul.f32 %v2579, 0.7978846
      %v2628 = vmul.f32 %v2580, 0.7978846
      %v2629 = vmul.f32 %v2581, 0.7978846
      %v2630 = vmul.f32 %v2582, 0.7978846
      %v2631 = vmul.f32 %v2583, 0.7978846
      %v2632 = vtanh.pop %v2584
      %v2633 = vtanh.pop %v2585
      %v2634 = vtanh.pop %v2586
      %v2635 = vtanh.pop %v2587
      %v2636 = vtanh.pop %v2588
      %v2637 = vtanh.pop %v2589
      %v2638 = vtanh.pop %v2590
      %v2639 = vtanh.pop %v2591
      %v2640 = vtanh.pop %v2592
      %v2641 = vtanh.pop %v2593
      %v2642 = vtanh.pop %v2594
      %v2643 = vtanh.pop %v2595
      %v2644 = vtanh.pop %v2596
      %v2645 = vtanh.pop %v2597
      %v2646 = vtanh.pop %v2598
      %v2647 = vtanh.pop %v2599
      %v2648 = vtanh.pop %v2600
      %v2649 = vtanh.pop %v2601
      %v2650 = vtanh.pop %v2602
      %v2651 = vtanh.pop %v2603
      %v2652 = vtanh.pop %v2604
      %v2653 = vtanh.pop %v2605
      %v2654 = vtanh.pop %v2606
      %v2655 = vtanh.pop %v2607
      %v2656 = vtanh.pop %v2608
      %v2657 = vtanh.pop %v2609
      %v2658 = vtanh.pop %v2610
      %v2659 = vtanh.pop %v2611
      %v2660 = vtanh.pop %v2612
      %v2661 = vtanh.pop %v2613
      %v2662 = vtanh.pop %v2614
      %v2663 = vtanh.pop %v2615
      %v2664 = vtanh.pop %v2616
      %v2665 = vtanh.pop %v2617
      %v2666 = vtanh.pop %v2618
      %v2667 = vtanh.pop %v2619
      %v2668 = vtanh.pop %v2620
      %v2669 = vtanh.pop %v2621
      %v2670 = vtanh.pop %v2622
      %v2671 = vtanh.pop %v2623
      %v2672 = vtanh.pop %v2624
      %v2673 = vtanh.pop %v2625
      %v2674 = vtanh.pop %v2626
      %v2675 = vtanh.pop %v2627
      %v2676 = vtanh.pop %v2628
      %v2677 = vtanh.pop %v2629
      %v2678 = vtanh.pop %v2630
      %v2679 = vtanh.pop %v2631
      %v2680 = vadd.f32 %v2632, 1.0
      %v2681 = vadd.f32 %v2633, 1.0
      %v2682 = vadd.f32 %v2634, 1.0
      %v2683 = vadd.f32 %v2635, 1.0
      %v2684 = vadd.f32 %v2636, 1.0
      %v2685 = vadd.f32 %v2637, 1.0
      %v2686 = vadd.f32 %v2638, 1.0
      %v2687 = vadd.f32 %v2639, 1.0
      %v2688 = vadd.f32 %v2640, 1.0
      %v2689 = vadd.f32 %v2641, 1.0
      %v2690 = vadd.f32 %v2642, 1.0
      %v2691 = vadd.f32 %v2643, 1.0
      %v2692 = vadd.f32 %v2644, 1.0
      %v2693 = vadd.f32 %v2645, 1.0
      %v2694 = vadd.f32 %v2646, 1.0
      %v2695 = vadd.f32 %v2647, 1.0
      %v2696 = vadd.f32 %v2648, 1.0
      %v2697 = vadd.f32 %v2649, 1.0
      %v2698 = vadd.f32 %v2650, 1.0
      %v2699 = vadd.f32 %v2651, 1.0
      %v2700 = vadd.f32 %v2652, 1.0
      %v2701 = vadd.f32 %v2653, 1.0
      %v2702 = vadd.f32 %v2654, 1.0
      %v2703 = vadd.f32 %v2655, 1.0
      %v2704 = vadd.f32 %v2656, 1.0
      %v2705 = vadd.f32 %v2657, 1.0
      %v2706 = vadd.f32 %v2658, 1.0
      %v2707 = vadd.f32 %v2659, 1.0
      %v2708 = vadd.f32 %v2660, 1.0
      %v2709 = vadd.f32 %v2661, 1.0
      %v2710 = vadd.f32 %v2662, 1.0
      %v2711 = vadd.f32 %v2663, 1.0
      %v2712 = vadd.f32 %v2664, 1.0
      %v2713 = vadd.f32 %v2665, 1.0
      %v2714 = vadd.f32 %v2666, 1.0
      %v2715 = vadd.f32 %v2667, 1.0
      %v2716 = vadd.f32 %v2668, 1.0
      %v2717 = vadd.f32 %v2669, 1.0
      %v2718 = vadd.f32 %v2670, 1.0
      %v2719 = vadd.f32 %v2671, 1.0
      %v2720 = vadd.f32 %v2672, 1.0
      %v2721 = vadd.f32 %v2673, 1.0
      %v2722 = vadd.f32 %v2674, 1.0
      %v2723 = vadd.f32 %v2675, 1.0
      %v2724 = vadd.f32 %v2676, 1.0
      %v2725 = vadd.f32 %v2677, 1.0
      %v2726 = vadd.f32 %v2678, 1.0
      %v2727 = vadd.f32 %v2679, 1.0
      %v2728 = vmul.f32 %v2344, %v2680
      %v2729 = vmul.f32 %v2345, %v2681
      %v2730 = vmul.f32 %v2346, %v2682
      %v2731 = vmul.f32 %v2347, %v2683
      %v2732 = vmul.f32 %v2348, %v2684
      %v2733 = vmul.f32 %v2349, %v2685
      %v2734 = vmul.f32 %v2350, %v2686
      %v2735 = vmul.f32 %v2351, %v2687
      %v2736 = vmul.f32 %v2352, %v2688
      %v2737 = vmul.f32 %v2353, %v2689
      %v2738 = vmul.f32 %v2354, %v2690
      %v2739 = vmul.f32 %v2355, %v2691
      %v2740 = vmul.f32 %v2356, %v2692
      %v2741 = vmul.f32 %v2357, %v2693
      %v2742 = vmul.f32 %v2358, %v2694
      %v2743 = vmul.f32 %v2359, %v2695
      %v2744 = vmul.f32 %v2360, %v2696
      %v2745 = vmul.f32 %v2361, %v2697
      %v2746 = vmul.f32 %v2362, %v2698
      %v2747 = vmul.f32 %v2363, %v2699
      %v2748 = vmul.f32 %v2364, %v2700
      %v2749 = vmul.f32 %v2365, %v2701
      %v2750 = vmul.f32 %v2366, %v2702
      %v2751 = vmul.f32 %v2367, %v2703
      %v2752 = vmul.f32 %v2368, %v2704
      %v2753 = vmul.f32 %v2369, %v2705
      %v2754 = vmul.f32 %v2370, %v2706
      %v2755 = vmul.f32 %v2371, %v2707
      %v2756 = vmul.f32 %v2372, %v2708
      %v2757 = vmul.f32 %v2373, %v2709
      %v2758 = vmul.f32 %v2374, %v2710
      %v2759 = vmul.f32 %v2375, %v2711
      %v2760 = vmul.f32 %v2376, %v2712
      %v2761 = vmul.f32 %v2377, %v2713
      %v2762 = vmul.f32 %v2378, %v2714
      %v2763 = vmul.f32 %v2379, %v2715
      %v2764 = vmul.f32 %v2380, %v2716
      %v2765 = vmul.f32 %v2381, %v2717
      %v2766 = vmul.f32 %v2382, %v2718
      %v2767 = vmul.f32 %v2383, %v2719
      %v2768 = vmul.f32 %v2384, %v2720
      %v2769 = vmul.f32 %v2385, %v2721
      %v2770 = vmul.f32 %v2386, %v2722
      %v2771 = vmul.f32 %v2387, %v2723
      %v2772 = vmul.f32 %v2388, %v2724
      %v2773 = vmul.f32 %v2389, %v2725
      %v2774 = vmul.f32 %v2390, %v2726
      %v2775 = vmul.f32 %v2391, %v2727
      %v2776 = vld [vmem:[#allocation3] sm:$0xff]
      %v2777 = vld [vmem:[#allocation3 + $0x8] sm:$0xff]
      %v2778 = vld [vmem:[#allocation3 + $0x10] sm:$0xff]
      %v2779 = vld [vmem:[#allocation3 + $0x18] sm:$0xff]
      %v2780 = vld [vmem:[#allocation3 + $0x20] sm:$0xff]
      %v2781 = vld [vmem:[#allocation3 + $0x28] sm:$0xff]
      %v2782 = vld [vmem:[#allocation3 + $0x30] sm:$0xff]
      %v2783 = vld [vmem:[#allocation3 + $0x38] sm:$0xff]
      %v2784 = vld [vmem:[#allocation3 + $0x40] sm:$0xff]
      %v2785 = vld [vmem:[#allocation3 + $0x48] sm:$0xff]
      %v2786 = vld [vmem:[#allocation3 + $0x50] sm:$0xff]
      %v2787 = vld [vmem:[#allocation3 + $0x58] sm:$0xff]
      %v2788 = vld [vmem:[#allocation3 + $0x60] sm:$0xff]
      %v2789 = vld [vmem:[#allocation3 + $0x68] sm:$0xff]
      %v2790 = vld [vmem:[#allocation3 + $0x70] sm:$0xff]
      %v2791 = vld [vmem:[#allocation3 + $0x78] sm:$0xff]
      %v2792 = vld [vmem:[#allocation3 + $0x80] sm:$0xff]
      %v2793 = vld [vmem:[#allocation3 + $0x88] sm:$0xff]
      %v2794 = vld [vmem:[#allocation3 + $0x90] sm:$0xff]
      %v2795 = vld [vmem:[#allocation3 + $0x98] sm:$0xff]
      %v2796 = vld [vmem:[#allocation3 + $0xa0] sm:$0xff]
      %v2797 = vld [vmem:[#allocation3 + $0xa8] sm:$0xff]
      %v2798 = vld [vmem:[#allocation3 + $0xb0] sm:$0xff]
      %v2799 = vld [vmem:[#allocation3 + $0xb8] sm:$0xff]
      %v2800 = vld [vmem:[#allocation3 + $0xc0] sm:$0xff]
      %v2801 = vld [vmem:[#allocation3 + $0xc8] sm:$0xff]
      %v2802 = vld [vmem:[#allocation3 + $0xd0] sm:$0xff]
      %v2803 = vld [vmem:[#allocation3 + $0xd8] sm:$0xff]
      %v2804 = vld [vmem:[#allocation3 + $0xe0] sm:$0xff]
      %v2805 = vld [vmem:[#allocation3 + $0xe8] sm:$0xff]
      %v2806 = vld [vmem:[#allocation3 + $0xf0] sm:$0xff]
      %v2807 = vld [vmem:[#allocation3 + $0xf8] sm:$0xff]
      %vm2856 = vcmask 1040384
      %v2857 = vrot.slane %v2728, 7
      %v2858 = vrot.slane %v2729, 7
      %v2859 = vsel %vm2856, %v2857, %v2858
      %v2860 = vrot.slane %v2730, 7
      %v2861 = vsel %vm2856, %v2858, %v2860
      %v2862 = vrot.slane %v2731, 7
      %v2863 = vrot.slane %v2732, 7
      %v2864 = vsel %vm2856, %v2862, %v2863
      %v2865 = vrot.slane %v2733, 7
      %v2866 = vsel %vm2856, %v2863, %v2865
      %v2867 = vrot.slane %v2734, 7
      %v2868 = vrot.slane %v2735, 7
      %v2869 = vsel %vm2856, %v2867, %v2868
      %v2870 = vrot.slane %v2736, 7
      %v2871 = vsel %vm2856, %v2868, %v2870
      %v2872 = vrot.slane %v2737, 7
      %v2873 = vrot.slane %v2738, 7
      %v2874 = vsel %vm2856, %v2872, %v2873
      %v2875 = vrot.slane %v2739, 7
      %v2876 = vsel %vm2856, %v2873, %v2875
      %v2877 = vrot.slane %v2740, 7
      %v2878 = vrot.slane %v2741, 7
      %v2879 = vsel %vm2856, %v2877, %v2878
      %v2880 = vrot.slane %v2742, 7
      %v2881 = vsel %vm2856, %v2878, %v2880
      %v2882 = vrot.slane %v2743, 7
      %v2883 = vrot.slane %v2744, 7
      %v2884 = vsel %vm2856, %v2882, %v2883
      %v2885 = vrot.slane %v2745, 7
      %v2886 = vsel %vm2856, %v2883, %v2885
      %v2887 = vrot.slane %v2746, 7
      %v2888 = vrot.slane %v2747, 7
      %v2889 = vsel %vm2856, %v2887, %v2888
      %v2890 = vrot.slane %v2748, 7
      %v2891 = vsel %vm2856, %v2888, %v2890
      %v2892 = vrot.slane %v2749, 7
      %v2893 = vrot.slane %v2750, 7
      %v2894 = vsel %vm2856, %v2892, %v2893
      %v2895 = vrot.slane %v2751, 7
      %v2896 = vsel %vm2856, %v2893, %v2895
      %v2897 = vrot.slane %v2752, 7
      %v2898 = vrot.slane %v2753, 7
      %v2899 = vsel %vm2856, %v2897, %v2898
      %v2900 = vrot.slane %v2754, 7
      %v2901 = vsel %vm2856, %v2898, %v2900
      %v2902 = vrot.slane %v2755, 7
      %v2903 = vrot.slane %v2756, 7
      %v2904 = vsel %vm2856, %v2902, %v2903
      %v2905 = vrot.slane %v2757, 7
      %v2906 = vsel %vm2856, %v2903, %v2905
      %v2907 = vrot.slane %v2758, 7
      %v2908 = vrot.slane %v2759, 7
      %v2909 = vsel %vm2856, %v2907, %v2908
      %v2910 = vrot.slane %v2760, 7
      %v2911 = vsel %vm2856, %v2908, %v2910
      %v2912 = vrot.slane %v2761, 7
      %v2913 = vrot.slane %v2762, 7
      %v2914 = vsel %vm2856, %v2912, %v2913
      %v2915 = vrot.slane %v2763, 7
      %v2916 = vsel %vm2856, %v2913, %v2915
      %v2917 = vrot.slane %v2764, 7
      %v2918 = vrot.slane %v2765, 7
      %v2919 = vsel %vm2856, %v2917, %v2918
      %v2920 = vrot.slane %v2766, 7
      %v2921 = vsel %vm2856, %v2918, %v2920
      %v2922 = vrot.slane %v2767, 7
      %v2923 = vrot.slane %v2768, 7
      %v2924 = vsel %vm2856, %v2922, %v2923
      %v2925 = vrot.slane %v2769, 7
      %v2926 = vsel %vm2856, %v2923, %v2925
      %v2927 = vrot.slane %v2770, 7
      %v2928 = vrot.slane %v2771, 7
      %v2929 = vsel %vm2856, %v2927, %v2928
      %v2930 = vrot.slane %v2772, 7
      %v2931 = vsel %vm2856, %v2928, %v2930
      %v2932 = vrot.slane %v2773, 7
      %v2933 = vrot.slane %v2774, 7
      %v2934 = vsel %vm2856, %v2932, %v2933
      %v2935 = vrot.slane %v2775, 7
      %v2936 = vsel %vm2856, %v2933, %v2935
      %v2937 = vld [vmem:[%s309] sm:$0xff]
      %v2938 = vld [vmem:[%s309 + $0x8] sm:$0xff]
      %v2939 = vsel %vm464, %v2859, 0
      %v2941 = vsel %vm464, %v2861, 0
      %v2943 = vsel %vm464, %v2864, 0
      %v2945 = vsel %vm464, %v2866, 0
      %v2947 = vsel %vm464, %v2869, 0
      %v2949 = vsel %vm464, %v2871, 0
      %v2951 = vsel %vm464, %v2874, 0
      %v2953 = vsel %vm464, %v2876, 0
      %v2955 = vsel %vm464, %v2879, 0
      %v2957 = vsel %vm464, %v2881, 0
      %v2959 = vsel %vm464, %v2884, 0
      %v2961 = vsel %vm464, %v2886, 0
      %v2963 = vsel %vm464, %v2889, 0
      %v2965 = vsel %vm464, %v2891, 0
      %v2967 = vsel %vm464, %v2894, 0
      %v2969 = vsel %vm464, %v2896, 0
      %v2971 = vsel %vm464, %v2899, 0
      %v2973 = vsel %vm464, %v2901, 0
      %v2975 = vsel %vm464, %v2904, 0
      %v2977 = vsel %vm464, %v2906, 0
      %v2979 = vsel %vm464, %v2909, 0
      %v2981 = vsel %vm464, %v2911, 0
      %v2983 = vsel %vm464, %v2914, 0
      %v2985 = vsel %vm464, %v2916, 0
      %v2987 = vsel %vm464, %v2919, 0
      %v2989 = vsel %vm464, %v2921, 0
      %v2991 = vsel %vm464, %v2924, 0
      %v2993 = vsel %vm464, %v2926, 0
      %v2995 = vsel %vm464, %v2929, 0
      %v2997 = vsel %vm464, %v2931, 0
      %v2999 = vsel %vm464, %v2934, 0
      %v3001 = vsel %vm464, %v2936, 0
      %3003 = vmatprep.subr.mxu0 0.0
      %3004 = vmatpush1.msra.mxu0 %v2937
      %3005 = vmatprep.subr.mxu0 0.0
      %3006 = vmatpush1.msra.mxu0 %v2938
      %3007 = vmatprep.subr.mxu0 0.0
      %3008 = vmatpush1.msra.mxu0 0.0
      %3009 = vmatprep.subr.mxu0 0.0
      %3010 = vmatpush1.msra.mxu0 0.0
      %3011 = vmatprep.subr.mxu0 0.0
      %3012 = vmatpush1.msra.mxu0 0.0
      %3013 = vmatprep.subr.mxu0 0.0
      %3014 = vmatpush1.msra.mxu0 0.0
      %3015 = vmatprep.subr.mxu0 0.0
      %3016 = vmatpush1.msra.mxu0 0.0
      %3017 = vmatprep.subr.mxu0 0.0
      %3018 = vmatpush1.msra.mxu0 0.0
      %3019 = vmatprep.subr.mxu0 0.0
      %3020 = vmatpush1.msra.mxu0 0.0
      %3021 = vmatprep.subr.mxu0 0.0
      %3022 = vmatpush1.msra.mxu0 0.0
      %3023 = vmatprep.subr.mxu0 0.0
      %3024 = vmatpush1.msra.mxu0 0.0
      %3025 = vmatprep.subr.mxu0 0.0
      %3026 = vmatpush1.msra.mxu0 0.0
      %3027 = vmatprep.subr.mxu0 0.0
      %3028 = vmatpush1.msra.mxu0 0.0
      %3029 = vmatprep.subr.mxu0 0.0
      %3030 = vmatpush1.msra.mxu0 0.0
      %3031 = vmatprep.subr.mxu0 0.0
      %3032 = vmatpush1.msra.mxu0 0.0
      %3033 = vmatprep.subr.mxu0 0.0
      %3034 = vmatpush1.msra.mxu0 0.0
      %3035 = vmatprep.subr.mxu0 0.0
      %3036 = vmatpush1.msra.mxu0 0.0
      %3037 = vmatprep.subr.mxu0 0.0
      %3038 = vmatpush1.msra.mxu0 0.0
      %3039 = vmatprep.subr.mxu0 0.0
      %3040 = vmatpush1.msra.mxu0 0.0
      %3041 = vmatprep.subr.mxu0 0.0
      %3042 = vmatpush1.msra.mxu0 0.0
      %3043 = vmatprep.subr.mxu0 0.0
      %3044 = vmatpush1.msra.mxu0 0.0
      %3045 = vmatprep.subr.mxu0 0.0
      %3046 = vmatpush1.msra.mxu0 0.0
      %3047 = vmatprep.subr.mxu0 0.0
      %3048 = vmatpush1.msra.mxu0 0.0
      %3049 = vmatprep.subr.mxu0 0.0
      %3050 = vmatpush1.msra.mxu0 0.0
      %3051 = vmatprep.subr.mxu0 0.0
      %3052 = vmatpush1.msra.mxu0 0.0
      %3053 = vmatprep.subr.mxu0 0.0
      %3054 = vmatpush1.msra.mxu0 0.0
      %3055 = vmatprep.subr.mxu0 0.0
      %3056 = vmatpush1.msra.mxu0 0.0
      %3057 = vmatprep.subr.mxu0 0.0
      %3058 = vmatpush1.msra.mxu0 0.0
      %3059 = vmatprep.subr.mxu0 0.0
      %3060 = vmatpush1.msra.mxu0 0.0
      %3061 = vmatprep.subr.mxu0 0.0
      %3062 = vmatpush1.msra.mxu0 0.0
      %3063 = vmatprep.subr.mxu0 0.0
      %3064 = vmatpush1.msra.mxu0 0.0
      %3065 = vmatprep.subr.mxu0 0.0
      %3066 = vmatpush1.msra.mxu0 0.0
      %3067 = vmatprep.mubr.f32.mxu0 0.0
      %3068 = vmatmul.mubr.f32.gmra.mrb[0].mxu0 %v2939
      %v3069 = vpop.f32.mrb[0].mxu0
      %v3070 = vadd.f32 0.0, %v3069
      %v3071 = vpop.f32.mrb[0].mxu0
      %3072 = vmatprep.mubr.f32.mxu0 0.0
      %3073 = vmatmul.mubr.f32.gmra.mrb[0].mxu0 %v2941
      %v3074 = vpop.f32.mrb[0].mxu0
      %v3075 = vadd.f32 0.0, %v3074
      %v3076 = vpop.f32.mrb[0].mxu0
      %3077 = vmatprep.mubr.f32.mxu0 0.0
      %3078 = vmatmul.mubr.f32.gmra.mrb[0].mxu0 %v2943
      %v3079 = vpop.f32.mrb[0].mxu0
      %v3080 = vadd.f32 0.0, %v3079
      %v3081 = vpop.f32.mrb[0].mxu0
      %3082 = vmatprep.mubr.f32.mxu0 0.0
      %3083 = vmatmul.mubr.f32.gmra.mrb[0].mxu0 %v2945
      %v3084 = vpop.f32.mrb[0].mxu0
      %v3085 = vadd.f32 0.0, %v3084
      %v3086 = vpop.f32.mrb[0].mxu0
      %3087 = vmatprep.mubr.f32.mxu0 0.0
      %3088 = vmatmul.mubr.f32.gmra.mrb[0].mxu0 %v2947
      %v3089 = vpop.f32.mrb[0].mxu0
      %v3090 = vadd.f32 0.0, %v3089
      %v3091 = vpop.f32.mrb[0].mxu0
      %3092 = vmatprep.mubr.f32.mxu0 0.0
      %3093 = vmatmul.mubr.f32.gmra.mrb[0].mxu0 %v2949
      %v3094 = vpop.f32.mrb[0].mxu0
      %v3095 = vadd.f32 0.0, %v3094
      %v3096 = vpop.f32.mrb[0].mxu0
      %3097 = vmatprep.mubr.f32.mxu0 0.0
      %3098 = vmatmul.mubr.f32.gmra.mrb[0].mxu0 %v2951
      %v3099 = vpop.f32.mrb[0].mxu0
      %v3100 = vadd.f32 0.0, %v3099
      %v3101 = vpop.f32.mrb[0].mxu0
      %3102 = vmatprep.mubr.f32.mxu0 0.0
      %3103 = vmatmul.mubr.f32.gmra.mrb[0].mxu0 %v2953
      %v3104 = vpop.f32.mrb[0].mxu0
      %v3105 = vadd.f32 0.0, %v3104
      %v3106 = vpop.f32.mrb[0].mxu0
      %3107 = vmatprep.mubr.f32.mxu0 0.0
      %3108 = vmatmul.mubr.f32.gmra.mrb[0].mxu0 %v2955
      %v3109 = vpop.f32.mrb[0].mxu0
      %v3110 = vadd.f32 0.0, %v3109
      %v3111 = vpop.f32.mrb[0].mxu0
      %3112 = vmatprep.mubr.f32.mxu0 0.0
      %3113 = vmatmul.mubr.f32.gmra.mrb[0].mxu0 %v2957
      %v3114 = vpop.f32.mrb[0].mxu0
      %v3115 = vadd.f32 0.0, %v3114
      %v3116 = vpop.f32.mrb[0].mxu0
      %3117 = vmatprep.mubr.f32.mxu0 0.0
      %3118 = vmatmul.mubr.f32.gmra.mrb[0].mxu0 %v2959
      %v3119 = vpop.f32.mrb[0].mxu0
      %v3120 = vadd.f32 0.0, %v3119
      %v3121 = vpop.f32.mrb[0].mxu0
      %3122 = vmatprep.mubr.f32.mxu0 0.0
      %3123 = vmatmul.mubr.f32.gmra.mrb[0].mxu0 %v2961
      %v3124 = vpop.f32.mrb[0].mxu0
      %v3125 = vadd.f32 0.0, %v3124
      %v3126 = vpop.f32.mrb[0].mxu0
      %3127 = vmatprep.mubr.f32.mxu0 0.0
      %3128 = vmatmul.mubr.f32.gmra.mrb[0].mxu0 %v2963
      %v3129 = vpop.f32.mrb[0].mxu0
      %v3130 = vadd.f32 0.0, %v3129
      %v3131 = vpop.f32.mrb[0].mxu0
      %3132 = vmatprep.mubr.f32.mxu0 0.0
      %3133 = vmatmul.mubr.f32.gmra.mrb[0].mxu0 %v2965
      %v3134 = vpop.f32.mrb[0].mxu0
      %v3135 = vadd.f32 0.0, %v3134
      %v3136 = vpop.f32.mrb[0].mxu0
      %3137 = vmatprep.mubr.f32.mxu0 0.0
      %3138 = vmatmul.mubr.f32.gmra.mrb[0].mxu0 %v2967
      %v3139 = vpop.f32.mrb[0].mxu0
      %v3140 = vadd.f32 0.0, %v3139
      %v3141 = vpop.f32.mrb[0].mxu0
      %3142 = vmatprep.mubr.f32.mxu0 0.0
      %3143 = vmatmul.mubr.f32.gmra.mrb[0].mxu0 %v2969
      %v3144 = vpop.f32.mrb[0].mxu0
      %v3145 = vadd.f32 0.0, %v3144
      %v3146 = vpop.f32.mrb[0].mxu0
      %3147 = vmatprep.mubr.f32.mxu0 0.0
      %3148 = vmatmul.mubr.f32.gmra.mrb[0].mxu0 %v2971
      %v3149 = vpop.f32.mrb[0].mxu0
      %v3150 = vadd.f32 0.0, %v3149
      %v3151 = vpop.f32.mrb[0].mxu0
      %3152 = vmatprep.mubr.f32.mxu0 0.0
      %3153 = vmatmul.mubr.f32.gmra.mrb[0].mxu0 %v2973
      %v3154 = vpop.f32.mrb[0].mxu0
      %v3155 = vadd.f32 0.0, %v3154
      %v3156 = vpop.f32.mrb[0].mxu0
      %3157 = vmatprep.mubr.f32.mxu0 0.0
      %3158 = vmatmul.mubr.f32.gmra.mrb[0].mxu0 %v2975
      %v3159 = vpop.f32.mrb[0].mxu0
      %v3160 = vadd.f32 0.0, %v3159
      %v3161 = vpop.f32.mrb[0].mxu0
      %3162 = vmatprep.mubr.f32.mxu0 0.0
      %3163 = vmatmul.mubr.f32.gmra.mrb[0].mxu0 %v2977
      %v3164 = vpop.f32.mrb[0].mxu0
      %v3165 = vadd.f32 0.0, %v3164
      %v3166 = vpop.f32.mrb[0].mxu0
      %3167 = vmatprep.mubr.f32.mxu0 0.0
      %3168 = vmatmul.mubr.f32.gmra.mrb[0].mxu0 %v2979
      %v3169 = vpop.f32.mrb[0].mxu0
      %v3170 = vadd.f32 0.0, %v3169
      %v3171 = vpop.f32.mrb[0].mxu0
      %3172 = vmatprep.mubr.f32.mxu0 0.0
      %3173 = vmatmul.mubr.f32.gmra.mrb[0].mxu0 %v2981
      %v3174 = vpop.f32.mrb[0].mxu0
      %v3175 = vadd.f32 0.0, %v3174
      %v3176 = vpop.f32.mrb[0].mxu0
      %3177 = vmatprep.mubr.f32.mxu0 0.0
      %3178 = vmatmul.mubr.f32.gmra.mrb[0].mxu0 %v2983
      %v3179 = vpop.f32.mrb[0].mxu0
      %v3180 = vadd.f32 0.0, %v3179
      %v3181 = vpop.f32.mrb[0].mxu0
      %3182 = vmatprep.mubr.f32.mxu0 0.0
      %3183 = vmatmul.mubr.f32.gmra.mrb[0].mxu0 %v2985
      %v3184 = vpop.f32.mrb[0].mxu0
      %v3185 = vadd.f32 0.0, %v3184
      %v3186 = vpop.f32.mrb[0].mxu0
      %3187 = vmatprep.mubr.f32.mxu0 0.0
      %3188 = vmatmul.mubr.f32.gmra.mrb[0].mxu0 %v2987
      %v3189 = vpop.f32.mrb[0].mxu0
      %v3190 = vadd.f32 0.0, %v3189
      %v3191 = vpop.f32.mrb[0].mxu0
      %3192 = vmatprep.mubr.f32.mxu0 0.0
      %3193 = vmatmul.mubr.f32.gmra.mrb[0].mxu0 %v2989
      %v3194 = vpop.f32.mrb[0].mxu0
      %v3195 = vadd.f32 0.0, %v3194
      %v3196 = vpop.f32.mrb[0].mxu0
      %3197 = vmatprep.mubr.f32.mxu0 0.0
      %3198 = vmatmul.mubr.f32.gmra.mrb[0].mxu0 %v2991
      %v3199 = vpop.f32.mrb[0].mxu0
      %v3200 = vadd.f32 0.0, %v3199
      %v3201 = vpop.f32.mrb[0].mxu0
      %3202 = vmatprep.mubr.f32.mxu0 0.0
      %3203 = vmatmul.mubr.f32.gmra.mrb[0].mxu0 %v2993
      %v3204 = vpop.f32.mrb[0].mxu0
      %v3205 = vadd.f32 0.0, %v3204
      %v3206 = vpop.f32.mrb[0].mxu0
      %3207 = vmatprep.mubr.f32.mxu0 0.0
      %3208 = vmatmul.mubr.f32.gmra.mrb[0].mxu0 %v2995
      %v3209 = vpop.f32.mrb[0].mxu0
      %v3210 = vadd.f32 0.0, %v3209
      %v3211 = vpop.f32.mrb[0].mxu0
      %3212 = vmatprep.mubr.f32.mxu0 0.0
      %3213 = vmatmul.mubr.f32.gmra.mrb[0].mxu0 %v2997
      %v3214 = vpop.f32.mrb[0].mxu0
      %v3215 = vadd.f32 0.0, %v3214
      %v3216 = vpop.f32.mrb[0].mxu0
      %3217 = vmatprep.mubr.f32.mxu0 0.0
      %3218 = vmatmul.mubr.f32.gmra.mrb[0].mxu0 %v2999
      %v3219 = vpop.f32.mrb[0].mxu0
      %v3220 = vadd.f32 0.0, %v3219
      %v3221 = vpop.f32.mrb[0].mxu0
      %3222 = vmatprep.mubr.f32.mxu0 0.0
      %3223 = vmatmul.mubr.f32.gmra.mrb[0].mxu0 %v3001
      %v3224 = vpop.f32.mrb[0].mxu0
      %v3225 = vadd.f32 0.0, %v3224
      %v3226 = vpop.f32.mrb[0].mxu0
      %3227 = vdwg.mxu0
      %v3228 = vadd.f32 %v2776, %v3070
      %v3229 = vadd.f32 %v2777, %v3075
      %v3230 = vadd.f32 %v2778, %v3080
      %v3231 = vadd.f32 %v2779, %v3085
      %v3232 = vadd.f32 %v2780, %v3090
      %v3233 = vadd.f32 %v2781, %v3095
      %v3234 = vadd.f32 %v2782, %v3100
      %v3235 = vadd.f32 %v2783, %v3105
      %v3236 = vadd.f32 %v2784, %v3110
      %v3237 = vadd.f32 %v2785, %v3115
      %v3238 = vadd.f32 %v2786, %v3120
      %v3239 = vadd.f32 %v2787, %v3125
      %v3240 = vadd.f32 %v2788, %v3130
      %v3241 = vadd.f32 %v2789, %v3135
      %v3242 = vadd.f32 %v2790, %v3140
      %v3243 = vadd.f32 %v2791, %v3145
      %v3244 = vadd.f32 %v2792, %v3150
      %v3245 = vadd.f32 %v2793, %v3155
      %v3246 = vadd.f32 %v2794, %v3160
      %v3247 = vadd.f32 %v2795, %v3165
      %v3248 = vadd.f32 %v2796, %v3170
      %v3249 = vadd.f32 %v2797, %v3175
      %v3250 = vadd.f32 %v2798, %v3180
      %v3251 = vadd.f32 %v2799, %v3185
      %v3252 = vadd.f32 %v2800, %v3190
      %v3253 = vadd.f32 %v2801, %v3195
      %v3254 = vadd.f32 %v2802, %v3200
      %v3255 = vadd.f32 %v2803, %v3205
      %v3256 = vadd.f32 %v2804, %v3210
      %v3257 = vadd.f32 %v2805, %v3215
      %v3258 = vadd.f32 %v2806, %v3220
      %v3259 = vadd.f32 %v2807, %v3225
      %vm3260 = vcmask 31744
      %3261 = vst.msk [vmem:[#allocation3] sm:$0xff] %vm3260, %v3228
      %3262 = vst.msk [vmem:[#allocation3 + $0x8] sm:$0xff] %vm3260, %v3229
      %3263 = vst.msk [vmem:[#allocation3 + $0x10] sm:$0xff] %vm3260, %v3230
      %3264 = vst.msk [vmem:[#allocation3 + $0x18] sm:$0xff] %vm3260, %v3231
      %3265 = vst.msk [vmem:[#allocation3 + $0x20] sm:$0xff] %vm3260, %v3232
      %3266 = vst.msk [vmem:[#allocation3 + $0x28] sm:$0xff] %vm3260, %v3233
      %3267 = vst.msk [vmem:[#allocation3 + $0x30] sm:$0xff] %vm3260, %v3234
      %3268 = vst.msk [vmem:[#allocation3 + $0x38] sm:$0xff] %vm3260, %v3235
      %3269 = vst.msk [vmem:[#allocation3 + $0x40] sm:$0xff] %vm3260, %v3236
      %3270 = vst.msk [vmem:[#allocation3 + $0x48] sm:$0xff] %vm3260, %v3237
      %3271 = vst.msk [vmem:[#allocation3 + $0x50] sm:$0xff] %vm3260, %v3238
      %3272 = vst.msk [vmem:[#allocation3 + $0x58] sm:$0xff] %vm3260, %v3239
      %3273 = vst.msk [vmem:[#allocation3 + $0x60] sm:$0xff] %vm3260, %v3240
      %3274 = vst.msk [vmem:[#allocation3 + $0x68] sm:$0xff] %vm3260, %v3241
      %3275 = vst.msk [vmem:[#allocation3 + $0x70] sm:$0xff] %vm3260, %v3242
      %3276 = vst.msk [vmem:[#allocation3 + $0x78] sm:$0xff] %vm3260, %v3243
      %3277 = vst.msk [vmem:[#allocation3 + $0x80] sm:$0xff] %vm3260, %v3244
      %3278 = vst.msk [vmem:[#allocation3 + $0x88] sm:$0xff] %vm3260, %v3245
      %3279 = vst.msk [vmem:[#allocation3 + $0x90] sm:$0xff] %vm3260, %v3246
      %3280 = vst.msk [vmem:[#allocation3 + $0x98] sm:$0xff] %vm3260, %v3247
      %3281 = vst.msk [vmem:[#allocation3 + $0xa0] sm:$0xff] %vm3260, %v3248
      %3282 = vst.msk [vmem:[#allocation3 + $0xa8] sm:$0xff] %vm3260, %v3249
      %3283 = vst.msk [vmem:[#allocation3 + $0xb0] sm:$0xff] %vm3260, %v3250
      %3284 = vst.msk [vmem:[#allocation3 + $0xb8] sm:$0xff] %vm3260, %v3251
      %3285 = vst.msk [vmem:[#allocation3 + $0xc0] sm:$0xff] %vm3260, %v3252
      %3286 = vst.msk [vmem:[#allocation3 + $0xc8] sm:$0xff] %vm3260, %v3253
      %3287 = vst.msk [vmem:[#allocation3 + $0xd0] sm:$0xff] %vm3260, %v3254
      %3288 = vst.msk [vmem:[#allocation3 + $0xd8] sm:$0xff] %vm3260, %v3255
      %3289 = vst.msk [vmem:[#allocation3 + $0xe0] sm:$0xff] %vm3260, %v3256
      %3290 = vst.msk [vmem:[#allocation3 + $0xe8] sm:$0xff] %vm3260, %v3257
      %3291 = vst.msk [vmem:[#allocation3 + $0xf0] sm:$0xff] %vm3260, %v3258
      %3292 = vst.msk [vmem:[#allocation3 + $0xf8] sm:$0xff] %vm3260, %v3259
      // Predicated region
      $region45: #{dcn_layer_forward.5} parent=39 // pred_check
        %p3293 = pneg %p321
      $region46: #{dcn_layer_forward.5} parent=39 // pred_check_branch
        %3295 = sbr.rel (%p3293) target = $region48
      $region47: #{dcn_layer_forward.5} parent=39 // pred_region
        %v3296 = vld [vmem:[%s315] sm:$0xff]
        %v3297 = vld [vmem:[%s315 + $0x8] sm:$0xff]
        %v3298 = vld [vmem:[%s315 + $0x10] sm:$0xff]
        %v3299 = vld [vmem:[%s315 + $0x18] sm:$0xff]
        %v3300 = vld [vmem:[%s315 + $0x20] sm:$0xff]
        %v3301 = vld [vmem:[%s315 + $0x28] sm:$0xff]
        %v3302 = vld [vmem:[%s315 + $0x30] sm:$0xff]
        %v3303 = vld [vmem:[%s315 + $0x38] sm:$0xff]
        %v3304 = vld [vmem:[%s315 + $0x40] sm:$0xff]
        %v3305 = vld [vmem:[%s315 + $0x48] sm:$0xff]
        %v3306 = vld [vmem:[%s315 + $0x50] sm:$0xff]
        %v3307 = vld [vmem:[%s315 + $0x58] sm:$0xff]
        %v3308 = vld [vmem:[%s315 + $0x60] sm:$0xff]
        %v3309 = vld [vmem:[%s315 + $0x68] sm:$0xff]
        %v3310 = vld [vmem:[%s315 + $0x70] sm:$0xff]
        %v3311 = vld [vmem:[%s315 + $0x78] sm:$0xff]
        %v3312 = vld [vmem:[%s315 + $0x80] sm:$0xff]
        %v3313 = vld [vmem:[%s315 + $0x88] sm:$0xff]
        %v3314 = vld [vmem:[%s315 + $0x90] sm:$0xff]
        %v3315 = vld [vmem:[%s315 + $0x98] sm:$0xff]
        %v3316 = vld [vmem:[%s315 + $0xa0] sm:$0xff]
        %v3317 = vld [vmem:[%s315 + $0xa8] sm:$0xff]
        %v3318 = vld [vmem:[%s315 + $0xb0] sm:$0xff]
        %v3319 = vld [vmem:[%s315 + $0xb8] sm:$0xff]
        %v3320 = vld [vmem:[%s315 + $0xc0] sm:$0xff]
        %v3321 = vld [vmem:[%s315 + $0xc8] sm:$0xff]
        %v3322 = vld [vmem:[%s315 + $0xd0] sm:$0xff]
        %v3323 = vld [vmem:[%s315 + $0xd8] sm:$0xff]
        %v3324 = vld [vmem:[%s315 + $0xe0] sm:$0xff]
        %v3325 = vld [vmem:[%s315 + $0xe8] sm:$0xff]
        %v3326 = vld [vmem:[%s315 + $0xf0] sm:$0xff]
        %v3327 = vld [vmem:[%s315 + $0xf8] sm:$0xff]
        %v3328 = vld [vmem:[#allocation3] sm:$0xff]
        %v3329 = vld [vmem:[#allocation3 + $0x8] sm:$0xff]
        %v3330 = vld [vmem:[#allocation3 + $0x10] sm:$0xff]
        %v3331 = vld [vmem:[#allocation3 + $0x18] sm:$0xff]
        %v3332 = vld [vmem:[#allocation3 + $0x20] sm:$0xff]
        %v3333 = vld [vmem:[#allocation3 + $0x28] sm:$0xff]
        %v3334 = vld [vmem:[#allocation3 + $0x30] sm:$0xff]
        %v3335 = vld [vmem:[#allocation3 + $0x38] sm:$0xff]
        %v3336 = vld [vmem:[#allocation3 + $0x40] sm:$0xff]
        %v3337 = vld [vmem:[#allocation3 + $0x48] sm:$0xff]
        %v3338 = vld [vmem:[#allocation3 + $0x50] sm:$0xff]
        %v3339 = vld [vmem:[#allocation3 + $0x58] sm:$0xff]
        %v3340 = vld [vmem:[#allocation3 + $0x60] sm:$0xff]
        %v3341 = vld [vmem:[#allocation3 + $0x68] sm:$0xff]
        %v3342 = vld [vmem:[#allocation3 + $0x70] sm:$0xff]
        %v3343 = vld [vmem:[#allocation3 + $0x78] sm:$0xff]
        %v3344 = vld [vmem:[#allocation3 + $0x80] sm:$0xff]
        %v3345 = vld [vmem:[#allocation3 + $0x88] sm:$0xff]
        %v3346 = vld [vmem:[#allocation3 + $0x90] sm:$0xff]
        %v3347 = vld [vmem:[#allocation3 + $0x98] sm:$0xff]
        %v3348 = vld [vmem:[#allocation3 + $0xa0] sm:$0xff]
        %v3349 = vld [vmem:[#allocation3 + $0xa8] sm:$0xff]
        %v3350 = vld [vmem:[#allocation3 + $0xb0] sm:$0xff]
        %v3351 = vld [vmem:[#allocation3 + $0xb8] sm:$0xff]
        %v3352 = vld [vmem:[#allocation3 + $0xc0] sm:$0xff]
        %v3353 = vld [vmem:[#allocation3 + $0xc8] sm:$0xff]
        %v3354 = vld [vmem:[#allocation3 + $0xd0] sm:$0xff]
        %v3355 = vld [vmem:[#allocation3 + $0xd8] sm:$0xff]
        %v3356 = vld [vmem:[#allocation3 + $0xe0] sm:$0xff]
        %v3357 = vld [vmem:[#allocation3 + $0xe8] sm:$0xff]
        %v3358 = vld [vmem:[#allocation3 + $0xf0] sm:$0xff]
        %v3359 = vld [vmem:[#allocation3 + $0xf8] sm:$0xff]
        %v3360 = vadd.f32 %v3296, %v3328
        %v3361 = vadd.f32 %v3297, %v3329
        %v3362 = vadd.f32 %v3298, %v3330
        %v3363 = vadd.f32 %v3299, %v3331
        %v3364 = vadd.f32 %v3300, %v3332
        %v3365 = vadd.f32 %v3301, %v3333
        %v3366 = vadd.f32 %v3302, %v3334
        %v3367 = vadd.f32 %v3303, %v3335
        %v3368 = vadd.f32 %v3304, %v3336
        %v3369 = vadd.f32 %v3305, %v3337
        %v3370 = vadd.f32 %v3306, %v3338
        %v3371 = vadd.f32 %v3307, %v3339
        %v3372 = vadd.f32 %v3308, %v3340
        %v3373 = vadd.f32 %v3309, %v3341
        %v3374 = vadd.f32 %v3310, %v3342
        %v3375 = vadd.f32 %v3311, %v3343
        %v3376 = vadd.f32 %v3312, %v3344
        %v3377 = vadd.f32 %v3313, %v3345
        %v3378 = vadd.f32 %v3314, %v3346
        %v3379 = vadd.f32 %v3315, %v3347
        %v3380 = vadd.f32 %v3316, %v3348
        %v3381 = vadd.f32 %v3317, %v3349
        %v3382 = vadd.f32 %v3318, %v3350
        %v3383 = vadd.f32 %v3319, %v3351
        %v3384 = vadd.f32 %v3320, %v3352
        %v3385 = vadd.f32 %v3321, %v3353
        %v3386 = vadd.f32 %v3322, %v3354
        %v3387 = vadd.f32 %v3323, %v3355
        %v3388 = vadd.f32 %v3324, %v3356
        %v3389 = vadd.f32 %v3325, %v3357
        %v3390 = vadd.f32 %v3326, %v3358
        %v3391 = vadd.f32 %v3327, %v3359
        %3392 = vst.msk [vmem:[%s320] sm:$0xff] %vm3260, %v3360
        %3393 = vst.msk [vmem:[%s320 + $0x8] sm:$0xff] %vm3260, %v3361
        %3394 = vst.msk [vmem:[%s320 + $0x10] sm:$0xff] %vm3260, %v3362
        %3395 = vst.msk [vmem:[%s320 + $0x18] sm:$0xff] %vm3260, %v3363
        %3396 = vst.msk [vmem:[%s320 + $0x20] sm:$0xff] %vm3260, %v3364
        %3397 = vst.msk [vmem:[%s320 + $0x28] sm:$0xff] %vm3260, %v3365
        %3398 = vst.msk [vmem:[%s320 + $0x30] sm:$0xff] %vm3260, %v3366
        %3399 = vst.msk [vmem:[%s320 + $0x38] sm:$0xff] %vm3260, %v3367
        %3400 = vst.msk [vmem:[%s320 + $0x40] sm:$0xff] %vm3260, %v3368
        %3401 = vst.msk [vmem:[%s320 + $0x48] sm:$0xff] %vm3260, %v3369
        %3402 = vst.msk [vmem:[%s320 + $0x50] sm:$0xff] %vm3260, %v3370
        %3403 = vst.msk [vmem:[%s320 + $0x58] sm:$0xff] %vm3260, %v3371
        %3404 = vst.msk [vmem:[%s320 + $0x60] sm:$0xff] %vm3260, %v3372
        %3405 = vst.msk [vmem:[%s320 + $0x68] sm:$0xff] %vm3260, %v3373
        %3406 = vst.msk [vmem:[%s320 + $0x70] sm:$0xff] %vm3260, %v3374
        %3407 = vst.msk [vmem:[%s320 + $0x78] sm:$0xff] %vm3260, %v3375
        %3408 = vst.msk [vmem:[%s320 + $0x80] sm:$0xff] %vm3260, %v3376
        %3409 = vst.msk [vmem:[%s320 + $0x88] sm:$0xff] %vm3260, %v3377
        %3410 = vst.msk [vmem:[%s320 + $0x90] sm:$0xff] %vm3260, %v3378
        %3411 = vst.msk [vmem:[%s320 + $0x98] sm:$0xff] %vm3260, %v3379
        %3412 = vst.msk [vmem:[%s320 + $0xa0] sm:$0xff] %vm3260, %v3380
        %3413 = vst.msk [vmem:[%s320 + $0xa8] sm:$0xff] %vm3260, %v3381
        %3414 = vst.msk [vmem:[%s320 + $0xb0] sm:$0xff] %vm3260, %v3382
        %3415 = vst.msk [vmem:[%s320 + $0xb8] sm:$0xff] %vm3260, %v3383
        %3416 = vst.msk [vmem:[%s320 + $0xc0] sm:$0xff] %vm3260, %v3384
        %3417 = vst.msk [vmem:[%s320 + $0xc8] sm:$0xff] %vm3260, %v3385
        %3418 = vst.msk [vmem:[%s320 + $0xd0] sm:$0xff] %vm3260, %v3386
        %3419 = vst.msk [vmem:[%s320 + $0xd8] sm:$0xff] %vm3260, %v3387
        %3420 = vst.msk [vmem:[%s320 + $0xe0] sm:$0xff] %vm3260, %v3388
        %3421 = vst.msk [vmem:[%s320 + $0xe8] sm:$0xff] %vm3260, %v3389
        %3422 = vst.msk [vmem:[%s320 + $0xf0] sm:$0xff] %vm3260, %v3390
        %3423 = vst.msk [vmem:[%s320 + $0xf8] sm:$0xff] %vm3260, %v3391
      $region48: #{dcn_layer_forward.5} parent=39 // pred_fallthru
        _
      %p3424 = scmp.lt.s32.totalorder %s20, 1
      %s3425 = scalar_select %p3424, %s20, 1
      %s3426 = smul.addr %s3425, 32
      %s3427 = smul.addr %s3426, 8
      %s3428 = scalar_lea.vmem %s5, %s3427
      // Predicated region
      $region49: #{dcn_layer_forward.5} parent=39 // pred_check
        %p3429 = pneg %p178
      $region50: #{dcn_layer_forward.5} parent=39 // pred_check_branch
        %3431 = sbr.rel (%p3429) target = $region52
      $region51: #{dcn_layer_forward.5} parent=39 // pred_region
        _
      $region52: #{dcn_layer_forward.5} parent=39 // pred_fallthru
        _
    $region40: #{dcn_layer_forward.5} parent=5 // pred_fallthru
      _
    %p3432 = scmp.le.s32.totalorder 2, %s11
    // Predicated region
    $region53: #{dcn_layer_forward.5} parent=5 // pred_check
      %p3433 = pneg %p3432
    $region54: #{dcn_layer_forward.5} parent=5 // pred_check_branch
      %3435 = sbr.rel (%p3433) target = $region56
    $region55: #{dcn_layer_forward.5} parent=5 // pred_region
      %s3436 = ssub.s32 %s11, 2
      // Predicated region
      $region57: #{dcn_layer_forward.5} parent=55 // pred_check
        %p3437 = pneg %p184
      $region58: #{dcn_layer_forward.5} parent=55 // pred_check_branch
        %3439 = sbr.rel (%p3437) target = $region60
      $region59: #{dcn_layer_forward.5} parent=55 // pred_region
        %p3440 = scmp.lt.s32.totalorder %s22, 1
        %s3441 = scalar_select %p3440, %s22, 1
        %s3442 = smul.addr %s3441, 32
        %s3443 = smul.addr %s3442, 8
        %s3444 = scalar_lea.vmem %s5, %s3443
      $region60: #{dcn_layer_forward.5} parent=55 // pred_fallthru
        _
    $region56: #{dcn_layer_forward.5} parent=5 // pred_fallthru
      _
  $region6: #{dcn_layer_forward.5} parent=0 // loop_footer
    %s15 = sadd.s32 1, %s11
  $region7: #{dcn_layer_forward.5} parent=0 // loop_footer_branch
    %10 = sbr.rel target = $region3
  $region8: #{dcn_layer_forward.5} parent=0 // loop_exit
    _

</llo_original>
